<compile_context>
chip_gen: v7x
topology: tpu7x:2x2x1
jax: 0.10.0
libtpu: 0.0.40
codegen_flags: <defaults>
</compile_context>

<pallas_src>
import functools

import jax
import jax.numpy as jnp
from jax.experimental import pallas as pl
from jax.experimental.pallas import tpu as pltpu

# small synthetic config (forward structure identical to bert-base-uncased)
VOCAB = 100
HIDDEN = 32
LAYERS = 2
HEADS = 4
INTER = 64
MAX_POS = 16
TYPE_VOCAB = 2
LN_EPS = 1e-12
LANE = 128          # lane-dense padding for the regressor output


def _layer_norm(x, gamma, beta):
    mu = jnp.mean(x, axis=-1, keepdims=True)
    var = jnp.mean((x - mu) ** 2, axis=-1, keepdims=True)
    return (x - mu) * jax.lax.rsqrt(var + LN_EPS) * gamma + beta


def _gelu(x):
    # TODO(synk): HF BERT uses exact erf-GELU; tanh approximation used here.
    return jax.nn.gelu(x, approximate=True)


# ----------------------------- Pallas kernel --------------------------------

def bert_kernel(nh, x_ref, mask_ref, eg_ref, eb_ref,
                wqkv_ref, bqkv_ref, wo_ref, bo_ref, l1g_ref, l1b_ref,
                wi_ref, bi_ref, w2_ref, b2_ref, l2g_ref, l2b_ref,
                wp_ref, bp_ref, wr_ref, br_ref,
                pred_ref, x_res):
    """Whole batch, embeddings-LN + all encoder layers + pooler + regressor.

    x_ref:    (B*S, H) f32 summed embeddings (gathers are XLA glue)
    mask_ref: (B, 1, S) f32 additive attention mask
    weights:  per-layer stacks with a leading LAYERS axis; matmul weights bf16
    pred_ref: (B, LANE) f32; column 0 holds the clamped prediction
    x_res:    (B*S, H) f32 VMEM-resident activations
    """
    B, _, S = mask_ref.shape
    H = x_ref.shape[-1]
    hd = H // nh
    L = wqkv_ref.shape[0]

    # Embedding LayerNorm; activations never leave VMEM afterwards.
    x_res[...] = _layer_norm(x_ref[...], eg_ref[...], eb_ref[...])
    mask = mask_ref[...]                                      # (B, 1, S)

    def layer_body(l, carry):
        x = x_res[...]                                        # (B*S, H) f32
        xb = x.astype(jnp.bfloat16)

        # Fused QKV: one (B*S,H)@(H,3H) MXU matmul. 1/sqrt(hd) is folded
        # into the Q third of wqkv/bqkv by the wrapper.
        qkv = jnp.dot(xb, wqkv_ref[l],
                      preferred_element_type=jnp.float32) + bqkv_ref[l]

        # Per-head attention, batch folded into the einsum leading dim.
        ctx_heads = []
        for h in range(nh):
            q_h = qkv[:, h * hd:(h + 1) * hd].reshape(B, S, hd)
            k_h = qkv[:, H + h * hd:H + (h + 1) * hd].reshape(B, S, hd)
            v_h = qkv[:, 2 * H + h * hd:2 * H + (h + 1) * hd].reshape(B, S, hd)
            s = jnp.einsum('bqd,bkd->bqk', q_h.astype(jnp.bfloat16),
                           k_h.astype(jnp.bfloat16),
                           preferred_element_type=jnp.float32)   # (B, S, S)
            s = s + mask
            s = s - jnp.max(s, axis=-1, keepdims=True)           # f32 softmax
            p = jnp.exp(s)
            p = p * pl.reciprocal(jnp.sum(p, axis=-1, keepdims=True),
                                  approx=True)
            ctx_h = jnp.einsum('bqk,bkd->bqd', p.astype(jnp.bfloat16),
                               v_h.astype(jnp.bfloat16),
                               preferred_element_type=jnp.float32)
            ctx_heads.append(ctx_h.reshape(B * S, hd))

        # Merge heads, then a single (B*S,H)@(H,H) output projection.
        ctx = jnp.concatenate(ctx_heads, axis=-1)             # (B*S, H)
        attn = jnp.dot(ctx.astype(jnp.bfloat16), wo_ref[l],
                       preferred_element_type=jnp.float32) + bo_ref[l]

        h1 = _layer_norm(x + attn, l1g_ref[l], l1b_ref[l])

        # Feed-forward.
        ffn = jnp.dot(h1.astype(jnp.bfloat16), wi_ref[l],
                      preferred_element_type=jnp.float32) + bi_ref[l]
        ffn = _gelu(ffn)
        ffn = jnp.dot(ffn.astype(jnp.bfloat16), w2_ref[l],
                      preferred_element_type=jnp.float32) + b2_ref[l]

        x_res[...] = _layer_norm(h1 + ffn, l2g_ref[l], l2b_ref[l])
        return carry

    jax.lax.fori_loop(0, L, layer_body, 0, unroll=True)

    # Pooler + dropout(eval = identity) + regressor + clamp, CLS rows only.
    cls = x_res[pl.ds(0, B, stride=S), :]                     # (B, H)
    pooled = jnp.tanh(
        jnp.dot(cls, wp_ref[...],
                preferred_element_type=jnp.float32) + bp_ref[...])
    # nn.Dropout(0.1): identity at inference time.
    pred = jnp.dot(pooled, wr_ref[...],
                   preferred_element_type=jnp.float32) + br_ref[...]  # (B,LANE)
    pred_ref[...] = jnp.clip(pred, 0.0, 10.0)


# ------------------------------ wrapper --------------------------------------

def run_bert_kernel(x_emb2d, add_mask, packed, nh, B, S):
    H = x_emb2d.shape[-1]
    kern = functools.partial(bert_kernel, nh)
    preds_full = pl.pallas_call(
        kern,
        out_shape=jax.ShapeDtypeStruct((B, LANE), jnp.float32),
        scratch_shapes=[pltpu.VMEM((B * S, H), jnp.float32)],
        compiler_params=pltpu.CompilerParams(
            vmem_limit_bytes=16 * 1024 * 1024),
    )(x_emb2d, add_mask,
      packed['emb_ln_g'], packed['emb_ln_b'],
      packed['wqkv'], packed['bqkv'], packed['wo'], packed['bo'],
      packed['ln1g'], packed['ln1b'], packed['wi'], packed['bi'],
      packed['w2'], packed['b2'], packed['ln2g'], packed['ln2b'],
      packed['pooler_w'], packed['pooler_b'],
      packed['reg_w_pad'], packed['reg_b_pad'])
    return preds_full[:, 0]                                   # (B,)


# ------------------------------ parameters ------------------------------------

def init_params(key):
    ks = iter(jax.random.split(key, 64))
    nrm = lambda shape: 0.02 * jax.random.normal(next(ks), shape, jnp.float32)
    zeros = lambda shape: jnp.zeros(shape, jnp.float32)
    ones = lambda shape: jnp.ones(shape, jnp.float32)
    params = dict(
        word_emb=nrm((VOCAB, HIDDEN)),
        pos_emb=nrm((MAX_POS, HIDDEN)),
        type_emb=nrm((TYPE_VOCAB, HIDDEN)),
        emb_ln_g=ones((1, HIDDEN)), emb_ln_b=zeros((1, HIDDEN)),
        pooler_w=nrm((HIDDEN, HIDDEN)), pooler_b=zeros((1, HIDDEN)),
        reg_w=nrm((HIDDEN, 1)), reg_b=zeros((1, 1)),
        layers=[],
    )
    for _ in range(LAYERS):
        params['layers'].append(dict(
            wq=nrm((HIDDEN, HIDDEN)), bq=zeros((1, HIDDEN)),
            wk=nrm((HIDDEN, HIDDEN)), bk=zeros((1, HIDDEN)),
            wv=nrm((HIDDEN, HIDDEN)), bv=zeros((1, HIDDEN)),
            wo=nrm((HIDDEN, HIDDEN)), bo=zeros((1, HIDDEN)),
            ln1g=ones((1, HIDDEN)), ln1b=zeros((1, HIDDEN)),
            wi=nrm((HIDDEN, INTER)), bi=zeros((1, INTER)),
            w2=nrm((INTER, HIDDEN)), b2=zeros((1, HIDDEN)),
            ln2g=ones((1, HIDDEN)), ln2b=zeros((1, HIDDEN)),
        ))
    return params


def pack_params(params, nh):
    """Stack per-layer weights on a LAYERS axis, fuse Q/K/V into one (H,3H)
    weight (folding 1/sqrt(hd) into the Q slice), cast matmul weights to
    bf16, and lane-pad the regressor weight to 128 output columns."""
    hd = HIDDEN // nh
    scale = 1.0 / float(hd) ** 0.5
    layers = params['layers']
    stack = lambda key: jnp.stack([lp[key] for lp in layers])

    wqkv = jnp.concatenate([stack('wq') * scale, stack('wk'), stack('wv')],
                           axis=-1)                            # (L, H, 3H)
    bqkv = jnp.concatenate([stack('bq') * scale, stack('bk'), stack('bv')],
                           axis=-1)                            # (L, 1, 3H)
    reg_w_pad = jnp.zeros((HIDDEN, LANE), jnp.float32).at[:, 0:1].set(
        params['reg_w'])
    reg_b_pad = jnp.zeros((1, LANE), jnp.float32).at[:, 0:1].set(
        params['reg_b'])

    return dict(
        emb_ln_g=params['emb_ln_g'], emb_ln_b=params['emb_ln_b'],
        wqkv=wqkv.astype(jnp.bfloat16), bqkv=bqkv,
        wo=stack('wo').astype(jnp.bfloat16), bo=stack('bo'),
        ln1g=stack('ln1g'), ln1b=stack('ln1b'),
        wi=stack('wi').astype(jnp.bfloat16), bi=stack('bi'),
        w2=stack('w2').astype(jnp.bfloat16), b2=stack('b2'),
        ln2g=stack('ln2g'), ln2b=stack('ln2b'),
        pooler_w=params['pooler_w'], pooler_b=params['pooler_b'],
        reg_w_pad=reg_w_pad, reg_b_pad=reg_b_pad,
    )


# ------------------------------ forward ---------------------------------------

def bert_regression_forward(params, packed, input_ids, attention_mask,
                            targets=None):
    B, S = input_ids.shape
    # embeddings: gathers are XLA glue; the LayerNorm is fused into the
    # Pallas kernel.  token_type_ids == 0 (HF default).
    x = (params['word_emb'][input_ids]
         + params['pos_emb'][None, :S, :]
         + params['type_emb'][0][None, None, :])
    x2d = x.reshape(B * S, HIDDEN).astype(jnp.float32)
    # HF-style additive attention mask: 0 where attended, -1e4 where masked.
    add_mask = (1.0 - attention_mask.astype(jnp.float32))[:, None, :] * -10000.0

    preds = run_bert_kernel(x2d, add_mask, packed, HEADS, B, S).reshape(B, 1)

    if targets is not None:
        d = preds.reshape(-1) - targets.reshape(-1)
        loss = jnp.mean(d * d)          # batch-mean MSE as tiny XLA glue
        return loss, preds
    return preds


if __name__ == "__main__":
    key = jax.random.PRNGKey(0)
    kp, ki, kt = jax.random.split(key, 3)
    params = init_params(kp)
    packed = pack_params(params, HEADS)

    B, S = 2, 8
    input_ids = jax.random.randint(ki, (B, S), 0, VOCAB, dtype=jnp.int32)
    attention_mask = jnp.concatenate(
        [jnp.ones((B, S - 2), jnp.int32), jnp.zeros((B, 2), jnp.int32)], axis=1)
    targets = jax.random.uniform(kt, (B,), jnp.float32, 0.0, 10.0)

    loss, preds = bert_regression_forward(params, packed, input_ids,
                                          attention_mask, targets)
    jax.block_until_ready((loss, preds))
    print("KERNEL_OK")
</pallas_src>

<mosaic_0001>
module attributes {stable_mosaic.version = 11 : i64} {
  func.func @bert_kernel(%arg0: memref<16x32xf32, #tpu.memory_space<vmem>>, %arg1: memref<2x1x8xf32, #tpu.memory_space<vmem>>, %arg2: memref<1x32xf32, #tpu.memory_space<vmem>>, %arg3: memref<1x32xf32, #tpu.memory_space<vmem>>, %arg4: memref<2x32x96xbf16, #tpu.memory_space<vmem>>, %arg5: memref<2x1x96xf32, #tpu.memory_space<vmem>>, %arg6: memref<2x32x32xbf16, #tpu.memory_space<vmem>>, %arg7: memref<2x1x32xf32, #tpu.memory_space<vmem>>, %arg8: memref<2x1x32xf32, #tpu.memory_space<vmem>>, %arg9: memref<2x1x32xf32, #tpu.memory_space<vmem>>, %arg10: memref<2x32x64xbf16, #tpu.memory_space<vmem>>, %arg11: memref<2x1x64xf32, #tpu.memory_space<vmem>>, %arg12: memref<2x64x32xbf16, #tpu.memory_space<vmem>>, %arg13: memref<2x1x32xf32, #tpu.memory_space<vmem>>, %arg14: memref<2x1x32xf32, #tpu.memory_space<vmem>>, %arg15: memref<2x1x32xf32, #tpu.memory_space<vmem>>, %arg16: memref<32x32xf32, #tpu.memory_space<vmem>>, %arg17: memref<1x32xf32, #tpu.memory_space<vmem>>, %arg18: memref<32x128xf32, #tpu.memory_space<vmem>>, %arg19: memref<1x128xf32, #tpu.memory_space<vmem>>, %arg20: memref<2x128xf32, #tpu.memory_space<vmem>>, %arg21: memref<16x32xf32, #tpu.memory_space<vmem>>) attributes {dimension_semantics = [], scalar_prefetch = 0 : i64, scratch_operands = 1 : i64, tpu.core_type = #tpu.core_type<tc>} {
    %c0 = arith.constant 0 : index
    %c0_0 = arith.constant 0 : index
    %0 = vector.load %arg0[%c0, %c0_0] : memref<16x32xf32, #tpu.memory_space<vmem>>, vector<16x32xf32>
    %c0_1 = arith.constant 0 : index
    %c0_2 = arith.constant 0 : index
    %1 = vector.load %arg2[%c0_1, %c0_2] : memref<1x32xf32, #tpu.memory_space<vmem>>, vector<1x32xf32>
    %c0_3 = arith.constant 0 : index
    %c0_4 = arith.constant 0 : index
    %2 = vector.load %arg3[%c0_3, %c0_4] : memref<1x32xf32, #tpu.memory_space<vmem>>, vector<1x32xf32>
    %cst = arith.constant dense<0.000000e+00> : vector<16xf32>
    %3 = vector.multi_reduction <add>, %0, %cst [1] : vector<16x32xf32> to vector<16xf32>
    %4 = vector.shape_cast %3 : vector<16xf32> to vector<16x1xf32>
    %cst_5 = arith.constant 3.200000e+01 : f32
    %5 = vector.broadcast %cst_5 : f32 to vector<16x1xf32>
    %6 = arith.divf %4, %5 : vector<16x1xf32>
    %7 = vector.broadcast %6 : vector<16x1xf32> to vector<16x32xf32>
    %8 = arith.subf %0, %7 : vector<16x32xf32>
    %9 = arith.mulf %8, %8 : vector<16x32xf32>
    %cst_6 = arith.constant dense<0.000000e+00> : vector<16xf32>
    %10 = vector.multi_reduction <add>, %9, %cst_6 [1] : vector<16x32xf32> to vector<16xf32>
    %11 = vector.shape_cast %10 : vector<16xf32> to vector<16x1xf32>
    %cst_7 = arith.constant 3.200000e+01 : f32
    %12 = vector.broadcast %cst_7 : f32 to vector<16x1xf32>
    %13 = arith.divf %11, %12 : vector<16x1xf32>
    %14 = vector.broadcast %6 : vector<16x1xf32> to vector<16x32xf32>
    %15 = arith.subf %0, %14 : vector<16x32xf32>
    %cst_8 = arith.constant 9.99999996E-13 : f32
    %16 = vector.broadcast %cst_8 : f32 to vector<16x1xf32>
    %17 = arith.addf %13, %16 : vector<16x1xf32>
    %18 = math.rsqrt %17 : vector<16x1xf32>
    %19 = vector.broadcast %18 : vector<16x1xf32> to vector<16x32xf32>
    %20 = arith.mulf %15, %19 : vector<16x32xf32>
    %21 = vector.broadcast %1 : vector<1x32xf32> to vector<16x32xf32>
    %22 = arith.mulf %20, %21 : vector<16x32xf32>
    %23 = vector.broadcast %2 : vector<1x32xf32> to vector<16x32xf32>
    %24 = arith.addf %22, %23 : vector<16x32xf32>
    %c0_9 = arith.constant 0 : index
    %c0_10 = arith.constant 0 : index
    %25 = vector.load %arg21[%c0_9, %c0_10] : memref<16x32xf32, #tpu.memory_space<vmem>>, vector<16x32xf32>
    tpu.vector_store %arg21[%c0_9, %c0_10], %24 {strides = array<i32>} : memref<16x32xf32, #tpu.memory_space<vmem>>, vector<16x32xf32>,
    %c0_11 = arith.constant 0 : index
    %c0_12 = arith.constant 0 : index
    %c0_13 = arith.constant 0 : index
    %26 = vector.load %arg1[%c0_11, %c0_12, %c0_13] : memref<2x1x8xf32, #tpu.memory_space<vmem>>, vector<2x1x8xf32>
    %c0_i32 = arith.constant 0 : i32
    %c0_14 = arith.constant 0 : index
    %c0_15 = arith.constant 0 : index
    %27 = vector.load %arg21[%c0_14, %c0_15] : memref<16x32xf32, #tpu.memory_space<vmem>>, vector<16x32xf32>
    %28 = arith.truncf %27 : vector<16x32xf32> to vector<16x32xbf16>
    %29 = arith.index_cast %c0_i32 : i32 to index
    %c0_16 = arith.constant 0 : index
    %c0_17 = arith.constant 0 : index
    %30 = vector.load %arg4[%29, %c0_16, %c0_17] : memref<2x32x96xbf16, #tpu.memory_space<vmem>>, vector<1x32x96xbf16>
    %31 = vector.shape_cast %30 : vector<1x32x96xbf16> to vector<32x96xbf16>
    %cst_18 = arith.constant dense<0.000000e+00> : vector<16x96xf32>
    %32 = tpu.matmul %28, %31, %cst_18 {dimension_numbers = #tpu.dot_dimension_numbers<[1], [0], [0], [1], [0, 0, 1, 1], [], []>} : vector<16x32xbf16>, vector<32x96xbf16>, vector<16x96xf32> -> vector<16x96xf32>
    %33 = arith.index_cast %c0_i32 : i32 to index
    %c0_19 = arith.constant 0 : index
    %c0_20 = arith.constant 0 : index
    %34 = vector.load %arg5[%33, %c0_19, %c0_20] : memref<2x1x96xf32, #tpu.memory_space<vmem>>, vector<1x1x96xf32>
    %35 = vector.shape_cast %34 : vector<1x1x96xf32> to vector<1x96xf32>
    %36 = vector.broadcast %35 : vector<1x96xf32> to vector<16x96xf32>
    %37 = arith.addf %32, %36 : vector<16x96xf32>
    %38 = vector.extract_strided_slice %37 {offsets = [0, 0], sizes = [16, 8], strides = [1, 1]} : vector<16x96xf32> to vector<16x8xf32>
    %39 = vector.shape_cast %38 : vector<16x8xf32> to vector<2x8x8xf32>
    %40 = vector.extract_strided_slice %37 {offsets = [0, 32], sizes = [16, 8], strides = [1, 1]} : vector<16x96xf32> to vector<16x8xf32>
    %41 = vector.shape_cast %40 : vector<16x8xf32> to vector<2x8x8xf32>
    %42 = vector.extract_strided_slice %37 {offsets = [0, 64], sizes = [16, 8], strides = [1, 1]} : vector<16x96xf32> to vector<16x8xf32>
    %43 = vector.shape_cast %42 : vector<16x8xf32> to vector<2x8x8xf32>
    %44 = arith.truncf %39 : vector<2x8x8xf32> to vector<2x8x8xbf16>
    %45 = arith.truncf %41 : vector<2x8x8xf32> to vector<2x8x8xbf16>
    "tpu.trace_start"() <{level = 10 : i32, message = "bqd,bkd->bqk"}> : () -> ()
    %cst_21 = arith.constant dense<0.000000e+00> : vector<2x8x8xf32>
    %46 = tpu.matmul %44, %45, %cst_21 {dimension_numbers = #tpu.dot_dimension_numbers<[2], [2], [1], [1], [0, 0, 0, 1, 1, 1], [0], [0]>} : vector<2x8x8xbf16>, vector<2x8x8xbf16>, vector<2x8x8xf32> -> vector<2x8x8xf32>
    "tpu.trace_stop"() : () -> ()
    %47 = vector.broadcast %26 : vector<2x1x8xf32> to vector<2x8x8xf32>
    %48 = arith.addf %46, %47 : vector<2x8x8xf32>
    %cst_22 = arith.constant dense<0xFF800000> : vector<2x8xf32>
    %49 = vector.multi_reduction <maximumf>, %48, %cst_22 [2] : vector<2x8x8xf32> to vector<2x8xf32>
    %50 = vector.shape_cast %49 : vector<2x8xf32> to vector<2x8x1xf32>
    %51 = vector.broadcast %50 : vector<2x8x1xf32> to vector<2x8x8xf32>
    %52 = arith.subf %48, %51 : vector<2x8x8xf32>
    %53 = math.exp %52 : vector<2x8x8xf32>
    %cst_23 = arith.constant dense<0.000000e+00> : vector<2x8xf32>
    %54 = vector.multi_reduction <add>, %53, %cst_23 [2] : vector<2x8x8xf32> to vector<2x8xf32>
    %55 = vector.shape_cast %54 : vector<2x8xf32> to vector<2x8x1xf32>
    %56 = tpu.reciprocal %55 {approx = true} : vector<2x8x1xf32> -> vector<2x8x1xf32>
    %57 = vector.broadcast %56 : vector<2x8x1xf32> to vector<2x8x8xf32>
    %58 = arith.mulf %53, %57 : vector<2x8x8xf32>
    %59 = arith.truncf %58 : vector<2x8x8xf32> to vector<2x8x8xbf16>
    %60 = arith.truncf %43 : vector<2x8x8xf32> to vector<2x8x8xbf16>
    "tpu.trace_start"() <{level = 10 : i32, message = "bqk,bkd->bqd"}> : () -> ()
    %cst_24 = arith.constant dense<0.000000e+00> : vector<2x8x8xf32>
    %61 = tpu.matmul %59, %60, %cst_24 {dimension_numbers = #tpu.dot_dimension_numbers<[2], [1], [1], [2], [0, 0, 0, 1, 1, 2], [0], [0]>} : vector<2x8x8xbf16>, vector<2x8x8xbf16>, vector<2x8x8xf32> -> vector<2x8x8xf32>
    "tpu.trace_stop"() : () -> ()
    %62 = vector.shape_cast %61 : vector<2x8x8xf32> to vector<16x8xf32>
    %63 = vector.extract_strided_slice %37 {offsets = [0, 8], sizes = [16, 8], strides = [1, 1]} : vector<16x96xf32> to vector<16x8xf32>
    %64 = vector.shape_cast %63 : vector<16x8xf32> to vector<2x8x8xf32>
    %65 = vector.extract_strided_slice %37 {offsets = [0, 40], sizes = [16, 8], strides = [1, 1]} : vector<16x96xf32> to vector<16x8xf32>
    %66 = vector.shape_cast %65 : vector<16x8xf32> to vector<2x8x8xf32>
    %67 = vector.extract_strided_slice %37 {offsets = [0, 72], sizes = [16, 8], strides = [1, 1]} : vector<16x96xf32> to vector<16x8xf32>
    %68 = vector.shape_cast %67 : vector<16x8xf32> to vector<2x8x8xf32>
    %69 = arith.truncf %64 : vector<2x8x8xf32> to vector<2x8x8xbf16>
    %70 = arith.truncf %66 : vector<2x8x8xf32> to vector<2x8x8xbf16>
    "tpu.trace_start"() <{level = 10 : i32, message = "bqd,bkd->bqk"}> : () -> ()
    %cst_25 = arith.constant dense<0.000000e+00> : vector<2x8x8xf32>
    %71 = tpu.matmul %69, %70, %cst_25 {dimension_numbers = #tpu.dot_dimension_numbers<[2], [2], [1], [1], [0, 0, 0, 1, 1, 1], [0], [0]>} : vector<2x8x8xbf16>, vector<2x8x8xbf16>, vector<2x8x8xf32> -> vector<2x8x8xf32>
    "tpu.trace_stop"() : () -> ()
    %72 = vector.broadcast %26 : vector<2x1x8xf32> to vector<2x8x8xf32>
    %73 = arith.addf %71, %72 : vector<2x8x8xf32>
    %cst_26 = arith.constant dense<0xFF800000> : vector<2x8xf32>
    %74 = vector.multi_reduction <maximumf>, %73, %cst_26 [2] : vector<2x8x8xf32> to vector<2x8xf32>
    %75 = vector.shape_cast %74 : vector<2x8xf32> to vector<2x8x1xf32>
    %76 = vector.broadcast %75 : vector<2x8x1xf32> to vector<2x8x8xf32>
    %77 = arith.subf %73, %76 : vector<2x8x8xf32>
    %78 = math.exp %77 : vector<2x8x8xf32>
    %cst_27 = arith.constant dense<0.000000e+00> : vector<2x8xf32>
    %79 = vector.multi_reduction <add>, %78, %cst_27 [2] : vector<2x8x8xf32> to vector<2x8xf32>
    %80 = vector.shape_cast %79 : vector<2x8xf32> to vector<2x8x1xf32>
    %81 = tpu.reciprocal %80 {approx = true} : vector<2x8x1xf32> -> vector<2x8x1xf32>
    %82 = vector.broadcast %81 : vector<2x8x1xf32> to vector<2x8x8xf32>
    %83 = arith.mulf %78, %82 : vector<2x8x8xf32>
    %84 = arith.truncf %83 : vector<2x8x8xf32> to vector<2x8x8xbf16>
    %85 = arith.truncf %68 : vector<2x8x8xf32> to vector<2x8x8xbf16>
    "tpu.trace_start"() <{level = 10 : i32, message = "bqk,bkd->bqd"}> : () -> ()
    %cst_28 = arith.constant dense<0.000000e+00> : vector<2x8x8xf32>
    %86 = tpu.matmul %84, %85, %cst_28 {dimension_numbers = #tpu.dot_dimension_numbers<[2], [1], [1], [2], [0, 0, 0, 1, 1, 2], [0], [0]>} : vector<2x8x8xbf16>, vector<2x8x8xbf16>, vector<2x8x8xf32> -> vector<2x8x8xf32>
    "tpu.trace_stop"() : () -> ()
    %87 = vector.shape_cast %86 : vector<2x8x8xf32> to vector<16x8xf32>
    %88 = vector.extract_strided_slice %37 {offsets = [0, 16], sizes = [16, 8], strides = [1, 1]} : vector<16x96xf32> to vector<16x8xf32>
    %89 = vector.shape_cast %88 : vector<16x8xf32> to vector<2x8x8xf32>
    %90 = vector.extract_strided_slice %37 {offsets = [0, 48], sizes = [16, 8], strides = [1, 1]} : vector<16x96xf32> to vector<16x8xf32>
    %91 = vector.shape_cast %90 : vector<16x8xf32> to vector<2x8x8xf32>
    %92 = vector.extract_strided_slice %37 {offsets = [0, 80], sizes = [16, 8], strides = [1, 1]} : vector<16x96xf32> to vector<16x8xf32>
    %93 = vector.shape_cast %92 : vector<16x8xf32> to vector<2x8x8xf32>
    %94 = arith.truncf %89 : vector<2x8x8xf32> to vector<2x8x8xbf16>
    %95 = arith.truncf %91 : vector<2x8x8xf32> to vector<2x8x8xbf16>
    "tpu.trace_start"() <{level = 10 : i32, message = "bqd,bkd->bqk"}> : () -> ()
    %cst_29 = arith.constant dense<0.000000e+00> : vector<2x8x8xf32>
    %96 = tpu.matmul %94, %95, %cst_29 {dimension_numbers = #tpu.dot_dimension_numbers<[2], [2], [1], [1], [0, 0, 0, 1, 1, 1], [0], [0]>} : vector<2x8x8xbf16>, vector<2x8x8xbf16>, vector<2x8x8xf32> -> vector<2x8x8xf32>
    "tpu.trace_stop"() : () -> ()
    %97 = vector.broadcast %26 : vector<2x1x8xf32> to vector<2x8x8xf32>
    %98 = arith.addf %96, %97 : vector<2x8x8xf32>
    %cst_30 = arith.constant dense<0xFF800000> : vector<2x8xf32>
    %99 = vector.multi_reduction <maximumf>, %98, %cst_30 [2] : vector<2x8x8xf32> to vector<2x8xf32>
    %100 = vector.shape_cast %99 : vector<2x8xf32> to vector<2x8x1xf32>
    %101 = vector.broadcast %100 : vector<2x8x1xf32> to vector<2x8x8xf32>
    %102 = arith.subf %98, %101 : vector<2x8x8xf32>
    %103 = math.exp %102 : vector<2x8x8xf32>
    %cst_31 = arith.constant dense<0.000000e+00> : vector<2x8xf32>
    %104 = vector.multi_reduction <add>, %103, %cst_31 [2] : vector<2x8x8xf32> to vector<2x8xf32>
    %105 = vector.shape_cast %104 : vector<2x8xf32> to vector<2x8x1xf32>
    %106 = tpu.reciprocal %105 {approx = true} : vector<2x8x1xf32> -> vector<2x8x1xf32>
    %107 = vector.broadcast %106 : vector<2x8x1xf32> to vector<2x8x8xf32>
    %108 = arith.mulf %103, %107 : vector<2x8x8xf32>
    %109 = arith.truncf %108 : vector<2x8x8xf32> to vector<2x8x8xbf16>
    %110 = arith.truncf %93 : vector<2x8x8xf32> to vector<2x8x8xbf16>
    "tpu.trace_start"() <{level = 10 : i32, message = "bqk,bkd->bqd"}> : () -> ()
    %cst_32 = arith.constant dense<0.000000e+00> : vector<2x8x8xf32>
    %111 = tpu.matmul %109, %110, %cst_32 {dimension_numbers = #tpu.dot_dimension_numbers<[2], [1], [1], [2], [0, 0, 0, 1, 1, 2], [0], [0]>} : vector<2x8x8xbf16>, vector<2x8x8xbf16>, vector<2x8x8xf32> -> vector<2x8x8xf32>
    "tpu.trace_stop"() : () -> ()
    %112 = vector.shape_cast %111 : vector<2x8x8xf32> to vector<16x8xf32>
    %113 = vector.extract_strided_slice %37 {offsets = [0, 24], sizes = [16, 8], strides = [1, 1]} : vector<16x96xf32> to vector<16x8xf32>
    %114 = vector.shape_cast %113 : vector<16x8xf32> to vector<2x8x8xf32>
    %115 = vector.extract_strided_slice %37 {offsets = [0, 56], sizes = [16, 8], strides = [1, 1]} : vector<16x96xf32> to vector<16x8xf32>
    %116 = vector.shape_cast %115 : vector<16x8xf32> to vector<2x8x8xf32>
    %117 = vector.extract_strided_slice %37 {offsets = [0, 88], sizes = [16, 8], strides = [1, 1]} : vector<16x96xf32> to vector<16x8xf32>
    %118 = vector.shape_cast %117 : vector<16x8xf32> to vector<2x8x8xf32>
    %119 = arith.truncf %114 : vector<2x8x8xf32> to vector<2x8x8xbf16>
    %120 = arith.truncf %116 : vector<2x8x8xf32> to vector<2x8x8xbf16>
    "tpu.trace_start"() <{level = 10 : i32, message = "bqd,bkd->bqk"}> : () -> ()
    %cst_33 = arith.constant dense<0.000000e+00> : vector<2x8x8xf32>
    %121 = tpu.matmul %119, %120, %cst_33 {dimension_numbers = #tpu.dot_dimension_numbers<[2], [2], [1], [1], [0, 0, 0, 1, 1, 1], [0], [0]>} : vector<2x8x8xbf16>, vector<2x8x8xbf16>, vector<2x8x8xf32> -> vector<2x8x8xf32>
    "tpu.trace_stop"() : () -> ()
    %122 = vector.broadcast %26 : vector<2x1x8xf32> to vector<2x8x8xf32>
    %123 = arith.addf %121, %122 : vector<2x8x8xf32>
    %cst_34 = arith.constant dense<0xFF800000> : vector<2x8xf32>
    %124 = vector.multi_reduction <maximumf>, %123, %cst_34 [2] : vector<2x8x8xf32> to vector<2x8xf32>
    %125 = vector.shape_cast %124 : vector<2x8xf32> to vector<2x8x1xf32>
    %126 = vector.broadcast %125 : vector<2x8x1xf32> to vector<2x8x8xf32>
    %127 = arith.subf %123, %126 : vector<2x8x8xf32>
    %128 = math.exp %127 : vector<2x8x8xf32>
    %cst_35 = arith.constant dense<0.000000e+00> : vector<2x8xf32>
    %129 = vector.multi_reduction <add>, %128, %cst_35 [2] : vector<2x8x8xf32> to vector<2x8xf32>
    %130 = vector.shape_cast %129 : vector<2x8xf32> to vector<2x8x1xf32>
    %131 = tpu.reciprocal %130 {approx = true} : vector<2x8x1xf32> -> vector<2x8x1xf32>
    %132 = vector.broadcast %131 : vector<2x8x1xf32> to vector<2x8x8xf32>
    %133 = arith.mulf %128, %132 : vector<2x8x8xf32>
    %134 = arith.truncf %133 : vector<2x8x8xf32> to vector<2x8x8xbf16>
    %135 = arith.truncf %118 : vector<2x8x8xf32> to vector<2x8x8xbf16>
    "tpu.trace_start"() <{level = 10 : i32, message = "bqk,bkd->bqd"}> : () -> ()
    %cst_36 = arith.constant dense<0.000000e+00> : vector<2x8x8xf32>
    %136 = tpu.matmul %134, %135, %cst_36 {dimension_numbers = #tpu.dot_dimension_numbers<[2], [1], [1], [2], [0, 0, 0, 1, 1, 2], [0], [0]>} : vector<2x8x8xbf16>, vector<2x8x8xbf16>, vector<2x8x8xf32> -> vector<2x8x8xf32>
    "tpu.trace_stop"() : () -> ()
    %137 = vector.shape_cast %136 : vector<2x8x8xf32> to vector<16x8xf32>
    %138 = tpu.concatenate %62, %87, %112, %137 in 1 : vector<16x8xf32>, vector<16x8xf32>, vector<16x8xf32>, vector<16x8xf32> -> vector<16x32xf32>
    %139 = arith.truncf %138 : vector<16x32xf32> to vector<16x32xbf16>
    %140 = arith.index_cast %c0_i32 : i32 to index
    %c0_37 = arith.constant 0 : index
    %c0_38 = arith.constant 0 : index
    %141 = vector.load %arg6[%140, %c0_37, %c0_38] : memref<2x32x32xbf16, #tpu.memory_space<vmem>>, vector<1x32x32xbf16>
    %142 = vector.shape_cast %141 : vector<1x32x32xbf16> to vector<32x32xbf16>
    %cst_39 = arith.constant dense<0.000000e+00> : vector<16x32xf32>
    %143 = tpu.matmul %139, %142, %cst_39 {dimension_numbers = #tpu.dot_dimension_numbers<[1], [0], [0], [1], [0, 0, 1, 1], [], []>} : vector<16x32xbf16>, vector<32x32xbf16>, vector<16x32xf32> -> vector<16x32xf32>
    %144 = arith.index_cast %c0_i32 : i32 to index
    %c0_40 = arith.constant 0 : index
    %c0_41 = arith.constant 0 : index
    %145 = vector.load %arg7[%144, %c0_40, %c0_41] : memref<2x1x32xf32, #tpu.memory_space<vmem>>, vector<1x1x32xf32>
    %146 = vector.shape_cast %145 : vector<1x1x32xf32> to vector<1x32xf32>
    %147 = vector.broadcast %146 : vector<1x32xf32> to vector<16x32xf32>
    %148 = arith.addf %143, %147 : vector<16x32xf32>
    %149 = arith.addf %27, %148 : vector<16x32xf32>
    %150 = arith.index_cast %c0_i32 : i32 to index
    %c0_42 = arith.constant 0 : index
    %c0_43 = arith.constant 0 : index
    %151 = vector.load %arg8[%150, %c0_42, %c0_43] : memref<2x1x32xf32, #tpu.memory_space<vmem>>, vector<1x1x32xf32>
    %152 = vector.shape_cast %151 : vector<1x1x32xf32> to vector<1x32xf32>
    %153 = arith.index_cast %c0_i32 : i32 to index
    %c0_44 = arith.constant 0 : index
    %c0_45 = arith.constant 0 : index
    %154 = vector.load %arg9[%153, %c0_44, %c0_45] : memref<2x1x32xf32, #tpu.memory_space<vmem>>, vector<1x1x32xf32>
    %155 = vector.shape_cast %154 : vector<1x1x32xf32> to vector<1x32xf32>
    %cst_46 = arith.constant dense<0.000000e+00> : vector<16xf32>
    %156 = vector.multi_reduction <add>, %149, %cst_46 [1] : vector<16x32xf32> to vector<16xf32>
    %157 = vector.shape_cast %156 : vector<16xf32> to vector<16x1xf32>
    %cst_47 = arith.constant 3.200000e+01 : f32
    %158 = vector.broadcast %cst_47 : f32 to vector<16x1xf32>
    %159 = arith.divf %157, %158 : vector<16x1xf32>
    %160 = vector.broadcast %159 : vector<16x1xf32> to vector<16x32xf32>
    %161 = arith.subf %149, %160 : vector<16x32xf32>
    %162 = arith.mulf %161, %161 : vector<16x32xf32>
    %cst_48 = arith.constant dense<0.000000e+00> : vector<16xf32>
    %163 = vector.multi_reduction <add>, %162, %cst_48 [1] : vector<16x32xf32> to vector<16xf32>
    %164 = vector.shape_cast %163 : vector<16xf32> to vector<16x1xf32>
    %cst_49 = arith.constant 3.200000e+01 : f32
    %165 = vector.broadcast %cst_49 : f32 to vector<16x1xf32>
    %166 = arith.divf %164, %165 : vector<16x1xf32>
    %167 = vector.broadcast %159 : vector<16x1xf32> to vector<16x32xf32>
    %168 = arith.subf %149, %167 : vector<16x32xf32>
    %cst_50 = arith.constant 9.99999996E-13 : f32
    %169 = vector.broadcast %cst_50 : f32 to vector<16x1xf32>
    %170 = arith.addf %166, %169 : vector<16x1xf32>
    %171 = math.rsqrt %170 : vector<16x1xf32>
    %172 = vector.broadcast %171 : vector<16x1xf32> to vector<16x32xf32>
    %173 = arith.mulf %168, %172 : vector<16x32xf32>
    %174 = vector.broadcast %152 : vector<1x32xf32> to vector<16x32xf32>
    %175 = arith.mulf %173, %174 : vector<16x32xf32>
    %176 = vector.broadcast %155 : vector<1x32xf32> to vector<16x32xf32>
    %177 = arith.addf %175, %176 : vector<16x32xf32>
    %178 = arith.truncf %177 : vector<16x32xf32> to vector<16x32xbf16>
    %179 = arith.index_cast %c0_i32 : i32 to index
    %c0_51 = arith.constant 0 : index
    %c0_52 = arith.constant 0 : index
    %180 = vector.load %arg10[%179, %c0_51, %c0_52] : memref<2x32x64xbf16, #tpu.memory_space<vmem>>, vector<1x32x64xbf16>
    %181 = vector.shape_cast %180 : vector<1x32x64xbf16> to vector<32x64xbf16>
    %cst_53 = arith.constant dense<0.000000e+00> : vector<16x64xf32>
    %182 = tpu.matmul %178, %181, %cst_53 {dimension_numbers = #tpu.dot_dimension_numbers<[1], [0], [0], [1], [0, 0, 1, 1], [], []>} : vector<16x32xbf16>, vector<32x64xbf16>, vector<16x64xf32> -> vector<16x64xf32>
    %183 = arith.index_cast %c0_i32 : i32 to index
    %c0_54 = arith.constant 0 : index
    %c0_55 = arith.constant 0 : index
    %184 = vector.load %arg11[%183, %c0_54, %c0_55] : memref<2x1x64xf32, #tpu.memory_space<vmem>>, vector<1x1x64xf32>
    %185 = vector.shape_cast %184 : vector<1x1x64xf32> to vector<1x64xf32>
    %186 = vector.broadcast %185 : vector<1x64xf32> to vector<16x64xf32>
    %187 = arith.addf %182, %186 : vector<16x64xf32>
    %188 = arith.mulf %187, %187 : vector<16x64xf32>
    %189 = arith.mulf %187, %188 : vector<16x64xf32>
    %cst_56 = arith.constant 4.471500e-02 : f32
    %190 = vector.broadcast %cst_56 : f32 to vector<16x64xf32>
    %191 = arith.mulf %190, %189 : vector<16x64xf32>
    %192 = arith.addf %187, %191 : vector<16x64xf32>
    %cst_57 = arith.constant 0.797884583 : f32
    %193 = vector.broadcast %cst_57 : f32 to vector<16x64xf32>
    %194 = arith.mulf %193, %192 : vector<16x64xf32>
    %195 = math.tanh %194 : vector<16x64xf32>
    %cst_58 = arith.constant 1.000000e+00 : f32
    %196 = vector.broadcast %cst_58 : f32 to vector<16x64xf32>
    %197 = arith.addf %196, %195 : vector<16x64xf32>
    %cst_59 = arith.constant 5.000000e-01 : f32
    %198 = vector.broadcast %cst_59 : f32 to vector<16x64xf32>
    %199 = arith.mulf %198, %197 : vector<16x64xf32>
    %200 = arith.mulf %187, %199 : vector<16x64xf32>
    %201 = arith.truncf %200 : vector<16x64xf32> to vector<16x64xbf16>
    %202 = arith.index_cast %c0_i32 : i32 to index
    %c0_60 = arith.constant 0 : index
    %c0_61 = arith.constant 0 : index
    %203 = vector.load %arg12[%202, %c0_60, %c0_61] : memref<2x64x32xbf16, #tpu.memory_space<vmem>>, vector<1x64x32xbf16>
    %204 = vector.shape_cast %203 : vector<1x64x32xbf16> to vector<64x32xbf16>
    %cst_62 = arith.constant dense<0.000000e+00> : vector<16x32xf32>
    %205 = tpu.matmul %201, %204, %cst_62 {dimension_numbers = #tpu.dot_dimension_numbers<[1], [0], [0], [1], [0, 0, 1, 1], [], []>} : vector<16x64xbf16>, vector<64x32xbf16>, vector<16x32xf32> -> vector<16x32xf32>
    %206 = arith.index_cast %c0_i32 : i32 to index
    %c0_63 = arith.constant 0 : index
    %c0_64 = arith.constant 0 : index
    %207 = vector.load %arg13[%206, %c0_63, %c0_64] : memref<2x1x32xf32, #tpu.memory_space<vmem>>, vector<1x1x32xf32>
    %208 = vector.shape_cast %207 : vector<1x1x32xf32> to vector<1x32xf32>
    %209 = vector.broadcast %208 : vector<1x32xf32> to vector<16x32xf32>
    %210 = arith.addf %205, %209 : vector<16x32xf32>
    %211 = arith.addf %177, %210 : vector<16x32xf32>
    %212 = arith.index_cast %c0_i32 : i32 to index
    %c0_65 = arith.constant 0 : index
    %c0_66 = arith.constant 0 : index
    %213 = vector.load %arg14[%212, %c0_65, %c0_66] : memref<2x1x32xf32, #tpu.memory_space<vmem>>, vector<1x1x32xf32>
    %214 = vector.shape_cast %213 : vector<1x1x32xf32> to vector<1x32xf32>
    %215 = arith.index_cast %c0_i32 : i32 to index
    %c0_67 = arith.constant 0 : index
    %c0_68 = arith.constant 0 : index
    %216 = vector.load %arg15[%215, %c0_67, %c0_68] : memref<2x1x32xf32, #tpu.memory_space<vmem>>, vector<1x1x32xf32>
    %217 = vector.shape_cast %216 : vector<1x1x32xf32> to vector<1x32xf32>
    %cst_69 = arith.constant dense<0.000000e+00> : vector<16xf32>
    %218 = vector.multi_reduction <add>, %211, %cst_69 [1] : vector<16x32xf32> to vector<16xf32>
    %219 = vector.shape_cast %218 : vector<16xf32> to vector<16x1xf32>
    %cst_70 = arith.constant 3.200000e+01 : f32
    %220 = vector.broadcast %cst_70 : f32 to vector<16x1xf32>
    %221 = arith.divf %219, %220 : vector<16x1xf32>
    %222 = vector.broadcast %221 : vector<16x1xf32> to vector<16x32xf32>
    %223 = arith.subf %211, %222 : vector<16x32xf32>
    %224 = arith.mulf %223, %223 : vector<16x32xf32>
    %cst_71 = arith.constant dense<0.000000e+00> : vector<16xf32>
    %225 = vector.multi_reduction <add>, %224, %cst_71 [1] : vector<16x32xf32> to vector<16xf32>
    %226 = vector.shape_cast %225 : vector<16xf32> to vector<16x1xf32>
    %cst_72 = arith.constant 3.200000e+01 : f32
    %227 = vector.broadcast %cst_72 : f32 to vector<16x1xf32>
    %228 = arith.divf %226, %227 : vector<16x1xf32>
    %229 = vector.broadcast %221 : vector<16x1xf32> to vector<16x32xf32>
    %230 = arith.subf %211, %229 : vector<16x32xf32>
    %cst_73 = arith.constant 9.99999996E-13 : f32
    %231 = vector.broadcast %cst_73 : f32 to vector<16x1xf32>
    %232 = arith.addf %228, %231 : vector<16x1xf32>
    %233 = math.rsqrt %232 : vector<16x1xf32>
    %234 = vector.broadcast %233 : vector<16x1xf32> to vector<16x32xf32>
    %235 = arith.mulf %230, %234 : vector<16x32xf32>
    %236 = vector.broadcast %214 : vector<1x32xf32> to vector<16x32xf32>
    %237 = arith.mulf %235, %236 : vector<16x32xf32>
    %238 = vector.broadcast %217 : vector<1x32xf32> to vector<16x32xf32>
    %239 = arith.addf %237, %238 : vector<16x32xf32>
    %c0_74 = arith.constant 0 : index
    %c0_75 = arith.constant 0 : index
    %240 = vector.load %arg21[%c0_74, %c0_75] : memref<16x32xf32, #tpu.memory_space<vmem>>, vector<16x32xf32>
    tpu.vector_store %arg21[%c0_74, %c0_75], %239 {strides = array<i32>} : memref<16x32xf32, #tpu.memory_space<vmem>>, vector<16x32xf32>,
    %c1_i32 = arith.constant 1 : i32
    %c0_76 = arith.constant 0 : index
    %c0_77 = arith.constant 0 : index
    %241 = vector.load %arg21[%c0_76, %c0_77] : memref<16x32xf32, #tpu.memory_space<vmem>>, vector<16x32xf32>
    %242 = arith.truncf %241 : vector<16x32xf32> to vector<16x32xbf16>
    %243 = arith.index_cast %c1_i32 : i32 to index
    %c0_78 = arith.constant 0 : index
    %c0_79 = arith.constant 0 : index
    %244 = vector.load %arg4[%243, %c0_78, %c0_79] : memref<2x32x96xbf16, #tpu.memory_space<vmem>>, vector<1x32x96xbf16>
    %245 = vector.shape_cast %244 : vector<1x32x96xbf16> to vector<32x96xbf16>
    %cst_80 = arith.constant dense<0.000000e+00> : vector<16x96xf32>
    %246 = tpu.matmul %242, %245, %cst_80 {dimension_numbers = #tpu.dot_dimension_numbers<[1], [0], [0], [1], [0, 0, 1, 1], [], []>} : vector<16x32xbf16>, vector<32x96xbf16>, vector<16x96xf32> -> vector<16x96xf32>
    %247 = arith.index_cast %c1_i32 : i32 to index
    %c0_81 = arith.constant 0 : index
    %c0_82 = arith.constant 0 : index
    %248 = vector.load %arg5[%247, %c0_81, %c0_82] : memref<2x1x96xf32, #tpu.memory_space<vmem>>, vector<1x1x96xf32>
    %249 = vector.shape_cast %248 : vector<1x1x96xf32> to vector<1x96xf32>
    %250 = vector.broadcast %249 : vector<1x96xf32> to vector<16x96xf32>
    %251 = arith.addf %246, %250 : vector<16x96xf32>
    %252 = vector.extract_strided_slice %251 {offsets = [0, 0], sizes = [16, 8], strides = [1, 1]} : vector<16x96xf32> to vector<16x8xf32>
    %253 = vector.shape_cast %252 : vector<16x8xf32> to vector<2x8x8xf32>
    %254 = vector.extract_strided_slice %251 {offsets = [0, 32], sizes = [16, 8], strides = [1, 1]} : vector<16x96xf32> to vector<16x8xf32>
    %255 = vector.shape_cast %254 : vector<16x8xf32> to vector<2x8x8xf32>
    %256 = vector.extract_strided_slice %251 {offsets = [0, 64], sizes = [16, 8], strides = [1, 1]} : vector<16x96xf32> to vector<16x8xf32>
    %257 = vector.shape_cast %256 : vector<16x8xf32> to vector<2x8x8xf32>
    %258 = arith.truncf %253 : vector<2x8x8xf32> to vector<2x8x8xbf16>
    %259 = arith.truncf %255 : vector<2x8x8xf32> to vector<2x8x8xbf16>
    "tpu.trace_start"() <{level = 10 : i32, message = "bqd,bkd->bqk"}> : () -> ()
    %cst_83 = arith.constant dense<0.000000e+00> : vector<2x8x8xf32>
    %260 = tpu.matmul %258, %259, %cst_83 {dimension_numbers = #tpu.dot_dimension_numbers<[2], [2], [1], [1], [0, 0, 0, 1, 1, 1], [0], [0]>} : vector<2x8x8xbf16>, vector<2x8x8xbf16>, vector<2x8x8xf32> -> vector<2x8x8xf32>
    "tpu.trace_stop"() : () -> ()
    %261 = vector.broadcast %26 : vector<2x1x8xf32> to vector<2x8x8xf32>
    %262 = arith.addf %260, %261 : vector<2x8x8xf32>
    %cst_84 = arith.constant dense<0xFF800000> : vector<2x8xf32>
    %263 = vector.multi_reduction <maximumf>, %262, %cst_84 [2] : vector<2x8x8xf32> to vector<2x8xf32>
    %264 = vector.shape_cast %263 : vector<2x8xf32> to vector<2x8x1xf32>
    %265 = vector.broadcast %264 : vector<2x8x1xf32> to vector<2x8x8xf32>
    %266 = arith.subf %262, %265 : vector<2x8x8xf32>
    %267 = math.exp %266 : vector<2x8x8xf32>
    %cst_85 = arith.constant dense<0.000000e+00> : vector<2x8xf32>
    %268 = vector.multi_reduction <add>, %267, %cst_85 [2] : vector<2x8x8xf32> to vector<2x8xf32>
    %269 = vector.shape_cast %268 : vector<2x8xf32> to vector<2x8x1xf32>
    %270 = tpu.reciprocal %269 {approx = true} : vector<2x8x1xf32> -> vector<2x8x1xf32>
    %271 = vector.broadcast %270 : vector<2x8x1xf32> to vector<2x8x8xf32>
    %272 = arith.mulf %267, %271 : vector<2x8x8xf32>
    %273 = arith.truncf %272 : vector<2x8x8xf32> to vector<2x8x8xbf16>
    %274 = arith.truncf %257 : vector<2x8x8xf32> to vector<2x8x8xbf16>
    "tpu.trace_start"() <{level = 10 : i32, message = "bqk,bkd->bqd"}> : () -> ()
    %cst_86 = arith.constant dense<0.000000e+00> : vector<2x8x8xf32>
    %275 = tpu.matmul %273, %274, %cst_86 {dimension_numbers = #tpu.dot_dimension_numbers<[2], [1], [1], [2], [0, 0, 0, 1, 1, 2], [0], [0]>} : vector<2x8x8xbf16>, vector<2x8x8xbf16>, vector<2x8x8xf32> -> vector<2x8x8xf32>
    "tpu.trace_stop"() : () -> ()
    %276 = vector.shape_cast %275 : vector<2x8x8xf32> to vector<16x8xf32>
    %277 = vector.extract_strided_slice %251 {offsets = [0, 8], sizes = [16, 8], strides = [1, 1]} : vector<16x96xf32> to vector<16x8xf32>
    %278 = vector.shape_cast %277 : vector<16x8xf32> to vector<2x8x8xf32>
    %279 = vector.extract_strided_slice %251 {offsets = [0, 40], sizes = [16, 8], strides = [1, 1]} : vector<16x96xf32> to vector<16x8xf32>
    %280 = vector.shape_cast %279 : vector<16x8xf32> to vector<2x8x8xf32>
    %281 = vector.extract_strided_slice %251 {offsets = [0, 72], sizes = [16, 8], strides = [1, 1]} : vector<16x96xf32> to vector<16x8xf32>
    %282 = vector.shape_cast %281 : vector<16x8xf32> to vector<2x8x8xf32>
    %283 = arith.truncf %278 : vector<2x8x8xf32> to vector<2x8x8xbf16>
    %284 = arith.truncf %280 : vector<2x8x8xf32> to vector<2x8x8xbf16>
    "tpu.trace_start"() <{level = 10 : i32, message = "bqd,bkd->bqk"}> : () -> ()
    %cst_87 = arith.constant dense<0.000000e+00> : vector<2x8x8xf32>
    %285 = tpu.matmul %283, %284, %cst_87 {dimension_numbers = #tpu.dot_dimension_numbers<[2], [2], [1], [1], [0, 0, 0, 1, 1, 1], [0], [0]>} : vector<2x8x8xbf16>, vector<2x8x8xbf16>, vector<2x8x8xf32> -> vector<2x8x8xf32>
    "tpu.trace_stop"() : () -> ()
    %286 = vector.broadcast %26 : vector<2x1x8xf32> to vector<2x8x8xf32>
    %287 = arith.addf %285, %286 : vector<2x8x8xf32>
    %cst_88 = arith.constant dense<0xFF800000> : vector<2x8xf32>
    %288 = vector.multi_reduction <maximumf>, %287, %cst_88 [2] : vector<2x8x8xf32> to vector<2x8xf32>
    %289 = vector.shape_cast %288 : vector<2x8xf32> to vector<2x8x1xf32>
    %290 = vector.broadcast %289 : vector<2x8x1xf32> to vector<2x8x8xf32>
    %291 = arith.subf %287, %290 : vector<2x8x8xf32>
    %292 = math.exp %291 : vector<2x8x8xf32>
    %cst_89 = arith.constant dense<0.000000e+00> : vector<2x8xf32>
    %293 = vector.multi_reduction <add>, %292, %cst_89 [2] : vector<2x8x8xf32> to vector<2x8xf32>
    %294 = vector.shape_cast %293 : vector<2x8xf32> to vector<2x8x1xf32>
    %295 = tpu.reciprocal %294 {approx = true} : vector<2x8x1xf32> -> vector<2x8x1xf32>
    %296 = vector.broadcast %295 : vector<2x8x1xf32> to vector<2x8x8xf32>
    %297 = arith.mulf %292, %296 : vector<2x8x8xf32>
    %298 = arith.truncf %297 : vector<2x8x8xf32> to vector<2x8x8xbf16>
    %299 = arith.truncf %282 : vector<2x8x8xf32> to vector<2x8x8xbf16>
    "tpu.trace_start"() <{level = 10 : i32, message = "bqk,bkd->bqd"}> : () -> ()
    %cst_90 = arith.constant dense<0.000000e+00> : vector<2x8x8xf32>
    %300 = tpu.matmul %298, %299, %cst_90 {dimension_numbers = #tpu.dot_dimension_numbers<[2], [1], [1], [2], [0, 0, 0, 1, 1, 2], [0], [0]>} : vector<2x8x8xbf16>, vector<2x8x8xbf16>, vector<2x8x8xf32> -> vector<2x8x8xf32>
    "tpu.trace_stop"() : () -> ()
    %301 = vector.shape_cast %300 : vector<2x8x8xf32> to vector<16x8xf32>
    %302 = vector.extract_strided_slice %251 {offsets = [0, 16], sizes = [16, 8], strides = [1, 1]} : vector<16x96xf32> to vector<16x8xf32>
    %303 = vector.shape_cast %302 : vector<16x8xf32> to vector<2x8x8xf32>
    %304 = vector.extract_strided_slice %251 {offsets = [0, 48], sizes = [16, 8], strides = [1, 1]} : vector<16x96xf32> to vector<16x8xf32>
    %305 = vector.shape_cast %304 : vector<16x8xf32> to vector<2x8x8xf32>
    %306 = vector.extract_strided_slice %251 {offsets = [0, 80], sizes = [16, 8], strides = [1, 1]} : vector<16x96xf32> to vector<16x8xf32>
    %307 = vector.shape_cast %306 : vector<16x8xf32> to vector<2x8x8xf32>
    %308 = arith.truncf %303 : vector<2x8x8xf32> to vector<2x8x8xbf16>
    %309 = arith.truncf %305 : vector<2x8x8xf32> to vector<2x8x8xbf16>
    "tpu.trace_start"() <{level = 10 : i32, message = "bqd,bkd->bqk"}> : () -> ()
    %cst_91 = arith.constant dense<0.000000e+00> : vector<2x8x8xf32>
    %310 = tpu.matmul %308, %309, %cst_91 {dimension_numbers = #tpu.dot_dimension_numbers<[2], [2], [1], [1], [0, 0, 0, 1, 1, 1], [0], [0]>} : vector<2x8x8xbf16>, vector<2x8x8xbf16>, vector<2x8x8xf32> -> vector<2x8x8xf32>
    "tpu.trace_stop"() : () -> ()
    %311 = vector.broadcast %26 : vector<2x1x8xf32> to vector<2x8x8xf32>
    %312 = arith.addf %310, %311 : vector<2x8x8xf32>
    %cst_92 = arith.constant dense<0xFF800000> : vector<2x8xf32>
    %313 = vector.multi_reduction <maximumf>, %312, %cst_92 [2] : vector<2x8x8xf32> to vector<2x8xf32>
    %314 = vector.shape_cast %313 : vector<2x8xf32> to vector<2x8x1xf32>
    %315 = vector.broadcast %314 : vector<2x8x1xf32> to vector<2x8x8xf32>
    %316 = arith.subf %312, %315 : vector<2x8x8xf32>
    %317 = math.exp %316 : vector<2x8x8xf32>
    %cst_93 = arith.constant dense<0.000000e+00> : vector<2x8xf32>
    %318 = vector.multi_reduction <add>, %317, %cst_93 [2] : vector<2x8x8xf32> to vector<2x8xf32>
    %319 = vector.shape_cast %318 : vector<2x8xf32> to vector<2x8x1xf32>
    %320 = tpu.reciprocal %319 {approx = true} : vector<2x8x1xf32> -> vector<2x8x1xf32>
    %321 = vector.broadcast %320 : vector<2x8x1xf32> to vector<2x8x8xf32>
    %322 = arith.mulf %317, %321 : vector<2x8x8xf32>
    %323 = arith.truncf %322 : vector<2x8x8xf32> to vector<2x8x8xbf16>
    %324 = arith.truncf %307 : vector<2x8x8xf32> to vector<2x8x8xbf16>
    "tpu.trace_start"() <{level = 10 : i32, message = "bqk,bkd->bqd"}> : () -> ()
    %cst_94 = arith.constant dense<0.000000e+00> : vector<2x8x8xf32>
    %325 = tpu.matmul %323, %324, %cst_94 {dimension_numbers = #tpu.dot_dimension_numbers<[2], [1], [1], [2], [0, 0, 0, 1, 1, 2], [0], [0]>} : vector<2x8x8xbf16>, vector<2x8x8xbf16>, vector<2x8x8xf32> -> vector<2x8x8xf32>
    "tpu.trace_stop"() : () -> ()
    %326 = vector.shape_cast %325 : vector<2x8x8xf32> to vector<16x8xf32>
    %327 = vector.extract_strided_slice %251 {offsets = [0, 24], sizes = [16, 8], strides = [1, 1]} : vector<16x96xf32> to vector<16x8xf32>
    %328 = vector.shape_cast %327 : vector<16x8xf32> to vector<2x8x8xf32>
    %329 = vector.extract_strided_slice %251 {offsets = [0, 56], sizes = [16, 8], strides = [1, 1]} : vector<16x96xf32> to vector<16x8xf32>
    %330 = vector.shape_cast %329 : vector<16x8xf32> to vector<2x8x8xf32>
    %331 = vector.extract_strided_slice %251 {offsets = [0, 88], sizes = [16, 8], strides = [1, 1]} : vector<16x96xf32> to vector<16x8xf32>
    %332 = vector.shape_cast %331 : vector<16x8xf32> to vector<2x8x8xf32>
    %333 = arith.truncf %328 : vector<2x8x8xf32> to vector<2x8x8xbf16>
    %334 = arith.truncf %330 : vector<2x8x8xf32> to vector<2x8x8xbf16>
    "tpu.trace_start"() <{level = 10 : i32, message = "bqd,bkd->bqk"}> : () -> ()
    %cst_95 = arith.constant dense<0.000000e+00> : vector<2x8x8xf32>
    %335 = tpu.matmul %333, %334, %cst_95 {dimension_numbers = #tpu.dot_dimension_numbers<[2], [2], [1], [1], [0, 0, 0, 1, 1, 1], [0], [0]>} : vector<2x8x8xbf16>, vector<2x8x8xbf16>, vector<2x8x8xf32> -> vector<2x8x8xf32>
    "tpu.trace_stop"() : () -> ()
    %336 = vector.broadcast %26 : vector<2x1x8xf32> to vector<2x8x8xf32>
    %337 = arith.addf %335, %336 : vector<2x8x8xf32>
    %cst_96 = arith.constant dense<0xFF800000> : vector<2x8xf32>
    %338 = vector.multi_reduction <maximumf>, %337, %cst_96 [2] : vector<2x8x8xf32> to vector<2x8xf32>
    %339 = vector.shape_cast %338 : vector<2x8xf32> to vector<2x8x1xf32>
    %340 = vector.broadcast %339 : vector<2x8x1xf32> to vector<2x8x8xf32>
    %341 = arith.subf %337, %340 : vector<2x8x8xf32>
    %342 = math.exp %341 : vector<2x8x8xf32>
    %cst_97 = arith.constant dense<0.000000e+00> : vector<2x8xf32>
    %343 = vector.multi_reduction <add>, %342, %cst_97 [2] : vector<2x8x8xf32> to vector<2x8xf32>
    %344 = vector.shape_cast %343 : vector<2x8xf32> to vector<2x8x1xf32>
    %345 = tpu.reciprocal %344 {approx = true} : vector<2x8x1xf32> -> vector<2x8x1xf32>
    %346 = vector.broadcast %345 : vector<2x8x1xf32> to vector<2x8x8xf32>
    %347 = arith.mulf %342, %346 : vector<2x8x8xf32>
    %348 = arith.truncf %347 : vector<2x8x8xf32> to vector<2x8x8xbf16>
    %349 = arith.truncf %332 : vector<2x8x8xf32> to vector<2x8x8xbf16>
    "tpu.trace_start"() <{level = 10 : i32, message = "bqk,bkd->bqd"}> : () -> ()
    %cst_98 = arith.constant dense<0.000000e+00> : vector<2x8x8xf32>
    %350 = tpu.matmul %348, %349, %cst_98 {dimension_numbers = #tpu.dot_dimension_numbers<[2], [1], [1], [2], [0, 0, 0, 1, 1, 2], [0], [0]>} : vector<2x8x8xbf16>, vector<2x8x8xbf16>, vector<2x8x8xf32> -> vector<2x8x8xf32>
    "tpu.trace_stop"() : () -> ()
    %351 = vector.shape_cast %350 : vector<2x8x8xf32> to vector<16x8xf32>
    %352 = tpu.concatenate %276, %301, %326, %351 in 1 : vector<16x8xf32>, vector<16x8xf32>, vector<16x8xf32>, vector<16x8xf32> -> vector<16x32xf32>
    %353 = arith.truncf %352 : vector<16x32xf32> to vector<16x32xbf16>
    %354 = arith.index_cast %c1_i32 : i32 to index
    %c0_99 = arith.constant 0 : index
    %c0_100 = arith.constant 0 : index
    %355 = vector.load %arg6[%354, %c0_99, %c0_100] : memref<2x32x32xbf16, #tpu.memory_space<vmem>>, vector<1x32x32xbf16>
    %356 = vector.shape_cast %355 : vector<1x32x32xbf16> to vector<32x32xbf16>
    %cst_101 = arith.constant dense<0.000000e+00> : vector<16x32xf32>
    %357 = tpu.matmul %353, %356, %cst_101 {dimension_numbers = #tpu.dot_dimension_numbers<[1], [0], [0], [1], [0, 0, 1, 1], [], []>} : vector<16x32xbf16>, vector<32x32xbf16>, vector<16x32xf32> -> vector<16x32xf32>
    %358 = arith.index_cast %c1_i32 : i32 to index
    %c0_102 = arith.constant 0 : index
    %c0_103 = arith.constant 0 : index
    %359 = vector.load %arg7[%358, %c0_102, %c0_103] : memref<2x1x32xf32, #tpu.memory_space<vmem>>, vector<1x1x32xf32>
    %360 = vector.shape_cast %359 : vector<1x1x32xf32> to vector<1x32xf32>
    %361 = vector.broadcast %360 : vector<1x32xf32> to vector<16x32xf32>
    %362 = arith.addf %357, %361 : vector<16x32xf32>
    %363 = arith.addf %241, %362 : vector<16x32xf32>
    %364 = arith.index_cast %c1_i32 : i32 to index
    %c0_104 = arith.constant 0 : index
    %c0_105 = arith.constant 0 : index
    %365 = vector.load %arg8[%364, %c0_104, %c0_105] : memref<2x1x32xf32, #tpu.memory_space<vmem>>, vector<1x1x32xf32>
    %366 = vector.shape_cast %365 : vector<1x1x32xf32> to vector<1x32xf32>
    %367 = arith.index_cast %c1_i32 : i32 to index
    %c0_106 = arith.constant 0 : index
    %c0_107 = arith.constant 0 : index
    %368 = vector.load %arg9[%367, %c0_106, %c0_107] : memref<2x1x32xf32, #tpu.memory_space<vmem>>, vector<1x1x32xf32>
    %369 = vector.shape_cast %368 : vector<1x1x32xf32> to vector<1x32xf32>
    %cst_108 = arith.constant dense<0.000000e+00> : vector<16xf32>
    %370 = vector.multi_reduction <add>, %363, %cst_108 [1] : vector<16x32xf32> to vector<16xf32>
    %371 = vector.shape_cast %370 : vector<16xf32> to vector<16x1xf32>
    %cst_109 = arith.constant 3.200000e+01 : f32
    %372 = vector.broadcast %cst_109 : f32 to vector<16x1xf32>
    %373 = arith.divf %371, %372 : vector<16x1xf32>
    %374 = vector.broadcast %373 : vector<16x1xf32> to vector<16x32xf32>
    %375 = arith.subf %363, %374 : vector<16x32xf32>
    %376 = arith.mulf %375, %375 : vector<16x32xf32>
    %cst_110 = arith.constant dense<0.000000e+00> : vector<16xf32>
    %377 = vector.multi_reduction <add>, %376, %cst_110 [1] : vector<16x32xf32> to vector<16xf32>
    %378 = vector.shape_cast %377 : vector<16xf32> to vector<16x1xf32>
    %cst_111 = arith.constant 3.200000e+01 : f32
    %379 = vector.broadcast %cst_111 : f32 to vector<16x1xf32>
    %380 = arith.divf %378, %379 : vector<16x1xf32>
    %381 = vector.broadcast %373 : vector<16x1xf32> to vector<16x32xf32>
    %382 = arith.subf %363, %381 : vector<16x32xf32>
    %cst_112 = arith.constant 9.99999996E-13 : f32
    %383 = vector.broadcast %cst_112 : f32 to vector<16x1xf32>
    %384 = arith.addf %380, %383 : vector<16x1xf32>
    %385 = math.rsqrt %384 : vector<16x1xf32>
    %386 = vector.broadcast %385 : vector<16x1xf32> to vector<16x32xf32>
    %387 = arith.mulf %382, %386 : vector<16x32xf32>
    %388 = vector.broadcast %366 : vector<1x32xf32> to vector<16x32xf32>
    %389 = arith.mulf %387, %388 : vector<16x32xf32>
    %390 = vector.broadcast %369 : vector<1x32xf32> to vector<16x32xf32>
    %391 = arith.addf %389, %390 : vector<16x32xf32>
    %392 = arith.truncf %391 : vector<16x32xf32> to vector<16x32xbf16>
    %393 = arith.index_cast %c1_i32 : i32 to index
    %c0_113 = arith.constant 0 : index
    %c0_114 = arith.constant 0 : index
    %394 = vector.load %arg10[%393, %c0_113, %c0_114] : memref<2x32x64xbf16, #tpu.memory_space<vmem>>, vector<1x32x64xbf16>
    %395 = vector.shape_cast %394 : vector<1x32x64xbf16> to vector<32x64xbf16>
    %cst_115 = arith.constant dense<0.000000e+00> : vector<16x64xf32>
    %396 = tpu.matmul %392, %395, %cst_115 {dimension_numbers = #tpu.dot_dimension_numbers<[1], [0], [0], [1], [0, 0, 1, 1], [], []>} : vector<16x32xbf16>, vector<32x64xbf16>, vector<16x64xf32> -> vector<16x64xf32>
    %397 = arith.index_cast %c1_i32 : i32 to index
    %c0_116 = arith.constant 0 : index
    %c0_117 = arith.constant 0 : index
    %398 = vector.load %arg11[%397, %c0_116, %c0_117] : memref<2x1x64xf32, #tpu.memory_space<vmem>>, vector<1x1x64xf32>
    %399 = vector.shape_cast %398 : vector<1x1x64xf32> to vector<1x64xf32>
    %400 = vector.broadcast %399 : vector<1x64xf32> to vector<16x64xf32>
    %401 = arith.addf %396, %400 : vector<16x64xf32>
    %402 = arith.mulf %401, %401 : vector<16x64xf32>
    %403 = arith.mulf %401, %402 : vector<16x64xf32>
    %cst_118 = arith.constant 4.471500e-02 : f32
    %404 = vector.broadcast %cst_118 : f32 to vector<16x64xf32>
    %405 = arith.mulf %404, %403 : vector<16x64xf32>
    %406 = arith.addf %401, %405 : vector<16x64xf32>
    %cst_119 = arith.constant 0.797884583 : f32
    %407 = vector.broadcast %cst_119 : f32 to vector<16x64xf32>
    %408 = arith.mulf %407, %406 : vector<16x64xf32>
    %409 = math.tanh %408 : vector<16x64xf32>
    %cst_120 = arith.constant 1.000000e+00 : f32
    %410 = vector.broadcast %cst_120 : f32 to vector<16x64xf32>
    %411 = arith.addf %410, %409 : vector<16x64xf32>
    %cst_121 = arith.constant 5.000000e-01 : f32
    %412 = vector.broadcast %cst_121 : f32 to vector<16x64xf32>
    %413 = arith.mulf %412, %411 : vector<16x64xf32>
    %414 = arith.mulf %401, %413 : vector<16x64xf32>
    %415 = arith.truncf %414 : vector<16x64xf32> to vector<16x64xbf16>
    %416 = arith.index_cast %c1_i32 : i32 to index
    %c0_122 = arith.constant 0 : index
    %c0_123 = arith.constant 0 : index
    %417 = vector.load %arg12[%416, %c0_122, %c0_123] : memref<2x64x32xbf16, #tpu.memory_space<vmem>>, vector<1x64x32xbf16>
    %418 = vector.shape_cast %417 : vector<1x64x32xbf16> to vector<64x32xbf16>
    %cst_124 = arith.constant dense<0.000000e+00> : vector<16x32xf32>
    %419 = tpu.matmul %415, %418, %cst_124 {dimension_numbers = #tpu.dot_dimension_numbers<[1], [0], [0], [1], [0, 0, 1, 1], [], []>} : vector<16x64xbf16>, vector<64x32xbf16>, vector<16x32xf32> -> vector<16x32xf32>
    %420 = arith.index_cast %c1_i32 : i32 to index
    %c0_125 = arith.constant 0 : index
    %c0_126 = arith.constant 0 : index
    %421 = vector.load %arg13[%420, %c0_125, %c0_126] : memref<2x1x32xf32, #tpu.memory_space<vmem>>, vector<1x1x32xf32>
    %422 = vector.shape_cast %421 : vector<1x1x32xf32> to vector<1x32xf32>
    %423 = vector.broadcast %422 : vector<1x32xf32> to vector<16x32xf32>
    %424 = arith.addf %419, %423 : vector<16x32xf32>
    %425 = arith.addf %391, %424 : vector<16x32xf32>
    %426 = arith.index_cast %c1_i32 : i32 to index
    %c0_127 = arith.constant 0 : index
    %c0_128 = arith.constant 0 : index
    %427 = vector.load %arg14[%426, %c0_127, %c0_128] : memref<2x1x32xf32, #tpu.memory_space<vmem>>, vector<1x1x32xf32>
    %428 = vector.shape_cast %427 : vector<1x1x32xf32> to vector<1x32xf32>
    %429 = arith.index_cast %c1_i32 : i32 to index
    %c0_129 = arith.constant 0 : index
    %c0_130 = arith.constant 0 : index
    %430 = vector.load %arg15[%429, %c0_129, %c0_130] : memref<2x1x32xf32, #tpu.memory_space<vmem>>, vector<1x1x32xf32>
    %431 = vector.shape_cast %430 : vector<1x1x32xf32> to vector<1x32xf32>
    %cst_131 = arith.constant dense<0.000000e+00> : vector<16xf32>
    %432 = vector.multi_reduction <add>, %425, %cst_131 [1] : vector<16x32xf32> to vector<16xf32>
    %433 = vector.shape_cast %432 : vector<16xf32> to vector<16x1xf32>
    %cst_132 = arith.constant 3.200000e+01 : f32
    %434 = vector.broadcast %cst_132 : f32 to vector<16x1xf32>
    %435 = arith.divf %433, %434 : vector<16x1xf32>
    %436 = vector.broadcast %435 : vector<16x1xf32> to vector<16x32xf32>
    %437 = arith.subf %425, %436 : vector<16x32xf32>
    %438 = arith.mulf %437, %437 : vector<16x32xf32>
    %cst_133 = arith.constant dense<0.000000e+00> : vector<16xf32>
    %439 = vector.multi_reduction <add>, %438, %cst_133 [1] : vector<16x32xf32> to vector<16xf32>
    %440 = vector.shape_cast %439 : vector<16xf32> to vector<16x1xf32>
    %cst_134 = arith.constant 3.200000e+01 : f32
    %441 = vector.broadcast %cst_134 : f32 to vector<16x1xf32>
    %442 = arith.divf %440, %441 : vector<16x1xf32>
    %443 = vector.broadcast %435 : vector<16x1xf32> to vector<16x32xf32>
    %444 = arith.subf %425, %443 : vector<16x32xf32>
    %cst_135 = arith.constant 9.99999996E-13 : f32
    %445 = vector.broadcast %cst_135 : f32 to vector<16x1xf32>
    %446 = arith.addf %442, %445 : vector<16x1xf32>
    %447 = math.rsqrt %446 : vector<16x1xf32>
    %448 = vector.broadcast %447 : vector<16x1xf32> to vector<16x32xf32>
    %449 = arith.mulf %444, %448 : vector<16x32xf32>
    %450 = vector.broadcast %428 : vector<1x32xf32> to vector<16x32xf32>
    %451 = arith.mulf %449, %450 : vector<16x32xf32>
    %452 = vector.broadcast %431 : vector<1x32xf32> to vector<16x32xf32>
    %453 = arith.addf %451, %452 : vector<16x32xf32>
    %c0_136 = arith.constant 0 : index
    %c0_137 = arith.constant 0 : index
    %454 = vector.load %arg21[%c0_136, %c0_137] : memref<16x32xf32, #tpu.memory_space<vmem>>, vector<16x32xf32>
    tpu.vector_store %arg21[%c0_136, %c0_137], %453 {strides = array<i32>} : memref<16x32xf32, #tpu.memory_space<vmem>>, vector<16x32xf32>,
    %c2_i32 = arith.constant 2 : i32
    %c0_138 = arith.constant 0 : index
    %c0_139 = arith.constant 0 : index
    %455 = tpu.strided_load %arg21[%c0_138, %c0_139] {strides = array<i32: 8, 1>} : memref<16x32xf32, #tpu.memory_space<vmem>>, vector<2x32xf32>
    %c0_140 = arith.constant 0 : index
    %c0_141 = arith.constant 0 : index
    %456 = vector.load %arg16[%c0_140, %c0_141] : memref<32x32xf32, #tpu.memory_space<vmem>>, vector<32x32xf32>
    %cst_142 = arith.constant dense<0.000000e+00> : vector<2x32xf32>
    %457 = tpu.matmul %455, %456, %cst_142 {dimension_numbers = #tpu.dot_dimension_numbers<[1], [0], [0], [1], [0, 0, 1, 1], [], []>} : vector<2x32xf32>, vector<32x32xf32>, vector<2x32xf32> -> vector<2x32xf32>
    %c0_143 = arith.constant 0 : index
    %c0_144 = arith.constant 0 : index
    %458 = vector.load %arg17[%c0_143, %c0_144] : memref<1x32xf32, #tpu.memory_space<vmem>>, vector<1x32xf32>
    %459 = vector.broadcast %458 : vector<1x32xf32> to vector<2x32xf32>
    %460 = arith.addf %457, %459 : vector<2x32xf32>
    %461 = math.tanh %460 : vector<2x32xf32>
    %c0_145 = arith.constant 0 : index
    %c0_146 = arith.constant 0 : index
    %462 = vector.load %arg18[%c0_145, %c0_146] : memref<32x128xf32, #tpu.memory_space<vmem>>, vector<32x128xf32>
    %cst_147 = arith.constant dense<0.000000e+00> : vector<2x128xf32>
    %463 = tpu.matmul %461, %462, %cst_147 {dimension_numbers = #tpu.dot_dimension_numbers<[1], [0], [0], [1], [0, 0, 1, 1], [], []>} : vector<2x32xf32>, vector<32x128xf32>, vector<2x128xf32> -> vector<2x128xf32>
    %c0_148 = arith.constant 0 : index
    %c0_149 = arith.constant 0 : index
    %464 = vector.load %arg19[%c0_148, %c0_149] : memref<1x128xf32, #tpu.memory_space<vmem>>, vector<1x128xf32>
    %465 = vector.broadcast %464 : vector<1x128xf32> to vector<2x128xf32>
    %466 = arith.addf %463, %465 : vector<2x128xf32>
    %cst_150 = arith.constant 0.000000e+00 : f32
    %cst_151 = arith.constant 1.000000e+01 : f32
    %467 = vector.broadcast %cst_150 : f32 to vector<2x128xf32>
    %468 = arith.maximumf %467, %466 : vector<2x128xf32>
    %469 = vector.broadcast %cst_151 : f32 to vector<2x128xf32>
    %470 = arith.minimumf %469, %468 : vector<2x128xf32>
    %c0_152 = arith.constant 0 : index
    %c0_153 = arith.constant 0 : index
    %471 = vector.load %arg20[%c0_152, %c0_153] : memref<2x128xf32, #tpu.memory_space<vmem>>, vector<2x128xf32>
    tpu.vector_store %arg20[%c0_152, %c0_153], %470 {strides = array<i32>} : memref<2x128xf32, #tpu.memory_space<vmem>>, vector<2x128xf32>,
    return
  }
}

</mosaic_0001>

<llo_original>
// kernel: tpu_custom_call.1
$region0: #{tpu_custom_call.1}
  #allocation0 [shape = 'u32[]', space=smem, size = 0x4, offset = 0x4, fixed_abs, tag = 'smem constant byte address 0x4 - core index']
  #allocation1 [shape = 'u32[144,128]{1,0:T(1,128)}', space=vmem, size = 0x12000, scoped, tag = 'internal scratch']
  #allocation2 [shape = 'f32[16,32]{1,0:T(8,128)}', space=vmem, size = 0x2000, scoped, tag = 'scratch operand']
  %s0 = inlined_call_operand.hbm [shape: f32[16,32], index: 0, kind: input, shape index: {}]
  %s1 = inlined_call_operand.hbm [shape: f32[2,1,8], index: 1, kind: input, shape index: {}]
  %s2 = inlined_call_operand.hbm [shape: f32[1,32], index: 2, kind: input, shape index: {}]
  %s3 = inlined_call_operand.hbm [shape: f32[1,32], index: 3, kind: input, shape index: {}]
  %s4 = inlined_call_operand.vmem [shape: bf16[2,32,96], index: 4, kind: input, shape index: {}]
  %s5 = inlined_call_operand.hbm [shape: f32[2,1,96], index: 5, kind: input, shape index: {}]
  %s6 = inlined_call_operand.vmem [shape: bf16[2,32,32], index: 6, kind: input, shape index: {}]
  %s7 = inlined_call_operand.hbm [shape: f32[2,1,32], index: 7, kind: input, shape index: {}]
  %s8 = inlined_call_operand.hbm [shape: f32[2,1,32], index: 8, kind: input, shape index: {}]
  %s9 = inlined_call_operand.hbm [shape: f32[2,1,32], index: 9, kind: input, shape index: {}]
  %s10 = inlined_call_operand.vmem [shape: bf16[2,32,64], index: 10, kind: input, shape index: {}]
  %s11 = inlined_call_operand.hbm [shape: f32[2,1,64], index: 11, kind: input, shape index: {}]
  %s12 = inlined_call_operand.vmem [shape: bf16[2,64,32], index: 12, kind: input, shape index: {}]
  %s13 = inlined_call_operand.hbm [shape: f32[2,1,32], index: 13, kind: input, shape index: {}]
  %s14 = inlined_call_operand.hbm [shape: f32[2,1,32], index: 14, kind: input, shape index: {}]
  %s15 = inlined_call_operand.hbm [shape: f32[2,1,32], index: 15, kind: input, shape index: {}]
  %s16 = inlined_call_operand.hbm [shape: f32[32,32], index: 16, kind: input, shape index: {}]
  %s17 = inlined_call_operand.hbm [shape: f32[1,32], index: 17, kind: input, shape index: {}]
  %s18 = inlined_call_operand.vmem [shape: f32[32,128], index: 18, kind: input, shape index: {}]
  %s19 = inlined_call_operand.vmem [shape: f32[1,128], index: 19, kind: input, shape index: {}]
  %s20 = inlined_call_operand.hbm [shape: f32[2,128], index: 20, kind: output, shape index: {}]
  %s21 = sld [smem:[#allocation0]]
  $region146: #{tpu_custom_call.1} parent=0
    _
  %s23 = ssub.s32 1, %s21
  %s24 = scalar_select 0, %s23, %s21
  $region1: #{tpu_custom_call.1} parent=0
    #allocation3 [shape = 'u8[8192]{0}', space=vmem, size = 0x2000, scoped, tag = 'input window, operand 0, single buffered']
    #allocation4 [shape = 's32[1]{0}', space=sflag, size = 0x4, scoped, tag = 'scoped memory for tpu_custom_call.1']
    #allocation5 [shape = 's32[1]{0}', space=sflag, size = 0x4, scoped, tag = 'scoped memory for tpu_custom_call.1']
    #allocation6 [shape = 'u8[1024]{0}', space=vmem, size = 0x400, scoped, tag = 'input window, operand 1, single buffered']
    #allocation7 [shape = 's32[1]{0}', space=sflag, size = 0x4, scoped, tag = 'scoped memory for tpu_custom_call.1']
    #allocation8 [shape = 'u8[512]{0}', space=vmem, size = 0x400, scoped, tag = 'input window, operand 2, single buffered']
    #allocation9 [shape = 'u8[512]{0}', space=vmem, size = 0x400, scoped, tag = 'input window, operand 3, single buffered']
    #allocation10 [shape = 's32[1]{0}', space=sflag, size = 0x4, scoped, tag = 'scoped memory for tpu_custom_call.1']
    #allocation11 [shape = 'u8[1024]{0}', space=vmem, size = 0x400, scoped, tag = 'input window, operand 5, single buffered']
    #allocation12 [shape = 'u8[1024]{0}', space=vmem, size = 0x400, scoped, tag = 'input window, operand 7, single buffered']
    #allocation13 [shape = 's32[1]{0}', space=sflag, size = 0x4, scoped, tag = 'scoped memory for tpu_custom_call.1']
    #allocation14 [shape = 'u8[1024]{0}', space=vmem, size = 0x400, scoped, tag = 'input window, operand 8, single buffered']
    #allocation15 [shape = 'u8[1024]{0}', space=vmem, size = 0x400, scoped, tag = 'input window, operand 9, single buffered']
    #allocation16 [shape = 's32[1]{0}', space=sflag, size = 0x4, scoped, tag = 'scoped memory for tpu_custom_call.1']
    #allocation17 [shape = 'u8[1024]{0}', space=vmem, size = 0x400, scoped, tag = 'input window, operand 11, single buffered']
    #allocation18 [shape = 'u8[1024]{0}', space=vmem, size = 0x400, scoped, tag = 'input window, operand 13, single buffered']
    #allocation19 [shape = 's32[1]{0}', space=sflag, size = 0x4, scoped, tag = 'scoped memory for tpu_custom_call.1']
    #allocation20 [shape = 'u8[1024]{0}', space=vmem, size = 0x400, scoped, tag = 'input window, operand 14, single buffered']
    #allocation21 [shape = 'u8[1024]{0}', space=vmem, size = 0x400, scoped, tag = 'input window, operand 15, single buffered']
    #allocation22 [shape = 's32[1]{0}', space=sflag, size = 0x4, scoped, tag = 'scoped memory for tpu_custom_call.1']
    #allocation23 [shape = 'u8[16384]{0}', space=vmem, size = 0x4000, scoped, tag = 'input window, operand 16, single buffered']
    #allocation24 [shape = 'u8[512]{0}', space=vmem, size = 0x400, scoped, tag = 'input window, operand 17, single buffered']
    #allocation25 [shape = 's32[1]{0}', space=sflag, size = 0x4, scoped, tag = 'scoped memory for tpu_custom_call.1']
    #allocation26 [shape = 'u8[1024]{0}', space=vmem, size = 0x400, scoped, tag = 'output window, operand 0, single buffered']
    %25 = vsyncpa [#allocation4], 0
    %26 = vsyncpa [#allocation7], 0
    %27 = vsyncpa [#allocation10], 0
    %28 = vsyncpa [#allocation13], 0
    %29 = vsyncpa [#allocation16], 0
    %30 = vsyncpa [#allocation19], 0
    %31 = vsyncpa [#allocation22], 0
    %32 = vsyncpa [#allocation25], 0
    %33 = vsyncpa [#allocation5], 0
    // Predicated region
    $region2: #{tpu_custom_call.1} parent=1 // pred_check
      _
    $region3: #{tpu_custom_call.1} parent=1 // pred_check_branch
      %35 = sbr.rel (0) target = $region5
    $region4: #{tpu_custom_call.1} parent=1 // pred_region
      %s37 = ssub.s32 256, 256
      %38 = vsyncadd [#allocation4], %s37
      %s39 = sshll.u32 [#allocation3], 4
      %s40 = int_to_ptr.vmem [resolvable:$true] %s39
      %45 = dma.hbm_to_vmem [thread:$0]  %s0, 256, %s40, [#allocation4], 128, 128, 8
    $region5: #{tpu_custom_call.1} parent=1 // pred_fallthru
      _
    // Predicated region
    $region6: #{tpu_custom_call.1} parent=1 // pred_check
      _
    $region7: #{tpu_custom_call.1} parent=1 // pred_check_branch
      %47 = sbr.rel (0) target = $region9
    $region8: #{tpu_custom_call.1} parent=1 // pred_region
      %s49 = ssub.s32 32, 32
      %50 = vsyncadd [#allocation7], %s49
      %s51 = sshll.u32 [#allocation6], 4
      %s52 = int_to_ptr.vmem [resolvable:$true] %s51
      %57 = dma.hbm_to_vmem [thread:$0]  %s1, 32, %s52, [#allocation7], 16, 16, 1
    $region9: #{tpu_custom_call.1} parent=1 // pred_fallthru
      _
    // Predicated region
    $region10: #{tpu_custom_call.1} parent=1 // pred_check
      _
    $region11: #{tpu_custom_call.1} parent=1 // pred_check_branch
      %59 = sbr.rel (0) target = $region13
    $region12: #{tpu_custom_call.1} parent=1 // pred_region
      %s61 = ssub.s32 16, 16
      %62 = vsyncadd [#allocation7], %s61
      %s64 = sshll.u32 [#allocation8], 4
      %s65 = int_to_ptr.vmem [resolvable:$true] %s64
      %67 = dma.hbm_to_vmem [thread:$0]  %s2, 16, %s65, [#allocation7]
    $region13: #{tpu_custom_call.1} parent=1 // pred_fallthru
      _
    // Predicated region
    $region14: #{tpu_custom_call.1} parent=1 // pred_check
      _
    $region15: #{tpu_custom_call.1} parent=1 // pred_check_branch
      %69 = sbr.rel (0) target = $region17
    $region16: #{tpu_custom_call.1} parent=1 // pred_region
      %s71 = ssub.s32 16, 16
      %72 = vsyncadd [#allocation10], %s71
      %s74 = sshll.u32 [#allocation9], 4
      %s75 = int_to_ptr.vmem [resolvable:$true] %s74
      %77 = dma.hbm_to_vmem [thread:$0]  %s3, 16, %s75, [#allocation10]
    $region17: #{tpu_custom_call.1} parent=1 // pred_fallthru
      _
    // Predicated region
    $region18: #{tpu_custom_call.1} parent=1 // pred_check
      _
    $region19: #{tpu_custom_call.1} parent=1 // pred_check_branch
      %79 = sbr.rel (0) target = $region21
    $region20: #{tpu_custom_call.1} parent=1 // pred_region
      _
    $region21: #{tpu_custom_call.1} parent=1 // pred_fallthru
      _
    // Predicated region
    $region22: #{tpu_custom_call.1} parent=1 // pred_check
      _
    $region23: #{tpu_custom_call.1} parent=1 // pred_check_branch
      %81 = sbr.rel (0) target = $region25
    $region24: #{tpu_custom_call.1} parent=1 // pred_region
      %s83 = ssub.s32 32, 32
      %84 = vsyncadd [#allocation10], %s83
      %s85 = sshll.u32 [#allocation11], 4
      %s86 = int_to_ptr.vmem [resolvable:$true] %s85
      %91 = dma.hbm_to_vmem [thread:$0]  %s5, 32, %s86, [#allocation10], 16, 16, 1
    $region25: #{tpu_custom_call.1} parent=1 // pred_fallthru
      _
    // Predicated region
    $region26: #{tpu_custom_call.1} parent=1 // pred_check
      _
    $region27: #{tpu_custom_call.1} parent=1 // pred_check_branch
      %93 = sbr.rel (0) target = $region29
    $region28: #{tpu_custom_call.1} parent=1 // pred_region
      _
    $region29: #{tpu_custom_call.1} parent=1 // pred_fallthru
      _
    // Predicated region
    $region30: #{tpu_custom_call.1} parent=1 // pred_check
      _
    $region31: #{tpu_custom_call.1} parent=1 // pred_check_branch
      %95 = sbr.rel (0) target = $region33
    $region32: #{tpu_custom_call.1} parent=1 // pred_region
      %s97 = ssub.s32 32, 32
      %98 = vsyncadd [#allocation13], %s97
      %s99 = sshll.u32 [#allocation12], 4
      %s100 = int_to_ptr.vmem [resolvable:$true] %s99
      %105 = dma.hbm_to_vmem [thread:$0]  %s7, 32, %s100, [#allocation13], 16, 16, 1
    $region33: #{tpu_custom_call.1} parent=1 // pred_fallthru
      _
    // Predicated region
    $region34: #{tpu_custom_call.1} parent=1 // pred_check
      _
    $region35: #{tpu_custom_call.1} parent=1 // pred_check_branch
      %107 = sbr.rel (0) target = $region37
    $region36: #{tpu_custom_call.1} parent=1 // pred_region
      %s109 = ssub.s32 32, 32
      %110 = vsyncadd [#allocation13], %s109
      %s111 = sshll.u32 [#allocation14], 4
      %s112 = int_to_ptr.vmem [resolvable:$true] %s111
      %117 = dma.hbm_to_vmem [thread:$0]  %s8, 32, %s112, [#allocation13], 16, 16, 1
    $region37: #{tpu_custom_call.1} parent=1 // pred_fallthru
      _
    // Predicated region
    $region38: #{tpu_custom_call.1} parent=1 // pred_check
      _
    $region39: #{tpu_custom_call.1} parent=1 // pred_check_branch
      %119 = sbr.rel (0) target = $region41
    $region40: #{tpu_custom_call.1} parent=1 // pred_region
      %s121 = ssub.s32 32, 32
      %122 = vsyncadd [#allocation16], %s121
      %s123 = sshll.u32 [#allocation15], 4
      %s124 = int_to_ptr.vmem [resolvable:$true] %s123
      %129 = dma.hbm_to_vmem [thread:$0]  %s9, 32, %s124, [#allocation16], 16, 16, 1
    $region41: #{tpu_custom_call.1} parent=1 // pred_fallthru
      _
    // Predicated region
    $region42: #{tpu_custom_call.1} parent=1 // pred_check
      _
    $region43: #{tpu_custom_call.1} parent=1 // pred_check_branch
      %131 = sbr.rel (0) target = $region45
    $region44: #{tpu_custom_call.1} parent=1 // pred_region
      _
    $region45: #{tpu_custom_call.1} parent=1 // pred_fallthru
      _
    // Predicated region
    $region46: #{tpu_custom_call.1} parent=1 // pred_check
      _
    $region47: #{tpu_custom_call.1} parent=1 // pred_check_branch
      %133 = sbr.rel (0) target = $region49
    $region48: #{tpu_custom_call.1} parent=1 // pred_region
      %s135 = ssub.s32 32, 32
      %136 = vsyncadd [#allocation16], %s135
      %s137 = sshll.u32 [#allocation17], 4
      %s138 = int_to_ptr.vmem [resolvable:$true] %s137
      %143 = dma.hbm_to_vmem [thread:$0]  %s11, 32, %s138, [#allocation16], 16, 16, 1
    $region49: #{tpu_custom_call.1} parent=1 // pred_fallthru
      _
    // Predicated region
    $region50: #{tpu_custom_call.1} parent=1 // pred_check
      _
    $region51: #{tpu_custom_call.1} parent=1 // pred_check_branch
      %145 = sbr.rel (0) target = $region53
    $region52: #{tpu_custom_call.1} parent=1 // pred_region
      _
    $region53: #{tpu_custom_call.1} parent=1 // pred_fallthru
      _
    // Predicated region
    $region54: #{tpu_custom_call.1} parent=1 // pred_check
      _
    $region55: #{tpu_custom_call.1} parent=1 // pred_check_branch
      %147 = sbr.rel (0) target = $region57
    $region56: #{tpu_custom_call.1} parent=1 // pred_region
      %s149 = ssub.s32 32, 32
      %150 = vsyncadd [#allocation19], %s149
      %s151 = sshll.u32 [#allocation18], 4
      %s152 = int_to_ptr.vmem [resolvable:$true] %s151
      %157 = dma.hbm_to_vmem [thread:$0]  %s13, 32, %s152, [#allocation19], 16, 16, 1
    $region57: #{tpu_custom_call.1} parent=1 // pred_fallthru
      _
    // Predicated region
    $region58: #{tpu_custom_call.1} parent=1 // pred_check
      _
    $region59: #{tpu_custom_call.1} parent=1 // pred_check_branch
      %159 = sbr.rel (0) target = $region61
    $region60: #{tpu_custom_call.1} parent=1 // pred_region
      %s161 = ssub.s32 32, 32
      %162 = vsyncadd [#allocation19], %s161
      %s163 = sshll.u32 [#allocation20], 4
      %s164 = int_to_ptr.vmem [resolvable:$true] %s163
      %169 = dma.hbm_to_vmem [thread:$0]  %s14, 32, %s164, [#allocation19], 16, 16, 1
    $region61: #{tpu_custom_call.1} parent=1 // pred_fallthru
      _
    // Predicated region
    $region62: #{tpu_custom_call.1} parent=1 // pred_check
      _
    $region63: #{tpu_custom_call.1} parent=1 // pred_check_branch
      %171 = sbr.rel (0) target = $region65
    $region64: #{tpu_custom_call.1} parent=1 // pred_region
      %s173 = ssub.s32 32, 32
      %174 = vsyncadd [#allocation22], %s173
      %s175 = sshll.u32 [#allocation21], 4
      %s176 = int_to_ptr.vmem [resolvable:$true] %s175
      %181 = dma.hbm_to_vmem [thread:$0]  %s15, 32, %s176, [#allocation22], 16, 16, 1
    $region65: #{tpu_custom_call.1} parent=1 // pred_fallthru
      _
    // Predicated region
    $region66: #{tpu_custom_call.1} parent=1 // pred_check
      _
    $region67: #{tpu_custom_call.1} parent=1 // pred_check_branch
      %183 = sbr.rel (0) target = $region69
    $region68: #{tpu_custom_call.1} parent=1 // pred_region
      %s185 = ssub.s32 512, 512
      %186 = vsyncadd [#allocation22], %s185
      %s187 = sshll.u32 [#allocation23], 4
      %s188 = int_to_ptr.vmem [resolvable:$true] %s187
      %193 = dma.hbm_to_vmem [thread:$0]  %s16, 512, %s188, [#allocation22], 128, 128, 8
    $region69: #{tpu_custom_call.1} parent=1 // pred_fallthru
      _
    // Predicated region
    $region70: #{tpu_custom_call.1} parent=1 // pred_check
      _
    $region71: #{tpu_custom_call.1} parent=1 // pred_check_branch
      %195 = sbr.rel (0) target = $region73
    $region72: #{tpu_custom_call.1} parent=1 // pred_region
      %s197 = ssub.s32 16, 16
      %198 = vsyncadd [#allocation25], %s197
      %s200 = sshll.u32 [#allocation24], 4
      %s201 = int_to_ptr.vmem [resolvable:$true] %s200
      %203 = dma.hbm_to_vmem [thread:$0]  %s17, 16, %s201, [#allocation25]
    $region73: #{tpu_custom_call.1} parent=1 // pred_fallthru
      _
    // Predicated region
    $region74: #{tpu_custom_call.1} parent=1 // pred_check
      _
    $region75: #{tpu_custom_call.1} parent=1 // pred_check_branch
      %205 = sbr.rel (0) target = $region77
    $region76: #{tpu_custom_call.1} parent=1 // pred_region
      _
    $region77: #{tpu_custom_call.1} parent=1 // pred_fallthru
      _
    // Predicated region
    $region78: #{tpu_custom_call.1} parent=1 // pred_check
      _
    $region79: #{tpu_custom_call.1} parent=1 // pred_check_branch
      %207 = sbr.rel (0) target = $region81
    $region80: #{tpu_custom_call.1} parent=1 // pred_region
      _
    $region81: #{tpu_custom_call.1} parent=1 // pred_fallthru
      _
    // Predicated region
    $region82: #{tpu_custom_call.1} parent=1 // pred_check
      _
    $region83: #{tpu_custom_call.1} parent=1 // pred_check_branch
      %209 = sbr.rel (0) target = $region85
    $region84: #{tpu_custom_call.1} parent=1 // pred_region
      %210 = dma.done [#allocation4], 256
    $region85: #{tpu_custom_call.1} parent=1 // pred_fallthru
      _
    // Predicated region
    $region86: #{tpu_custom_call.1} parent=1 // pred_check
      _
    $region87: #{tpu_custom_call.1} parent=1 // pred_check_branch
      %212 = sbr.rel (0) target = $region89
    $region88: #{tpu_custom_call.1} parent=1 // pred_region
      %213 = dma.done [#allocation7], 32
    $region89: #{tpu_custom_call.1} parent=1 // pred_fallthru
      _
    // Predicated region
    $region90: #{tpu_custom_call.1} parent=1 // pred_check
      _
    $region91: #{tpu_custom_call.1} parent=1 // pred_check_branch
      %215 = sbr.rel (0) target = $region93
    $region92: #{tpu_custom_call.1} parent=1 // pred_region
      %216 = dma.done [#allocation7], 16
    $region93: #{tpu_custom_call.1} parent=1 // pred_fallthru
      _
    // Predicated region
    $region94: #{tpu_custom_call.1} parent=1 // pred_check
      _
    $region95: #{tpu_custom_call.1} parent=1 // pred_check_branch
      %218 = sbr.rel (0) target = $region97
    $region96: #{tpu_custom_call.1} parent=1 // pred_region
      %219 = dma.done [#allocation10], 16
    $region97: #{tpu_custom_call.1} parent=1 // pred_fallthru
      _
    // Predicated region
    $region98: #{tpu_custom_call.1} parent=1 // pred_check
      _
    $region99: #{tpu_custom_call.1} parent=1 // pred_check_branch
      %221 = sbr.rel (0) target = $region101
    $region100: #{tpu_custom_call.1} parent=1 // pred_region
      %222 = dma.done [#allocation10], 32
    $region101: #{tpu_custom_call.1} parent=1 // pred_fallthru
      _
    // Predicated region
    $region102: #{tpu_custom_call.1} parent=1 // pred_check
      _
    $region103: #{tpu_custom_call.1} parent=1 // pred_check_branch
      %224 = sbr.rel (0) target = $region105
    $region104: #{tpu_custom_call.1} parent=1 // pred_region
      %225 = dma.done [#allocation13], 32
    $region105: #{tpu_custom_call.1} parent=1 // pred_fallthru
      _
    // Predicated region
    $region106: #{tpu_custom_call.1} parent=1 // pred_check
      _
    $region107: #{tpu_custom_call.1} parent=1 // pred_check_branch
      %227 = sbr.rel (0) target = $region109
    $region108: #{tpu_custom_call.1} parent=1 // pred_region
      %228 = dma.done [#allocation13], 32
    $region109: #{tpu_custom_call.1} parent=1 // pred_fallthru
      _
    // Predicated region
    $region110: #{tpu_custom_call.1} parent=1 // pred_check
      _
    $region111: #{tpu_custom_call.1} parent=1 // pred_check_branch
      %230 = sbr.rel (0) target = $region113
    $region112: #{tpu_custom_call.1} parent=1 // pred_region
      %231 = dma.done [#allocation16], 32
    $region113: #{tpu_custom_call.1} parent=1 // pred_fallthru
      _
    // Predicated region
    $region114: #{tpu_custom_call.1} parent=1 // pred_check
      _
    $region115: #{tpu_custom_call.1} parent=1 // pred_check_branch
      %233 = sbr.rel (0) target = $region117
    $region116: #{tpu_custom_call.1} parent=1 // pred_region
      %234 = dma.done [#allocation16], 32
    $region117: #{tpu_custom_call.1} parent=1 // pred_fallthru
      _
    // Predicated region
    $region118: #{tpu_custom_call.1} parent=1 // pred_check
      _
    $region119: #{tpu_custom_call.1} parent=1 // pred_check_branch
      %236 = sbr.rel (0) target = $region121
    $region120: #{tpu_custom_call.1} parent=1 // pred_region
      %237 = dma.done [#allocation19], 32
    $region121: #{tpu_custom_call.1} parent=1 // pred_fallthru
      _
    // Predicated region
    $region122: #{tpu_custom_call.1} parent=1 // pred_check
      _
    $region123: #{tpu_custom_call.1} parent=1 // pred_check_branch
      %239 = sbr.rel (0) target = $region125
    $region124: #{tpu_custom_call.1} parent=1 // pred_region
      %240 = dma.done [#allocation19], 32
    $region125: #{tpu_custom_call.1} parent=1 // pred_fallthru
      _
    // Predicated region
    $region126: #{tpu_custom_call.1} parent=1 // pred_check
      _
    $region127: #{tpu_custom_call.1} parent=1 // pred_check_branch
      %242 = sbr.rel (0) target = $region129
    $region128: #{tpu_custom_call.1} parent=1 // pred_region
      %243 = dma.done [#allocation22], 32
    $region129: #{tpu_custom_call.1} parent=1 // pred_fallthru
      _
    // Predicated region
    $region130: #{tpu_custom_call.1} parent=1 // pred_check
      _
    $region131: #{tpu_custom_call.1} parent=1 // pred_check_branch
      %245 = sbr.rel (0) target = $region133
    $region132: #{tpu_custom_call.1} parent=1 // pred_region
      %246 = dma.done [#allocation22], 512
    $region133: #{tpu_custom_call.1} parent=1 // pred_fallthru
      _
    // Predicated region
    $region134: #{tpu_custom_call.1} parent=1 // pred_check
      _
    $region135: #{tpu_custom_call.1} parent=1 // pred_check_branch
      %248 = sbr.rel (0) target = $region137
    $region136: #{tpu_custom_call.1} parent=1 // pred_region
      %249 = dma.done [#allocation25], 16
    $region137: #{tpu_custom_call.1} parent=1 // pred_fallthru
      _
    %v251 = vld [vmem:[#allocation3] sm:$0xff]
    %v252 = vld [vmem:[#allocation3 + $0x8] sm:$0xff]
    %v253 = vld [vmem:[#allocation8] sm:$0x1]
    %v254 = vld [vmem:[#allocation9] sm:$0x1]
    %vm255 = vcmask 261120
    %v256 = vsel %vm255, %v251, 0.0
    %257 = vadd.xlane.f32.xlu0 %v256
    %v258 = vpop.xlane.xlu0 %257
    %v259 = vsel %vm255, %v252, 0.0
    %260 = vadd.xlane.f32.xlu0 %v259
    %v261 = vpop.xlane.xlu0 %260
    %v262 = vrcp.pop 32.0
    %v263 = vmul.f32 %v258, %v262
    %v264 = vmul.f32 %v261, %v262
    %v265 = vsub.f32 %v251, %v263
    %v266 = vsub.f32 %v252, %v264
    %v267 = vmul.f32 %v265, %v265
    %v268 = vmul.f32 %v266, %v266
    %v269 = vsel %vm255, %v267, 0.0
    %270 = vadd.xlane.f32.xlu0 %v269
    %v271 = vpop.xlane.xlu0 %270
    %v272 = vsel %vm255, %v268, 0.0
    %273 = vadd.xlane.f32.xlu0 %v272
    %v274 = vpop.xlane.xlu0 %273
    %v275 = vmul.f32 %v271, %v262
    %v276 = vmul.f32 %v274, %v262
    %v277 = vadd.f32 %v275, 1e-12
    %v278 = vadd.f32 %v276, 1e-12
    %v279 = vrsqrt.pop %v277
    %v280 = vrsqrt.pop %v278
    %v281 = vmul.f32 %v265, %v279
    %v282 = vmul.f32 %v266, %v280
    %v284 = vlaneseq
    %v285 = vshrl.u32 %v284, 7
    %v286 = vsub.s32 0, %v285
    %v287 = vrot.slane %v253, %v286
    %v289 = vmul.f32 %v281, %v287
    %v290 = vmul.f32 %v282, %v287
    %v292 = vlaneseq
    %v293 = vshrl.u32 %v292, 7
    %v294 = vsub.s32 0, %v293
    %v295 = vrot.slane %v254, %v294
    %v297 = vadd.f32 %v289, %v295
    %v298 = vadd.f32 %v290, %v295
    %299 = vst.msk [vmem:[#allocation2] sm:$0xff] %vm255, %v297
    %300 = vst.msk [vmem:[#allocation2 + $0x8] sm:$0xff] %vm255, %v298
    %v301 = vld [vmem:[#allocation6] sm:$0x1]
    %v302 = vld [vmem:[#allocation6 + $0x1] sm:$0x1]
    %v303 = vld [vmem:[#allocation2] sm:$0xff]
    %v304 = vld [vmem:[#allocation2 + $0x8] sm:$0xff]
    %v305 = vpack.c.bf16 %v304, %v303
    %v306 = vld [vmem:[%s4] sm:$0xf]
    %v307 = vld [vmem:[%s4 + $0x4] sm:$0xf]
    %v308 = vld [vmem:[%s4 + $0x8] sm:$0xf]
    %v309 = vld [vmem:[%s4 + $0xc] sm:$0xf]
    %v310 = vld [vmem:[#allocation11] sm:$0x1]
    %v312 = vlaneseq
    %v313 = vshrl.u32 %v312, 7
    %v314 = vsub.s32 0, %v313
    %v315 = vrot.slane %v310, %v314
    %v321 = vunpack.c.l.b16 %v306
    %v322 = vunpack.c.l.b16 %v307
    %v323 = vunpack.c.l.b16 %v308
    %v324 = vunpack.c.l.b16 %v309
    %v325 = vpack.c.b16 %v322, %v321
    %v326 = vpack.c.b16 %v324, %v323
    %v330 = vsel %vm255, %v305, 0
    %332 = vmatprep.subr.bf16.mxu0 0
    %333 = vmatpush1.bf16.msra.mxu0 %v325
    %334 = vmatprep.subr.bf16.mxu0 0
    %335 = vmatpush1.bf16.msra.mxu0 %v326
    %336 = vmatprep.subr.bf16.mxu0 0
    %337 = vmatpush1.bf16.msra.mxu0 0
    %338 = vmatprep.subr.bf16.mxu0 0
    %339 = vmatpush1.bf16.msra.mxu0 0
    %340 = vmatprep.subr.bf16.mxu0 0
    %341 = vmatpush1.bf16.msra.mxu0 0
    %342 = vmatprep.subr.bf16.mxu0 0
    %343 = vmatpush1.bf16.msra.mxu0 0
    %344 = vmatprep.subr.bf16.mxu0 0
    %345 = vmatpush1.bf16.msra.mxu0 0
    %346 = vmatprep.subr.bf16.mxu0 0
    %347 = vmatpush1.bf16.msra.mxu0 0
    %348 = vmatprep.subr.bf16.mxu0 0
    %349 = vmatpush1.bf16.msra.mxu0 0
    %350 = vmatprep.subr.bf16.mxu0 0
    %351 = vmatpush1.bf16.msra.mxu0 0
    %352 = vmatprep.subr.bf16.mxu0 0
    %353 = vmatpush1.bf16.msra.mxu0 0
    %354 = vmatprep.subr.bf16.mxu0 0
    %355 = vmatpush1.bf16.msra.mxu0 0
    %356 = vmatprep.subr.bf16.mxu0 0
    %357 = vmatpush1.bf16.msra.mxu0 0
    %358 = vmatprep.subr.bf16.mxu0 0
    %359 = vmatpush1.bf16.msra.mxu0 0
    %360 = vmatprep.subr.bf16.mxu0 0
    %361 = vmatpush1.bf16.msra.mxu0 0
    %362 = vmatprep.subr.bf16.mxu0 0
    %363 = vmatpush1.bf16.msra.mxu0 0
    %364 = vmatprep.mubr.bf16.mxu0 0
    %365 = vmatmul.mubr.bf16.gmra.mrb[0].mxu0 %v330
    %v366 = vpop.f32.mrb[0].mxu0
    %v367 = vadd.f32 %v315, %v366
    %v368 = vpop.f32.mrb[0].mxu0
    %v369 = vpop.f32.mrb[0].mxu0
    %v370 = vadd.f32 %v315, %v369
    %v371 = vpop.f32.mrb[0].mxu0
    %372 = vdwg.mxu0
    %v373 = vpack.c.bf16 %v367, %v367
    %v374 = vpack.c.bf16 %v370, %v370
    %v377 = vlaneseq
    %v378 = vshrl.u32 %v377, 7
    %v379 = vsub.s32 0, %v378
    %v380 = vrot.slane %v301, %v379
    %v381 = vlaneseq
    %v382 = vshrl.u32 %v381, 7
    %v383 = vsub.s32 0, %v382
    %v384 = vrot.slane %v302, %v383
    %388 = vrot.lane.b32.xlu0 %v373, 96
    %v389 = vpop.permute.xlu0 %388
    %vm390 = vcmask 64512
    %v392 = vsel %vm390, %v373, 0
    %v395 = vsel %vm390, %v389, 0
    %397 = vmatprep.subr.bf16.mxu0 0
    %398 = vmatpush1.bf16.xpose.msra.mxu0 %v395
    %399 = vmatprep.subr.bf16.mxu0 0
    %400 = vmatpush1.bf16.xpose.msra.mxu0 0
    %401 = vmatprep.subr.bf16.mxu0 0
    %402 = vmatpush1.bf16.xpose.msra.mxu0 0
    %403 = vmatprep.subr.bf16.mxu0 0
    %404 = vmatpush1.bf16.xpose.msra.mxu0 0
    %405 = vmatprep.subr.bf16.mxu0 0
    %406 = vmatpush1.bf16.xpose.msra.mxu0 0
    %407 = vmatprep.subr.bf16.mxu0 0
    %408 = vmatpush1.bf16.xpose.msra.mxu0 0
    %409 = vmatprep.subr.bf16.mxu0 0
    %410 = vmatpush1.bf16.xpose.msra.mxu0 0
    %411 = vmatprep.subr.bf16.mxu0 0
    %412 = vmatpush1.bf16.xpose.msra.mxu0 0
    %413 = vmatprep.subr.bf16.mxu0 0
    %414 = vmatpush1.bf16.xpose.msra.mxu0 0
    %415 = vmatprep.subr.bf16.mxu0 0
    %416 = vmatpush1.bf16.xpose.msra.mxu0 0
    %417 = vmatprep.subr.bf16.mxu0 0
    %418 = vmatpush1.bf16.xpose.msra.mxu0 0
    %419 = vmatprep.subr.bf16.mxu0 0
    %420 = vmatpush1.bf16.xpose.msra.mxu0 0
    %421 = vmatprep.subr.bf16.mxu0 0
    %422 = vmatpush1.bf16.xpose.msra.mxu0 0
    %423 = vmatprep.subr.bf16.mxu0 0
    %424 = vmatpush1.bf16.xpose.msra.mxu0 0
    %425 = vmatprep.subr.bf16.mxu0 0
    %426 = vmatpush1.bf16.xpose.msra.mxu0 0
    %427 = vmatprep.subr.bf16.mxu0 0
    %428 = vmatpush1.bf16.xpose.msra.mxu0 0
    %429 = vmatprep.mubr.bf16.mxu0 0
    %430 = vmatmul.mubr.bf16.gmra.mrb[0].mxu0 %v392
    %v431 = vpop.f32.mrb[0].mxu0
    %v432 = vadd.f32 %v380, %v431
    %v433 = vpop.f32.mrb[0].mxu0
    %v434 = vpop.f32.mrb[0].mxu0
    %v435 = vpop.f32.mrb[0].mxu0
    %436 = vdwg.mxu0
    %438 = vrot.lane.b32.xlu0 %v374, 96
    %v439 = vpop.permute.xlu0 %438
    %v441 = vsel %vm390, %v374, 0
    %v444 = vsel %vm390, %v439, 0
    %446 = vmatprep.subr.bf16.mxu0 0
    %447 = vmatpush1.bf16.xpose.msra.mxu0 %v444
    %448 = vmatprep.subr.bf16.mxu0 0
    %449 = vmatpush1.bf16.xpose.msra.mxu0 0
    %450 = vmatprep.subr.bf16.mxu0 0
    %451 = vmatpush1.bf16.xpose.msra.mxu0 0
    %452 = vmatprep.subr.bf16.mxu0 0
    %453 = vmatpush1.bf16.xpose.msra.mxu0 0
    %454 = vmatprep.subr.bf16.mxu0 0
    %455 = vmatpush1.bf16.xpose.msra.mxu0 0
    %456 = vmatprep.subr.bf16.mxu0 0
    %457 = vmatpush1.bf16.xpose.msra.mxu0 0
    %458 = vmatprep.subr.bf16.mxu0 0
    %459 = vmatpush1.bf16.xpose.msra.mxu0 0
    %460 = vmatprep.subr.bf16.mxu0 0
    %461 = vmatpush1.bf16.xpose.msra.mxu0 0
    %462 = vmatprep.subr.bf16.mxu0 0
    %463 = vmatpush1.bf16.xpose.msra.mxu0 0
    %464 = vmatprep.subr.bf16.mxu0 0
    %465 = vmatpush1.bf16.xpose.msra.mxu0 0
    %466 = vmatprep.subr.bf16.mxu0 0
    %467 = vmatpush1.bf16.xpose.msra.mxu0 0
    %468 = vmatprep.subr.bf16.mxu0 0
    %469 = vmatpush1.bf16.xpose.msra.mxu0 0
    %470 = vmatprep.subr.bf16.mxu0 0
    %471 = vmatpush1.bf16.xpose.msra.mxu0 0
    %472 = vmatprep.subr.bf16.mxu0 0
    %473 = vmatpush1.bf16.xpose.msra.mxu0 0
    %474 = vmatprep.subr.bf16.mxu0 0
    %475 = vmatpush1.bf16.xpose.msra.mxu0 0
    %476 = vmatprep.subr.bf16.mxu0 0
    %477 = vmatpush1.bf16.xpose.msra.mxu0 0
    %478 = vmatprep.mubr.bf16.mxu0 0
    %479 = vmatmul.mubr.bf16.gmra.mrb[0].mxu0 %v441
    %v480 = vpop.f32.mrb[0].mxu0
    %v481 = vadd.f32 %v384, %v480
    %v482 = vpop.f32.mrb[0].mxu0
    %v483 = vpop.f32.mrb[0].mxu0
    %v484 = vpop.f32.mrb[0].mxu0
    %485 = vdwg.mxu0
    %v486 = vsel %vm390, %v432, -inf
    %487 = vmax.xlane.f32.xlu0 %v486
    %v488 = vpop.xlane.xlu0 %487
    %v489 = vsel %vm390, %v481, -inf
    %490 = vmax.xlane.f32.xlu0 %v489
    %v491 = vpop.xlane.xlu0 %490
    %v492 = vsub.f32 %v432, %v488
    %v493 = vsub.f32 %v481, %v491
    %v494 = vmul.f32 %v492, 1.442695
    %v495 = vpow.pop %v494
    %v496 = vmul.f32 %v493, 1.442695
    %v497 = vpow.pop %v496
    %v498 = vsel %vm390, %v495, 0.0
    %499 = vadd.xlane.f32.xlu0 %v498
    %v500 = vpop.xlane.xlu0 %499
    %v501 = vsel %vm390, %v497, 0.0
    %502 = vadd.xlane.f32.xlu0 %v501
    %v503 = vpop.xlane.xlu0 %502
    %v504 = vrcp.pop %v500
    %v505 = vrcp.pop %v503
    %v506 = vmul.f32 %v495, %v504
    %v507 = vmul.f32 %v497, %v505
    %v508 = vpack.c.bf16 %v506, %v506
    %v509 = vpack.c.bf16 %v507, %v507
    %510 = vrot.lane.b32.xlu0 %v373, 64
    %v511 = vpop.permute.xlu0 %510
    %v513 = vsel %vm390, %v508, 0
    %vm515 = vcmask 1043456
    %v517 = vsel %vm515, %v511, 0
    %519 = vmatprep.subr.bf16.mxu0 0
    %520 = vmatpush1.bf16.msra.mxu0 %v517
    %521 = vmatprep.subr.bf16.mxu0 0
    %522 = vmatpush1.bf16.msra.mxu0 0
    %523 = vmatprep.subr.bf16.mxu0 0
    %524 = vmatpush1.bf16.msra.mxu0 0
    %525 = vmatprep.subr.bf16.mxu0 0
    %526 = vmatpush1.bf16.msra.mxu0 0
    %527 = vmatprep.subr.bf16.mxu0 0
    %528 = vmatpush1.bf16.msra.mxu0 0
    %529 = vmatprep.subr.bf16.mxu0 0
    %530 = vmatpush1.bf16.msra.mxu0 0
    %531 = vmatprep.subr.bf16.mxu0 0
    %532 = vmatpush1.bf16.msra.mxu0 0
    %533 = vmatprep.subr.bf16.mxu0 0
    %534 = vmatpush1.bf16.msra.mxu0 0
    %535 = vmatprep.subr.bf16.mxu0 0
    %536 = vmatpush1.bf16.msra.mxu0 0
    %537 = vmatprep.subr.bf16.mxu0 0
    %538 = vmatpush1.bf16.msra.mxu0 0
    %539 = vmatprep.subr.bf16.mxu0 0
    %540 = vmatpush1.bf16.msra.mxu0 0
    %541 = vmatprep.subr.bf16.mxu0 0
    %542 = vmatpush1.bf16.msra.mxu0 0
    %543 = vmatprep.subr.bf16.mxu0 0
    %544 = vmatpush1.bf16.msra.mxu0 0
    %545 = vmatprep.subr.bf16.mxu0 0
    %546 = vmatpush1.bf16.msra.mxu0 0
    %547 = vmatprep.subr.bf16.mxu0 0
    %548 = vmatpush1.bf16.msra.mxu0 0
    %549 = vmatprep.subr.bf16.mxu0 0
    %550 = vmatpush1.bf16.msra.mxu0 0
    %551 = vmatprep.mubr.bf16.mxu0 0
    %552 = vmatmul.mubr.bf16.gmra.mrb[0].mxu0 %v513
    %v553 = vpop.f32.mrb[0].mxu0
    %v554 = vadd.f32 0.0, %v553
    %v555 = vpop.f32.mrb[0].mxu0
    %v556 = vpop.f32.mrb[0].mxu0
    %v557 = vpop.f32.mrb[0].mxu0
    %558 = vdwg.mxu0
    %559 = vrot.lane.b32.xlu0 %v374, 64
    %v560 = vpop.permute.xlu0 %559
    %v562 = vsel %vm390, %v509, 0
    %v565 = vsel %vm515, %v560, 0
    %567 = vmatprep.subr.bf16.mxu0 0
    %568 = vmatpush1.bf16.msra.mxu0 %v565
    %569 = vmatprep.subr.bf16.mxu0 0
    %570 = vmatpush1.bf16.msra.mxu0 0
    %571 = vmatprep.subr.bf16.mxu0 0
    %572 = vmatpush1.bf16.msra.mxu0 0
    %573 = vmatprep.subr.bf16.mxu0 0
    %574 = vmatpush1.bf16.msra.mxu0 0
    %575 = vmatprep.subr.bf16.mxu0 0
    %576 = vmatpush1.bf16.msra.mxu0 0
    %577 = vmatprep.subr.bf16.mxu0 0
    %578 = vmatpush1.bf16.msra.mxu0 0
    %579 = vmatprep.subr.bf16.mxu0 0
    %580 = vmatpush1.bf16.msra.mxu0 0
    %581 = vmatprep.subr.bf16.mxu0 0
    %582 = vmatpush1.bf16.msra.mxu0 0
    %583 = vmatprep.subr.bf16.mxu0 0
    %584 = vmatpush1.bf16.msra.mxu0 0
    %585 = vmatprep.subr.bf16.mxu0 0
    %586 = vmatpush1.bf16.msra.mxu0 0
    %587 = vmatprep.subr.bf16.mxu0 0
    %588 = vmatpush1.bf16.msra.mxu0 0
    %589 = vmatprep.subr.bf16.mxu0 0
    %590 = vmatpush1.bf16.msra.mxu0 0
    %591 = vmatprep.subr.bf16.mxu0 0
    %592 = vmatpush1.bf16.msra.mxu0 0
    %593 = vmatprep.subr.bf16.mxu0 0
    %594 = vmatpush1.bf16.msra.mxu0 0
    %595 = vmatprep.subr.bf16.mxu0 0
    %596 = vmatpush1.bf16.msra.mxu0 0
    %597 = vmatprep.subr.bf16.mxu0 0
    %598 = vmatpush1.bf16.msra.mxu0 0
    %599 = vmatprep.mubr.bf16.mxu0 0
    %600 = vmatmul.mubr.bf16.gmra.mrb[0].mxu0 %v562
    %v601 = vpop.f32.mrb[0].mxu0
    %v602 = vadd.f32 0.0, %v601
    %v603 = vpop.f32.mrb[0].mxu0
    %v604 = vpop.f32.mrb[0].mxu0
    %v605 = vpop.f32.mrb[0].mxu0
    %606 = vdwg.mxu0
    %607 = vrot.lane.b32.xlu0 %v373, 120
    %v608 = vpop.permute.xlu0 %607
    %609 = vrot.lane.b32.xlu0 %v373, 88
    %v610 = vpop.permute.xlu0 %609
    %v612 = vsel %vm390, %v608, 0
    %v615 = vsel %vm390, %v610, 0
    %617 = vmatprep.subr.bf16.mxu0 0
    %618 = vmatpush1.bf16.xpose.msra.mxu0 %v615
    %619 = vmatprep.subr.bf16.mxu0 0
    %620 = vmatpush1.bf16.xpose.msra.mxu0 0
    %621 = vmatprep.subr.bf16.mxu0 0
    %622 = vmatpush1.bf16.xpose.msra.mxu0 0
    %623 = vmatprep.subr.bf16.mxu0 0
    %624 = vmatpush1.bf16.xpose.msra.mxu0 0
    %625 = vmatprep.subr.bf16.mxu0 0
    %626 = vmatpush1.bf16.xpose.msra.mxu0 0
    %627 = vmatprep.subr.bf16.mxu0 0
    %628 = vmatpush1.bf16.xpose.msra.mxu0 0
    %629 = vmatprep.subr.bf16.mxu0 0
    %630 = vmatpush1.bf16.xpose.msra.mxu0 0
    %631 = vmatprep.subr.bf16.mxu0 0
    %632 = vmatpush1.bf16.xpose.msra.mxu0 0
    %633 = vmatprep.subr.bf16.mxu0 0
    %634 = vmatpush1.bf16.xpose.msra.mxu0 0
    %635 = vmatprep.subr.bf16.mxu0 0
    %636 = vmatpush1.bf16.xpose.msra.mxu0 0
    %637 = vmatprep.subr.bf16.mxu0 0
    %638 = vmatpush1.bf16.xpose.msra.mxu0 0
    %639 = vmatprep.subr.bf16.mxu0 0
    %640 = vmatpush1.bf16.xpose.msra.mxu0 0
    %641 = vmatprep.subr.bf16.mxu0 0
    %642 = vmatpush1.bf16.xpose.msra.mxu0 0
    %643 = vmatprep.subr.bf16.mxu0 0
    %644 = vmatpush1.bf16.xpose.msra.mxu0 0
    %645 = vmatprep.subr.bf16.mxu0 0
    %646 = vmatpush1.bf16.xpose.msra.mxu0 0
    %647 = vmatprep.subr.bf16.mxu0 0
    %648 = vmatpush1.bf16.xpose.msra.mxu0 0
    %649 = vmatprep.mubr.bf16.mxu0 0
    %650 = vmatmul.mubr.bf16.gmra.mrb[0].mxu0 %v612
    %v651 = vpop.f32.mrb[0].mxu0
    %v652 = vadd.f32 %v380, %v651
    %v653 = vpop.f32.mrb[0].mxu0
    %v654 = vpop.f32.mrb[0].mxu0
    %v655 = vpop.f32.mrb[0].mxu0
    %656 = vdwg.mxu0
    %657 = vrot.lane.b32.xlu0 %v374, 120
    %v658 = vpop.permute.xlu0 %657
    %659 = vrot.lane.b32.xlu0 %v374, 88
    %v660 = vpop.permute.xlu0 %659
    %v662 = vsel %vm390, %v658, 0
    %v665 = vsel %vm390, %v660, 0
    %667 = vmatprep.subr.bf16.mxu0 0
    %668 = vmatpush1.bf16.xpose.msra.mxu0 %v665
    %669 = vmatprep.subr.bf16.mxu0 0
    %670 = vmatpush1.bf16.xpose.msra.mxu0 0
    %671 = vmatprep.subr.bf16.mxu0 0
    %672 = vmatpush1.bf16.xpose.msra.mxu0 0
    %673 = vmatprep.subr.bf16.mxu0 0
    %674 = vmatpush1.bf16.xpose.msra.mxu0 0
    %675 = vmatprep.subr.bf16.mxu0 0
    %676 = vmatpush1.bf16.xpose.msra.mxu0 0
    %677 = vmatprep.subr.bf16.mxu0 0
    %678 = vmatpush1.bf16.xpose.msra.mxu0 0
    %679 = vmatprep.subr.bf16.mxu0 0
    %680 = vmatpush1.bf16.xpose.msra.mxu0 0
    %681 = vmatprep.subr.bf16.mxu0 0
    %682 = vmatpush1.bf16.xpose.msra.mxu0 0
    %683 = vmatprep.subr.bf16.mxu0 0
    %684 = vmatpush1.bf16.xpose.msra.mxu0 0
    %685 = vmatprep.subr.bf16.mxu0 0
    %686 = vmatpush1.bf16.xpose.msra.mxu0 0
    %687 = vmatprep.subr.bf16.mxu0 0
    %688 = vmatpush1.bf16.xpose.msra.mxu0 0
    %689 = vmatprep.subr.bf16.mxu0 0
    %690 = vmatpush1.bf16.xpose.msra.mxu0 0
    %691 = vmatprep.subr.bf16.mxu0 0
    %692 = vmatpush1.bf16.xpose.msra.mxu0 0
    %693 = vmatprep.subr.bf16.mxu0 0
    %694 = vmatpush1.bf16.xpose.msra.mxu0 0
    %695 = vmatprep.subr.bf16.mxu0 0
    %696 = vmatpush1.bf16.xpose.msra.mxu0 0
    %697 = vmatprep.subr.bf16.mxu0 0
    %698 = vmatpush1.bf16.xpose.msra.mxu0 0
    %699 = vmatprep.mubr.bf16.mxu0 0
    %700 = vmatmul.mubr.bf16.gmra.mrb[0].mxu0 %v662
    %v701 = vpop.f32.mrb[0].mxu0
    %v702 = vadd.f32 %v384, %v701
    %v703 = vpop.f32.mrb[0].mxu0
    %v704 = vpop.f32.mrb[0].mxu0
    %v705 = vpop.f32.mrb[0].mxu0
    %706 = vdwg.mxu0
    %v707 = vsel %vm390, %v652, -inf
    %708 = vmax.xlane.f32.xlu0 %v707
    %v709 = vpop.xlane.xlu0 %708
    %v710 = vsel %vm390, %v702, -inf
    %711 = vmax.xlane.f32.xlu0 %v710
    %v712 = vpop.xlane.xlu0 %711
    %v713 = vsub.f32 %v652, %v709
    %v714 = vsub.f32 %v702, %v712
    %v715 = vmul.f32 %v713, 1.442695
    %v716 = vpow.pop %v715
    %v717 = vmul.f32 %v714, 1.442695
    %v718 = vpow.pop %v717
    %v719 = vsel %vm390, %v716, 0.0
    %720 = vadd.xlane.f32.xlu0 %v719
    %v721 = vpop.xlane.xlu0 %720
    %v722 = vsel %vm390, %v718, 0.0
    %723 = vadd.xlane.f32.xlu0 %v722
    %v724 = vpop.xlane.xlu0 %723
    %v725 = vrcp.pop %v721
    %v726 = vrcp.pop %v724
    %v727 = vmul.f32 %v716, %v725
    %v728 = vmul.f32 %v718, %v726
    %v729 = vpack.c.bf16 %v727, %v727
    %v730 = vpack.c.bf16 %v728, %v728
    %731 = vrot.lane.b32.xlu0 %v373, 56
    %v732 = vpop.permute.xlu0 %731
    %v734 = vsel %vm390, %v729, 0
    %v737 = vsel %vm515, %v732, 0
    %739 = vmatprep.subr.bf16.mxu0 0
    %740 = vmatpush1.bf16.msra.mxu0 %v737
    %741 = vmatprep.subr.bf16.mxu0 0
    %742 = vmatpush1.bf16.msra.mxu0 0
    %743 = vmatprep.subr.bf16.mxu0 0
    %744 = vmatpush1.bf16.msra.mxu0 0
    %745 = vmatprep.subr.bf16.mxu0 0
    %746 = vmatpush1.bf16.msra.mxu0 0
    %747 = vmatprep.subr.bf16.mxu0 0
    %748 = vmatpush1.bf16.msra.mxu0 0
    %749 = vmatprep.subr.bf16.mxu0 0
    %750 = vmatpush1.bf16.msra.mxu0 0
    %751 = vmatprep.subr.bf16.mxu0 0
    %752 = vmatpush1.bf16.msra.mxu0 0
    %753 = vmatprep.subr.bf16.mxu0 0
    %754 = vmatpush1.bf16.msra.mxu0 0
    %755 = vmatprep.subr.bf16.mxu0 0
    %756 = vmatpush1.bf16.msra.mxu0 0
    %757 = vmatprep.subr.bf16.mxu0 0
    %758 = vmatpush1.bf16.msra.mxu0 0
    %759 = vmatprep.subr.bf16.mxu0 0
    %760 = vmatpush1.bf16.msra.mxu0 0
    %761 = vmatprep.subr.bf16.mxu0 0
    %762 = vmatpush1.bf16.msra.mxu0 0
    %763 = vmatprep.subr.bf16.mxu0 0
    %764 = vmatpush1.bf16.msra.mxu0 0
    %765 = vmatprep.subr.bf16.mxu0 0
    %766 = vmatpush1.bf16.msra.mxu0 0
    %767 = vmatprep.subr.bf16.mxu0 0
    %768 = vmatpush1.bf16.msra.mxu0 0
    %769 = vmatprep.subr.bf16.mxu0 0
    %770 = vmatpush1.bf16.msra.mxu0 0
    %771 = vmatprep.mubr.bf16.mxu0 0
    %772 = vmatmul.mubr.bf16.gmra.mrb[0].mxu0 %v734
    %v773 = vpop.f32.mrb[0].mxu0
    %v774 = vadd.f32 0.0, %v773
    %v775 = vpop.f32.mrb[0].mxu0
    %v776 = vpop.f32.mrb[0].mxu0
    %v777 = vpop.f32.mrb[0].mxu0
    %778 = vdwg.mxu0
    %779 = vrot.lane.b32.xlu0 %v374, 56
    %v780 = vpop.permute.xlu0 %779
    %v782 = vsel %vm390, %v730, 0
    %v785 = vsel %vm515, %v780, 0
    %787 = vmatprep.subr.bf16.mxu0 0
    %788 = vmatpush1.bf16.msra.mxu0 %v785
    %789 = vmatprep.subr.bf16.mxu0 0
    %790 = vmatpush1.bf16.msra.mxu0 0
    %791 = vmatprep.subr.bf16.mxu0 0
    %792 = vmatpush1.bf16.msra.mxu0 0
    %793 = vmatprep.subr.bf16.mxu0 0
    %794 = vmatpush1.bf16.msra.mxu0 0
    %795 = vmatprep.subr.bf16.mxu0 0
    %796 = vmatpush1.bf16.msra.mxu0 0
    %797 = vmatprep.subr.bf16.mxu0 0
    %798 = vmatpush1.bf16.msra.mxu0 0
    %799 = vmatprep.subr.bf16.mxu0 0
    %800 = vmatpush1.bf16.msra.mxu0 0
    %801 = vmatprep.subr.bf16.mxu0 0
    %802 = vmatpush1.bf16.msra.mxu0 0
    %803 = vmatprep.subr.bf16.mxu0 0
    %804 = vmatpush1.bf16.msra.mxu0 0
    %805 = vmatprep.subr.bf16.mxu0 0
    %806 = vmatpush1.bf16.msra.mxu0 0
    %807 = vmatprep.subr.bf16.mxu0 0
    %808 = vmatpush1.bf16.msra.mxu0 0
    %809 = vmatprep.subr.bf16.mxu0 0
    %810 = vmatpush1.bf16.msra.mxu0 0
    %811 = vmatprep.subr.bf16.mxu0 0
    %812 = vmatpush1.bf16.msra.mxu0 0
    %813 = vmatprep.subr.bf16.mxu0 0
    %814 = vmatpush1.bf16.msra.mxu0 0
    %815 = vmatprep.subr.bf16.mxu0 0
    %816 = vmatpush1.bf16.msra.mxu0 0
    %817 = vmatprep.subr.bf16.mxu0 0
    %818 = vmatpush1.bf16.msra.mxu0 0
    %819 = vmatprep.mubr.bf16.mxu0 0
    %820 = vmatmul.mubr.bf16.gmra.mrb[0].mxu0 %v782
    %v821 = vpop.f32.mrb[0].mxu0
    %v822 = vadd.f32 0.0, %v821
    %v823 = vpop.f32.mrb[0].mxu0
    %v824 = vpop.f32.mrb[0].mxu0
    %v825 = vpop.f32.mrb[0].mxu0
    %826 = vdwg.mxu0
    %827 = vrot.lane.b32.xlu0 %v373, 112
    %v828 = vpop.permute.xlu0 %827
    %829 = vrot.lane.b32.xlu0 %v373, 80
    %v830 = vpop.permute.xlu0 %829
    %v832 = vsel %vm390, %v828, 0
    %v835 = vsel %vm390, %v830, 0
    %837 = vmatprep.subr.bf16.mxu0 0
    %838 = vmatpush1.bf16.xpose.msra.mxu0 %v835
    %839 = vmatprep.subr.bf16.mxu0 0
    %840 = vmatpush1.bf16.xpose.msra.mxu0 0
    %841 = vmatprep.subr.bf16.mxu0 0
    %842 = vmatpush1.bf16.xpose.msra.mxu0 0
    %843 = vmatprep.subr.bf16.mxu0 0
    %844 = vmatpush1.bf16.xpose.msra.mxu0 0
    %845 = vmatprep.subr.bf16.mxu0 0
    %846 = vmatpush1.bf16.xpose.msra.mxu0 0
    %847 = vmatprep.subr.bf16.mxu0 0
    %848 = vmatpush1.bf16.xpose.msra.mxu0 0
    %849 = vmatprep.subr.bf16.mxu0 0
    %850 = vmatpush1.bf16.xpose.msra.mxu0 0
    %851 = vmatprep.subr.bf16.mxu0 0
    %852 = vmatpush1.bf16.xpose.msra.mxu0 0
    %853 = vmatprep.subr.bf16.mxu0 0
    %854 = vmatpush1.bf16.xpose.msra.mxu0 0
    %855 = vmatprep.subr.bf16.mxu0 0
    %856 = vmatpush1.bf16.xpose.msra.mxu0 0
    %857 = vmatprep.subr.bf16.mxu0 0
    %858 = vmatpush1.bf16.xpose.msra.mxu0 0
    %859 = vmatprep.subr.bf16.mxu0 0
    %860 = vmatpush1.bf16.xpose.msra.mxu0 0
    %861 = vmatprep.subr.bf16.mxu0 0
    %862 = vmatpush1.bf16.xpose.msra.mxu0 0
    %863 = vmatprep.subr.bf16.mxu0 0
    %864 = vmatpush1.bf16.xpose.msra.mxu0 0
    %865 = vmatprep.subr.bf16.mxu0 0
    %866 = vmatpush1.bf16.xpose.msra.mxu0 0
    %867 = vmatprep.subr.bf16.mxu0 0
    %868 = vmatpush1.bf16.xpose.msra.mxu0 0
    %869 = vmatprep.mubr.bf16.mxu0 0
    %870 = vmatmul.mubr.bf16.gmra.mrb[0].mxu0 %v832
    %v871 = vpop.f32.mrb[0].mxu0
    %v872 = vadd.f32 %v380, %v871
    %v873 = vpop.f32.mrb[0].mxu0
    %v874 = vpop.f32.mrb[0].mxu0
    %v875 = vpop.f32.mrb[0].mxu0
    %876 = vdwg.mxu0
    %877 = vrot.lane.b32.xlu0 %v374, 112
    %v878 = vpop.permute.xlu0 %877
    %879 = vrot.lane.b32.xlu0 %v374, 80
    %v880 = vpop.permute.xlu0 %879
    %v882 = vsel %vm390, %v878, 0
    %v885 = vsel %vm390, %v880, 0
    %887 = vmatprep.subr.bf16.mxu0 0
    %888 = vmatpush1.bf16.xpose.msra.mxu0 %v885
    %889 = vmatprep.subr.bf16.mxu0 0
    %890 = vmatpush1.bf16.xpose.msra.mxu0 0
    %891 = vmatprep.subr.bf16.mxu0 0
    %892 = vmatpush1.bf16.xpose.msra.mxu0 0
    %893 = vmatprep.subr.bf16.mxu0 0
    %894 = vmatpush1.bf16.xpose.msra.mxu0 0
    %895 = vmatprep.subr.bf16.mxu0 0
    %896 = vmatpush1.bf16.xpose.msra.mxu0 0
    %897 = vmatprep.subr.bf16.mxu0 0
    %898 = vmatpush1.bf16.xpose.msra.mxu0 0
    %899 = vmatprep.subr.bf16.mxu0 0
    %900 = vmatpush1.bf16.xpose.msra.mxu0 0
    %901 = vmatprep.subr.bf16.mxu0 0
    %902 = vmatpush1.bf16.xpose.msra.mxu0 0
    %903 = vmatprep.subr.bf16.mxu0 0
    %904 = vmatpush1.bf16.xpose.msra.mxu0 0
    %905 = vmatprep.subr.bf16.mxu0 0
    %906 = vmatpush1.bf16.xpose.msra.mxu0 0
    %907 = vmatprep.subr.bf16.mxu0 0
    %908 = vmatpush1.bf16.xpose.msra.mxu0 0
    %909 = vmatprep.subr.bf16.mxu0 0
    %910 = vmatpush1.bf16.xpose.msra.mxu0 0
    %911 = vmatprep.subr.bf16.mxu0 0
    %912 = vmatpush1.bf16.xpose.msra.mxu0 0
    %913 = vmatprep.subr.bf16.mxu0 0
    %914 = vmatpush1.bf16.xpose.msra.mxu0 0
    %915 = vmatprep.subr.bf16.mxu0 0
    %916 = vmatpush1.bf16.xpose.msra.mxu0 0
    %917 = vmatprep.subr.bf16.mxu0 0
    %918 = vmatpush1.bf16.xpose.msra.mxu0 0
    %919 = vmatprep.mubr.bf16.mxu0 0
    %920 = vmatmul.mubr.bf16.gmra.mrb[0].mxu0 %v882
    %v921 = vpop.f32.mrb[0].mxu0
    %v922 = vadd.f32 %v384, %v921
    %v923 = vpop.f32.mrb[0].mxu0
    %v924 = vpop.f32.mrb[0].mxu0
    %v925 = vpop.f32.mrb[0].mxu0
    %926 = vdwg.mxu0
    %v927 = vsel %vm390, %v872, -inf
    %928 = vmax.xlane.f32.xlu0 %v927
    %v929 = vpop.xlane.xlu0 %928
    %v930 = vsel %vm390, %v922, -inf
    %931 = vmax.xlane.f32.xlu0 %v930
    %v932 = vpop.xlane.xlu0 %931
    %v933 = vsub.f32 %v872, %v929
    %v934 = vsub.f32 %v922, %v932
    %v935 = vmul.f32 %v933, 1.442695
    %v936 = vpow.pop %v935
    %v937 = vmul.f32 %v934, 1.442695
    %v938 = vpow.pop %v937
    %v939 = vsel %vm390, %v936, 0.0
    %940 = vadd.xlane.f32.xlu0 %v939
    %v941 = vpop.xlane.xlu0 %940
    %v942 = vsel %vm390, %v938, 0.0
    %943 = vadd.xlane.f32.xlu0 %v942
    %v944 = vpop.xlane.xlu0 %943
    %v945 = vrcp.pop %v941
    %v946 = vrcp.pop %v944
    %v947 = vmul.f32 %v936, %v945
    %v948 = vmul.f32 %v938, %v946
    %v949 = vpack.c.bf16 %v947, %v947
    %v950 = vpack.c.bf16 %v948, %v948
    %951 = vrot.lane.b32.xlu0 %v373, 48
    %v952 = vpop.permute.xlu0 %951
    %v954 = vsel %vm390, %v949, 0
    %v957 = vsel %vm515, %v952, 0
    %959 = vmatprep.subr.bf16.mxu0 0
    %960 = vmatpush1.bf16.msra.mxu0 %v957
    %961 = vmatprep.subr.bf16.mxu0 0
    %962 = vmatpush1.bf16.msra.mxu0 0
    %963 = vmatprep.subr.bf16.mxu0 0
    %964 = vmatpush1.bf16.msra.mxu0 0
    %965 = vmatprep.subr.bf16.mxu0 0
    %966 = vmatpush1.bf16.msra.mxu0 0
    %967 = vmatprep.subr.bf16.mxu0 0
    %968 = vmatpush1.bf16.msra.mxu0 0
    %969 = vmatprep.subr.bf16.mxu0 0
    %970 = vmatpush1.bf16.msra.mxu0 0
    %971 = vmatprep.subr.bf16.mxu0 0
    %972 = vmatpush1.bf16.msra.mxu0 0
    %973 = vmatprep.subr.bf16.mxu0 0
    %974 = vmatpush1.bf16.msra.mxu0 0
    %975 = vmatprep.subr.bf16.mxu0 0
    %976 = vmatpush1.bf16.msra.mxu0 0
    %977 = vmatprep.subr.bf16.mxu0 0
    %978 = vmatpush1.bf16.msra.mxu0 0
    %979 = vmatprep.subr.bf16.mxu0 0
    %980 = vmatpush1.bf16.msra.mxu0 0
    %981 = vmatprep.subr.bf16.mxu0 0
    %982 = vmatpush1.bf16.msra.mxu0 0
    %983 = vmatprep.subr.bf16.mxu0 0
    %984 = vmatpush1.bf16.msra.mxu0 0
    %985 = vmatprep.subr.bf16.mxu0 0
    %986 = vmatpush1.bf16.msra.mxu0 0
    %987 = vmatprep.subr.bf16.mxu0 0
    %988 = vmatpush1.bf16.msra.mxu0 0
    %989 = vmatprep.subr.bf16.mxu0 0
    %990 = vmatpush1.bf16.msra.mxu0 0
    %991 = vmatprep.mubr.bf16.mxu0 0
    %992 = vmatmul.mubr.bf16.gmra.mrb[0].mxu0 %v954
    %v993 = vpop.f32.mrb[0].mxu0
    %v994 = vadd.f32 0.0, %v993
    %v995 = vpop.f32.mrb[0].mxu0
    %v996 = vpop.f32.mrb[0].mxu0
    %v997 = vpop.f32.mrb[0].mxu0
    %998 = vdwg.mxu0
    %999 = vrot.lane.b32.xlu0 %v374, 48
    %v1000 = vpop.permute.xlu0 %999
    %v1002 = vsel %vm390, %v950, 0
    %v1005 = vsel %vm515, %v1000, 0
    %1007 = vmatprep.subr.bf16.mxu0 0
    %1008 = vmatpush1.bf16.msra.mxu0 %v1005
    %1009 = vmatprep.subr.bf16.mxu0 0
    %1010 = vmatpush1.bf16.msra.mxu0 0
    %1011 = vmatprep.subr.bf16.mxu0 0
    %1012 = vmatpush1.bf16.msra.mxu0 0
    %1013 = vmatprep.subr.bf16.mxu0 0
    %1014 = vmatpush1.bf16.msra.mxu0 0
    %1015 = vmatprep.subr.bf16.mxu0 0
    %1016 = vmatpush1.bf16.msra.mxu0 0
    %1017 = vmatprep.subr.bf16.mxu0 0
    %1018 = vmatpush1.bf16.msra.mxu0 0
    %1019 = vmatprep.subr.bf16.mxu0 0
    %1020 = vmatpush1.bf16.msra.mxu0 0
    %1021 = vmatprep.subr.bf16.mxu0 0
    %1022 = vmatpush1.bf16.msra.mxu0 0
    %1023 = vmatprep.subr.bf16.mxu0 0
    %1024 = vmatpush1.bf16.msra.mxu0 0
    %1025 = vmatprep.subr.bf16.mxu0 0
    %1026 = vmatpush1.bf16.msra.mxu0 0
    %1027 = vmatprep.subr.bf16.mxu0 0
    %1028 = vmatpush1.bf16.msra.mxu0 0
    %1029 = vmatprep.subr.bf16.mxu0 0
    %1030 = vmatpush1.bf16.msra.mxu0 0
    %1031 = vmatprep.subr.bf16.mxu0 0
    %1032 = vmatpush1.bf16.msra.mxu0 0
    %1033 = vmatprep.subr.bf16.mxu0 0
    %1034 = vmatpush1.bf16.msra.mxu0 0
    %1035 = vmatprep.subr.bf16.mxu0 0
    %1036 = vmatpush1.bf16.msra.mxu0 0
    %1037 = vmatprep.subr.bf16.mxu0 0
    %1038 = vmatpush1.bf16.msra.mxu0 0
    %1039 = vmatprep.mubr.bf16.mxu0 0
    %1040 = vmatmul.mubr.bf16.gmra.mrb[0].mxu0 %v1002
    %v1041 = vpop.f32.mrb[0].mxu0
    %v1042 = vadd.f32 0.0, %v1041
    %v1043 = vpop.f32.mrb[0].mxu0
    %v1044 = vpop.f32.mrb[0].mxu0
    %v1045 = vpop.f32.mrb[0].mxu0
    %1046 = vdwg.mxu0
    %1047 = vrot.lane.b32.xlu0 %v373, 104
    %v1048 = vpop.permute.xlu0 %1047
    %1049 = vrot.lane.b32.xlu0 %v373, 72
    %v1050 = vpop.permute.xlu0 %1049
    %v1052 = vsel %vm390, %v1048, 0
    %v1055 = vsel %vm390, %v1050, 0
    %1057 = vmatprep.subr.bf16.mxu0 0
    %1058 = vmatpush1.bf16.xpose.msra.mxu0 %v1055
    %1059 = vmatprep.subr.bf16.mxu0 0
    %1060 = vmatpush1.bf16.xpose.msra.mxu0 0
    %1061 = vmatprep.subr.bf16.mxu0 0
    %1062 = vmatpush1.bf16.xpose.msra.mxu0 0
    %1063 = vmatprep.subr.bf16.mxu0 0
    %1064 = vmatpush1.bf16.xpose.msra.mxu0 0
    %1065 = vmatprep.subr.bf16.mxu0 0
    %1066 = vmatpush1.bf16.xpose.msra.mxu0 0
    %1067 = vmatprep.subr.bf16.mxu0 0
    %1068 = vmatpush1.bf16.xpose.msra.mxu0 0
    %1069 = vmatprep.subr.bf16.mxu0 0
    %1070 = vmatpush1.bf16.xpose.msra.mxu0 0
    %1071 = vmatprep.subr.bf16.mxu0 0
    %1072 = vmatpush1.bf16.xpose.msra.mxu0 0
    %1073 = vmatprep.subr.bf16.mxu0 0
    %1074 = vmatpush1.bf16.xpose.msra.mxu0 0
    %1075 = vmatprep.subr.bf16.mxu0 0
    %1076 = vmatpush1.bf16.xpose.msra.mxu0 0
    %1077 = vmatprep.subr.bf16.mxu0 0
    %1078 = vmatpush1.bf16.xpose.msra.mxu0 0
    %1079 = vmatprep.subr.bf16.mxu0 0
    %1080 = vmatpush1.bf16.xpose.msra.mxu0 0
    %1081 = vmatprep.subr.bf16.mxu0 0
    %1082 = vmatpush1.bf16.xpose.msra.mxu0 0
    %1083 = vmatprep.subr.bf16.mxu0 0
    %1084 = vmatpush1.bf16.xpose.msra.mxu0 0
    %1085 = vmatprep.subr.bf16.mxu0 0
    %1086 = vmatpush1.bf16.xpose.msra.mxu0 0
    %1087 = vmatprep.subr.bf16.mxu0 0
    %1088 = vmatpush1.bf16.xpose.msra.mxu0 0
    %1089 = vmatprep.mubr.bf16.mxu0 0
    %1090 = vmatmul.mubr.bf16.gmra.mrb[0].mxu0 %v1052
    %v1091 = vpop.f32.mrb[0].mxu0
    %v1092 = vadd.f32 %v380, %v1091
    %v1093 = vpop.f32.mrb[0].mxu0
    %v1094 = vpop.f32.mrb[0].mxu0
    %v1095 = vpop.f32.mrb[0].mxu0
    %1096 = vdwg.mxu0
    %1097 = vrot.lane.b32.xlu0 %v374, 104
    %v1098 = vpop.permute.xlu0 %1097
    %1099 = vrot.lane.b32.xlu0 %v374, 72
    %v1100 = vpop.permute.xlu0 %1099
    %v1102 = vsel %vm390, %v1098, 0
    %v1105 = vsel %vm390, %v1100, 0
    %1107 = vmatprep.subr.bf16.mxu0 0
    %1108 = vmatpush1.bf16.xpose.msra.mxu0 %v1105
    %1109 = vmatprep.subr.bf16.mxu0 0
    %1110 = vmatpush1.bf16.xpose.msra.mxu0 0
    %1111 = vmatprep.subr.bf16.mxu0 0
    %1112 = vmatpush1.bf16.xpose.msra.mxu0 0
    %1113 = vmatprep.subr.bf16.mxu0 0
    %1114 = vmatpush1.bf16.xpose.msra.mxu0 0
    %1115 = vmatprep.subr.bf16.mxu0 0
    %1116 = vmatpush1.bf16.xpose.msra.mxu0 0
    %1117 = vmatprep.subr.bf16.mxu0 0
    %1118 = vmatpush1.bf16.xpose.msra.mxu0 0
    %1119 = vmatprep.subr.bf16.mxu0 0
    %1120 = vmatpush1.bf16.xpose.msra.mxu0 0
    %1121 = vmatprep.subr.bf16.mxu0 0
    %1122 = vmatpush1.bf16.xpose.msra.mxu0 0
    %1123 = vmatprep.subr.bf16.mxu0 0
    %1124 = vmatpush1.bf16.xpose.msra.mxu0 0
    %1125 = vmatprep.subr.bf16.mxu0 0
    %1126 = vmatpush1.bf16.xpose.msra.mxu0 0
    %1127 = vmatprep.subr.bf16.mxu0 0
    %1128 = vmatpush1.bf16.xpose.msra.mxu0 0
    %1129 = vmatprep.subr.bf16.mxu0 0
    %1130 = vmatpush1.bf16.xpose.msra.mxu0 0
    %1131 = vmatprep.subr.bf16.mxu0 0
    %1132 = vmatpush1.bf16.xpose.msra.mxu0 0
    %1133 = vmatprep.subr.bf16.mxu0 0
    %1134 = vmatpush1.bf16.xpose.msra.mxu0 0
    %1135 = vmatprep.subr.bf16.mxu0 0
    %1136 = vmatpush1.bf16.xpose.msra.mxu0 0
    %1137 = vmatprep.subr.bf16.mxu0 0
    %1138 = vmatpush1.bf16.xpose.msra.mxu0 0
    %1139 = vmatprep.mubr.bf16.mxu0 0
    %1140 = vmatmul.mubr.bf16.gmra.mrb[0].mxu0 %v1102
    %v1141 = vpop.f32.mrb[0].mxu0
    %v1142 = vadd.f32 %v384, %v1141
    %v1143 = vpop.f32.mrb[0].mxu0
    %v1144 = vpop.f32.mrb[0].mxu0
    %v1145 = vpop.f32.mrb[0].mxu0
    %1146 = vdwg.mxu0
    %v1147 = vsel %vm390, %v1092, -inf
    %1148 = vmax.xlane.f32.xlu0 %v1147
    %v1149 = vpop.xlane.xlu0 %1148
    %v1150 = vsel %vm390, %v1142, -inf
    %1151 = vmax.xlane.f32.xlu0 %v1150
    %v1152 = vpop.xlane.xlu0 %1151
    %v1153 = vsub.f32 %v1092, %v1149
    %v1154 = vsub.f32 %v1142, %v1152
    %v1155 = vmul.f32 %v1153, 1.442695
    %v1156 = vpow.pop %v1155
    %v1157 = vmul.f32 %v1154, 1.442695
    %v1158 = vpow.pop %v1157
    %v1159 = vsel %vm390, %v1156, 0.0
    %1160 = vadd.xlane.f32.xlu0 %v1159
    %v1161 = vpop.xlane.xlu0 %1160
    %v1162 = vsel %vm390, %v1158, 0.0
    %1163 = vadd.xlane.f32.xlu0 %v1162
    %v1164 = vpop.xlane.xlu0 %1163
    %v1165 = vrcp.pop %v1161
    %v1166 = vrcp.pop %v1164
    %v1167 = vmul.f32 %v1156, %v1165
    %v1168 = vmul.f32 %v1158, %v1166
    %v1169 = vpack.c.bf16 %v1167, %v1167
    %v1170 = vpack.c.bf16 %v1168, %v1168
    %1171 = vrot.lane.b32.xlu0 %v373, 40
    %v1172 = vpop.permute.xlu0 %1171
    %v1174 = vsel %vm390, %v1169, 0
    %v1177 = vsel %vm515, %v1172, 0
    %1179 = vmatprep.subr.bf16.mxu0 0
    %1180 = vmatpush1.bf16.msra.mxu0 %v1177
    %1181 = vmatprep.subr.bf16.mxu0 0
    %1182 = vmatpush1.bf16.msra.mxu0 0
    %1183 = vmatprep.subr.bf16.mxu0 0
    %1184 = vmatpush1.bf16.msra.mxu0 0
    %1185 = vmatprep.subr.bf16.mxu0 0
    %1186 = vmatpush1.bf16.msra.mxu0 0
    %1187 = vmatprep.subr.bf16.mxu0 0
    %1188 = vmatpush1.bf16.msra.mxu0 0
    %1189 = vmatprep.subr.bf16.mxu0 0
    %1190 = vmatpush1.bf16.msra.mxu0 0
    %1191 = vmatprep.subr.bf16.mxu0 0
    %1192 = vmatpush1.bf16.msra.mxu0 0
    %1193 = vmatprep.subr.bf16.mxu0 0
    %1194 = vmatpush1.bf16.msra.mxu0 0
    %1195 = vmatprep.subr.bf16.mxu0 0
    %1196 = vmatpush1.bf16.msra.mxu0 0
    %1197 = vmatprep.subr.bf16.mxu0 0
    %1198 = vmatpush1.bf16.msra.mxu0 0
    %1199 = vmatprep.subr.bf16.mxu0 0
    %1200 = vmatpush1.bf16.msra.mxu0 0
    %1201 = vmatprep.subr.bf16.mxu0 0
    %1202 = vmatpush1.bf16.msra.mxu0 0
    %1203 = vmatprep.subr.bf16.mxu0 0
    %1204 = vmatpush1.bf16.msra.mxu0 0
    %1205 = vmatprep.subr.bf16.mxu0 0
    %1206 = vmatpush1.bf16.msra.mxu0 0
    %1207 = vmatprep.subr.bf16.mxu0 0
    %1208 = vmatpush1.bf16.msra.mxu0 0
    %1209 = vmatprep.subr.bf16.mxu0 0
    %1210 = vmatpush1.bf16.msra.mxu0 0
    %1211 = vmatprep.mubr.bf16.mxu0 0
    %1212 = vmatmul.mubr.bf16.gmra.mrb[0].mxu0 %v1174
    %v1213 = vpop.f32.mrb[0].mxu0
    %v1214 = vadd.f32 0.0, %v1213
    %v1215 = vpop.f32.mrb[0].mxu0
    %v1216 = vpop.f32.mrb[0].mxu0
    %v1217 = vpop.f32.mrb[0].mxu0
    %1218 = vdwg.mxu0
    %1219 = vrot.lane.b32.xlu0 %v374, 40
    %v1220 = vpop.permute.xlu0 %1219
    %v1222 = vsel %vm390, %v1170, 0
    %v1225 = vsel %vm515, %v1220, 0
    %1227 = vmatprep.subr.bf16.mxu0 0
    %1228 = vmatpush1.bf16.msra.mxu0 %v1225
    %1229 = vmatprep.subr.bf16.mxu0 0
    %1230 = vmatpush1.bf16.msra.mxu0 0
    %1231 = vmatprep.subr.bf16.mxu0 0
    %1232 = vmatpush1.bf16.msra.mxu0 0
    %1233 = vmatprep.subr.bf16.mxu0 0
    %1234 = vmatpush1.bf16.msra.mxu0 0
    %1235 = vmatprep.subr.bf16.mxu0 0
    %1236 = vmatpush1.bf16.msra.mxu0 0
    %1237 = vmatprep.subr.bf16.mxu0 0
    %1238 = vmatpush1.bf16.msra.mxu0 0
    %1239 = vmatprep.subr.bf16.mxu0 0
    %1240 = vmatpush1.bf16.msra.mxu0 0
    %1241 = vmatprep.subr.bf16.mxu0 0
    %1242 = vmatpush1.bf16.msra.mxu0 0
    %1243 = vmatprep.subr.bf16.mxu0 0
    %1244 = vmatpush1.bf16.msra.mxu0 0
    %1245 = vmatprep.subr.bf16.mxu0 0
    %1246 = vmatpush1.bf16.msra.mxu0 0
    %1247 = vmatprep.subr.bf16.mxu0 0
    %1248 = vmatpush1.bf16.msra.mxu0 0
    %1249 = vmatprep.subr.bf16.mxu0 0
    %1250 = vmatpush1.bf16.msra.mxu0 0
    %1251 = vmatprep.subr.bf16.mxu0 0
    %1252 = vmatpush1.bf16.msra.mxu0 0
    %1253 = vmatprep.subr.bf16.mxu0 0
    %1254 = vmatpush1.bf16.msra.mxu0 0
    %1255 = vmatprep.subr.bf16.mxu0 0
    %1256 = vmatpush1.bf16.msra.mxu0 0
    %1257 = vmatprep.subr.bf16.mxu0 0
    %1258 = vmatpush1.bf16.msra.mxu0 0
    %1259 = vmatprep.mubr.bf16.mxu0 0
    %1260 = vmatmul.mubr.bf16.gmra.mrb[0].mxu0 %v1222
    %v1261 = vpop.f32.mrb[0].mxu0
    %v1262 = vadd.f32 0.0, %v1261
    %v1263 = vpop.f32.mrb[0].mxu0
    %v1264 = vpop.f32.mrb[0].mxu0
    %v1265 = vpop.f32.mrb[0].mxu0
    %1266 = vdwg.mxu0
    %1269 = vrot.lane.b32.xlu0 %v774, 8
    %v1270 = vpop.permute.xlu0 %1269
    %1271 = vrot.lane.b32.xlu0 %v822, 8
    %v1272 = vpop.permute.xlu0 %1271
    %1277 = vrot.lane.b32.xlu0 %v994, 16
    %v1278 = vpop.permute.xlu0 %1277
    %1279 = vrot.lane.b32.xlu0 %v1042, 16
    %v1280 = vpop.permute.xlu0 %1279
    %1285 = vrot.lane.b32.xlu0 %v1214, 24
    %v1286 = vpop.permute.xlu0 %1285
    %1287 = vrot.lane.b32.xlu0 %v1262, 24
    %v1288 = vpop.permute.xlu0 %1287
    %v1291 = vsel %vm390, %v554, %v1270
    %v1292 = vsel %vm390, %v602, %v1272
    %vm1293 = vcmask 130048
    %v1294 = vsel %vm1293, %v1291, %v1278
    %v1295 = vsel %vm1293, %v1292, %v1280
    %vm1296 = vcmask 195584
    %v1297 = vsel %vm1296, %v1294, %v1286
    %v1298 = vsel %vm1296, %v1295, %v1288
    %v1299 = vpack.c.bf16 %v1298, %v1297
    %v1300 = vld [vmem:[%s6] sm:$0xf]
    %v1301 = vld [vmem:[%s6 + $0x4] sm:$0xf]
    %v1302 = vld [vmem:[%s6 + $0x8] sm:$0xf]
    %v1303 = vld [vmem:[%s6 + $0xc] sm:$0xf]
    %v1304 = vld [vmem:[#allocation12] sm:$0x1]
    %v1306 = vlaneseq
    %v1307 = vshrl.u32 %v1306, 7
    %v1308 = vsub.s32 0, %v1307
    %v1309 = vrot.slane %v1304, %v1308
    %v1315 = vunpack.c.l.b16 %v1300
    %v1316 = vunpack.c.l.b16 %v1301
    %v1317 = vunpack.c.l.b16 %v1302
    %v1318 = vunpack.c.l.b16 %v1303
    %v1319 = vpack.c.b16 %v1316, %v1315
    %v1320 = vpack.c.b16 %v1318, %v1317
    %v1324 = vsel %vm255, %v1299, 0
    %1326 = vmatprep.subr.bf16.mxu0 0
    %1327 = vmatpush1.bf16.msra.mxu0 %v1319
    %1328 = vmatprep.subr.bf16.mxu0 0
    %1329 = vmatpush1.bf16.msra.mxu0 %v1320
    %1330 = vmatprep.subr.bf16.mxu0 0
    %1331 = vmatpush1.bf16.msra.mxu0 0
    %1332 = vmatprep.subr.bf16.mxu0 0
    %1333 = vmatpush1.bf16.msra.mxu0 0
    %1334 = vmatprep.subr.bf16.mxu0 0
    %1335 = vmatpush1.bf16.msra.mxu0 0
    %1336 = vmatprep.subr.bf16.mxu0 0
    %1337 = vmatpush1.bf16.msra.mxu0 0
    %1338 = vmatprep.subr.bf16.mxu0 0
    %1339 = vmatpush1.bf16.msra.mxu0 0
    %1340 = vmatprep.subr.bf16.mxu0 0
    %1341 = vmatpush1.bf16.msra.mxu0 0
    %1342 = vmatprep.subr.bf16.mxu0 0
    %1343 = vmatpush1.bf16.msra.mxu0 0
    %1344 = vmatprep.subr.bf16.mxu0 0
    %1345 = vmatpush1.bf16.msra.mxu0 0
    %1346 = vmatprep.subr.bf16.mxu0 0
    %1347 = vmatpush1.bf16.msra.mxu0 0
    %1348 = vmatprep.subr.bf16.mxu0 0
    %1349 = vmatpush1.bf16.msra.mxu0 0
    %1350 = vmatprep.subr.bf16.mxu0 0
    %1351 = vmatpush1.bf16.msra.mxu0 0
    %1352 = vmatprep.subr.bf16.mxu0 0
    %1353 = vmatpush1.bf16.msra.mxu0 0
    %1354 = vmatprep.subr.bf16.mxu0 0
    %1355 = vmatpush1.bf16.msra.mxu0 0
    %1356 = vmatprep.subr.bf16.mxu0 0
    %1357 = vmatpush1.bf16.msra.mxu0 0
    %1358 = vmatprep.mubr.bf16.mxu0 0
    %1359 = vmatmul.mubr.bf16.gmra.mrb[0].mxu0 %v1324
    %v1360 = vpop.f32.mrb[0].mxu0
    %v1361 = vadd.f32 %v1309, %v1360
    %v1362 = vpop.f32.mrb[0].mxu0
    %v1363 = vpop.f32.mrb[0].mxu0
    %v1364 = vadd.f32 %v1309, %v1363
    %v1365 = vpop.f32.mrb[0].mxu0
    %1366 = vdwg.mxu0
    %v1367 = vadd.f32 %v303, %v1361
    %v1368 = vadd.f32 %v304, %v1364
    %v1369 = vld [vmem:[#allocation14] sm:$0x1]
    %v1370 = vld [vmem:[#allocation15] sm:$0x1]
    %v1371 = vsel %vm255, %v1367, 0.0
    %1372 = vadd.xlane.f32.xlu0 %v1371
    %v1373 = vpop.xlane.xlu0 %1372
    %v1374 = vsel %vm255, %v1368, 0.0
    %1375 = vadd.xlane.f32.xlu0 %v1374
    %v1376 = vpop.xlane.xlu0 %1375
    %v1377 = vmul.f32 %v1373, %v262
    %v1378 = vmul.f32 %v1376, %v262
    %v1379 = vsub.f32 %v1367, %v1377
    %v1380 = vsub.f32 %v1368, %v1378
    %v1381 = vmul.f32 %v1379, %v1379
    %v1382 = vmul.f32 %v1380, %v1380
    %v1383 = vsel %vm255, %v1381, 0.0
    %1384 = vadd.xlane.f32.xlu0 %v1383
    %v1385 = vpop.xlane.xlu0 %1384
    %v1386 = vsel %vm255, %v1382, 0.0
    %1387 = vadd.xlane.f32.xlu0 %v1386
    %v1388 = vpop.xlane.xlu0 %1387
    %v1389 = vmul.f32 %v1385, %v262
    %v1390 = vmul.f32 %v1388, %v262
    %v1391 = vadd.f32 %v1389, 1e-12
    %v1392 = vadd.f32 %v1390, 1e-12
    %v1393 = vrsqrt.pop %v1391
    %v1394 = vrsqrt.pop %v1392
    %v1395 = vmul.f32 %v1379, %v1393
    %v1396 = vmul.f32 %v1380, %v1394
    %v1398 = vlaneseq
    %v1399 = vshrl.u32 %v1398, 7
    %v1400 = vsub.s32 0, %v1399
    %v1401 = vrot.slane %v1369, %v1400
    %v1403 = vmul.f32 %v1395, %v1401
    %v1404 = vmul.f32 %v1396, %v1401
    %v1406 = vlaneseq
    %v1407 = vshrl.u32 %v1406, 7
    %v1408 = vsub.s32 0, %v1407
    %v1409 = vrot.slane %v1370, %v1408
    %v1411 = vadd.f32 %v1403, %v1409
    %v1412 = vadd.f32 %v1404, %v1409
    %v1413 = vpack.c.bf16 %v1412, %v1411
    %v1414 = vld [vmem:[%s10] sm:$0xf]
    %v1415 = vld [vmem:[%s10 + $0x4] sm:$0xf]
    %v1416 = vld [vmem:[%s10 + $0x8] sm:$0xf]
    %v1417 = vld [vmem:[%s10 + $0xc] sm:$0xf]
    %v1418 = vld [vmem:[#allocation17] sm:$0x1]
    %v1420 = vlaneseq
    %v1421 = vshrl.u32 %v1420, 7
    %v1422 = vsub.s32 0, %v1421
    %v1423 = vrot.slane %v1418, %v1422
    %v1429 = vunpack.c.l.b16 %v1414
    %v1430 = vunpack.c.l.b16 %v1415
    %v1431 = vunpack.c.l.b16 %v1416
    %v1432 = vunpack.c.l.b16 %v1417
    %v1433 = vpack.c.b16 %v1430, %v1429
    %v1434 = vpack.c.b16 %v1432, %v1431
    %v1438 = vsel %vm255, %v1413, 0
    %1440 = vmatprep.subr.bf16.mxu0 0
    %1441 = vmatpush1.bf16.msra.mxu0 %v1433
    %1442 = vmatprep.subr.bf16.mxu0 0
    %1443 = vmatpush1.bf16.msra.mxu0 %v1434
    %1444 = vmatprep.subr.bf16.mxu0 0
    %1445 = vmatpush1.bf16.msra.mxu0 0
    %1446 = vmatprep.subr.bf16.mxu0 0
    %1447 = vmatpush1.bf16.msra.mxu0 0
    %1448 = vmatprep.subr.bf16.mxu0 0
    %1449 = vmatpush1.bf16.msra.mxu0 0
    %1450 = vmatprep.subr.bf16.mxu0 0
    %1451 = vmatpush1.bf16.msra.mxu0 0
    %1452 = vmatprep.subr.bf16.mxu0 0
    %1453 = vmatpush1.bf16.msra.mxu0 0
    %1454 = vmatprep.subr.bf16.mxu0 0
    %1455 = vmatpush1.bf16.msra.mxu0 0
    %1456 = vmatprep.subr.bf16.mxu0 0
    %1457 = vmatpush1.bf16.msra.mxu0 0
    %1458 = vmatprep.subr.bf16.mxu0 0
    %1459 = vmatpush1.bf16.msra.mxu0 0
    %1460 = vmatprep.subr.bf16.mxu0 0
    %1461 = vmatpush1.bf16.msra.mxu0 0
    %1462 = vmatprep.subr.bf16.mxu0 0
    %1463 = vmatpush1.bf16.msra.mxu0 0
    %1464 = vmatprep.subr.bf16.mxu0 0
    %1465 = vmatpush1.bf16.msra.mxu0 0
    %1466 = vmatprep.subr.bf16.mxu0 0
    %1467 = vmatpush1.bf16.msra.mxu0 0
    %1468 = vmatprep.subr.bf16.mxu0 0
    %1469 = vmatpush1.bf16.msra.mxu0 0
    %1470 = vmatprep.subr.bf16.mxu0 0
    %1471 = vmatpush1.bf16.msra.mxu0 0
    %1472 = vmatprep.mubr.bf16.mxu0 0
    %1473 = vmatmul.mubr.bf16.gmra.mrb[0].mxu0 %v1438
    %v1474 = vpop.f32.mrb[0].mxu0
    %v1475 = vadd.f32 %v1423, %v1474
    %v1476 = vpop.f32.mrb[0].mxu0
    %v1477 = vpop.f32.mrb[0].mxu0
    %v1478 = vadd.f32 %v1423, %v1477
    %v1479 = vpop.f32.mrb[0].mxu0
    %1480 = vdwg.mxu0
    %v1481 = vmul.f32 %v1475, %v1475
    %v1482 = vmul.f32 %v1478, %v1478
    %v1483 = vmul.f32 %v1475, %v1481
    %v1484 = vmul.f32 %v1478, %v1482
    %v1485 = vmul.f32 %v1483, 0.044715
    %v1486 = vmul.f32 %v1484, 0.044715
    %v1487 = vadd.f32 %v1475, %v1485
    %v1488 = vadd.f32 %v1478, %v1486
    %v1489 = vmul.f32 %v1487, 0.7978846
    %v1490 = vmul.f32 %v1488, 0.7978846
    %v1491 = vtanh.pop %v1489
    %v1492 = vtanh.pop %v1490
    %v1493 = vadd.f32 %v1491, 1.0
    %v1494 = vadd.f32 %v1492, 1.0
    %v1495 = vmul.f32 %v1493, 0.5
    %v1496 = vmul.f32 %v1494, 0.5
    %v1497 = vmul.f32 %v1475, %v1495
    %v1498 = vmul.f32 %v1478, %v1496
    %v1499 = vpack.c.bf16 %v1498, %v1497
    %v1500 = vld [vmem:[%s12] sm:$0xf]
    %v1501 = vld [vmem:[%s12 + $0x4] sm:$0xf]
    %v1502 = vld [vmem:[%s12 + $0x8] sm:$0xf]
    %v1503 = vld [vmem:[%s12 + $0xc] sm:$0xf]
    %v1504 = vld [vmem:[%s12 + $0x10] sm:$0xf]
    %v1505 = vld [vmem:[%s12 + $0x14] sm:$0xf]
    %v1506 = vld [vmem:[%s12 + $0x18] sm:$0xf]
    %v1507 = vld [vmem:[%s12 + $0x1c] sm:$0xf]
    %v1508 = vld [vmem:[#allocation18] sm:$0x1]
    %v1510 = vlaneseq
    %v1511 = vshrl.u32 %v1510, 7
    %v1512 = vsub.s32 0, %v1511
    %v1513 = vrot.slane %v1508, %v1512
    %v1523 = vunpack.c.l.b16 %v1500
    %v1524 = vunpack.c.l.b16 %v1501
    %v1525 = vunpack.c.l.b16 %v1502
    %v1526 = vunpack.c.l.b16 %v1503
    %v1527 = vunpack.c.l.b16 %v1504
    %v1528 = vunpack.c.l.b16 %v1505
    %v1529 = vunpack.c.l.b16 %v1506
    %v1530 = vunpack.c.l.b16 %v1507
    %v1531 = vpack.c.b16 %v1524, %v1523
    %v1532 = vpack.c.b16 %v1526, %v1525
    %v1533 = vpack.c.b16 %v1528, %v1527
    %v1534 = vpack.c.b16 %v1530, %v1529
    %vm1539 = vcmask 523264
    %v1541 = vsel %vm1539, %v1499, 0
    %1543 = vmatprep.subr.bf16.mxu0 0
    %1544 = vmatpush1.bf16.msra.mxu0 %v1531
    %1545 = vmatprep.subr.bf16.mxu0 0
    %1546 = vmatpush1.bf16.msra.mxu0 %v1532
    %1547 = vmatprep.subr.bf16.mxu0 0
    %1548 = vmatpush1.bf16.msra.mxu0 %v1533
    %1549 = vmatprep.subr.bf16.mxu0 0
    %1550 = vmatpush1.bf16.msra.mxu0 %v1534
    %1551 = vmatprep.subr.bf16.mxu0 0
    %1552 = vmatpush1.bf16.msra.mxu0 0
    %1553 = vmatprep.subr.bf16.mxu0 0
    %1554 = vmatpush1.bf16.msra.mxu0 0
    %1555 = vmatprep.subr.bf16.mxu0 0
    %1556 = vmatpush1.bf16.msra.mxu0 0
    %1557 = vmatprep.subr.bf16.mxu0 0
    %1558 = vmatpush1.bf16.msra.mxu0 0
    %1559 = vmatprep.subr.bf16.mxu0 0
    %1560 = vmatpush1.bf16.msra.mxu0 0
    %1561 = vmatprep.subr.bf16.mxu0 0
    %1562 = vmatpush1.bf16.msra.mxu0 0
    %1563 = vmatprep.subr.bf16.mxu0 0
    %1564 = vmatpush1.bf16.msra.mxu0 0
    %1565 = vmatprep.subr.bf16.mxu0 0
    %1566 = vmatpush1.bf16.msra.mxu0 0
    %1567 = vmatprep.subr.bf16.mxu0 0
    %1568 = vmatpush1.bf16.msra.mxu0 0
    %1569 = vmatprep.subr.bf16.mxu0 0
    %1570 = vmatpush1.bf16.msra.mxu0 0
    %1571 = vmatprep.subr.bf16.mxu0 0
    %1572 = vmatpush1.bf16.msra.mxu0 0
    %1573 = vmatprep.subr.bf16.mxu0 0
    %1574 = vmatpush1.bf16.msra.mxu0 0
    %1575 = vmatprep.mubr.bf16.mxu0 0
    %1576 = vmatmul.mubr.bf16.gmra.mrb[0].mxu0 %v1541
    %v1577 = vpop.f32.mrb[0].mxu0
    %v1578 = vadd.f32 %v1513, %v1577
    %v1579 = vpop.f32.mrb[0].mxu0
    %v1580 = vpop.f32.mrb[0].mxu0
    %v1581 = vadd.f32 %v1513, %v1580
    %v1582 = vpop.f32.mrb[0].mxu0
    %1583 = vdwg.mxu0
    %v1584 = vadd.f32 %v1411, %v1578
    %v1585 = vadd.f32 %v1412, %v1581
    %v1586 = vld [vmem:[#allocation20] sm:$0x1]
    %v1587 = vld [vmem:[#allocation21] sm:$0x1]
    %v1588 = vsel %vm255, %v1584, 0.0
    %1589 = vadd.xlane.f32.xlu0 %v1588
    %v1590 = vpop.xlane.xlu0 %1589
    %v1591 = vsel %vm255, %v1585, 0.0
    %1592 = vadd.xlane.f32.xlu0 %v1591
    %v1593 = vpop.xlane.xlu0 %1592
    %v1594 = vmul.f32 %v1590, %v262
    %v1595 = vmul.f32 %v1593, %v262
    %v1596 = vsub.f32 %v1584, %v1594
    %v1597 = vsub.f32 %v1585, %v1595
    %v1598 = vmul.f32 %v1596, %v1596
    %v1599 = vmul.f32 %v1597, %v1597
    %v1600 = vsel %vm255, %v1598, 0.0
    %1601 = vadd.xlane.f32.xlu0 %v1600
    %v1602 = vpop.xlane.xlu0 %1601
    %v1603 = vsel %vm255, %v1599, 0.0
    %1604 = vadd.xlane.f32.xlu0 %v1603
    %v1605 = vpop.xlane.xlu0 %1604
    %v1606 = vmul.f32 %v1602, %v262
    %v1607 = vmul.f32 %v1605, %v262
    %v1608 = vadd.f32 %v1606, 1e-12
    %v1609 = vadd.f32 %v1607, 1e-12
    %v1610 = vrsqrt.pop %v1608
    %v1611 = vrsqrt.pop %v1609
    %v1612 = vmul.f32 %v1596, %v1610
    %v1613 = vmul.f32 %v1597, %v1611
    %v1615 = vlaneseq
    %v1616 = vshrl.u32 %v1615, 7
    %v1617 = vsub.s32 0, %v1616
    %v1618 = vrot.slane %v1586, %v1617
    %v1620 = vmul.f32 %v1612, %v1618
    %v1621 = vmul.f32 %v1613, %v1618
    %v1623 = vlaneseq
    %v1624 = vshrl.u32 %v1623, 7
    %v1625 = vsub.s32 0, %v1624
    %v1626 = vrot.slane %v1587, %v1625
    %v1628 = vadd.f32 %v1620, %v1626
    %v1629 = vadd.f32 %v1621, %v1626
    %1630 = vst.msk [vmem:[#allocation2] sm:$0xff] %vm255, %v1628
    %1631 = vst.msk [vmem:[#allocation2 + $0x8] sm:$0xff] %vm255, %v1629
    %v1632 = vld [vmem:[#allocation2] sm:$0xff]
    %v1633 = vld [vmem:[#allocation2 + $0x8] sm:$0xff]
    %v1634 = vpack.c.bf16 %v1633, %v1632
    %s1635 = scalar_lea.vmem %s4, 16
    %v1636 = vld [vmem:[%s1635] sm:$0xf]
    %v1637 = vld [vmem:[%s1635 + $0x4] sm:$0xf]
    %v1638 = vld [vmem:[%s1635 + $0x8] sm:$0xf]
    %v1639 = vld [vmem:[%s1635 + $0xc] sm:$0xf]
    %s1640 = scalar_lea.vmem [#allocation11], 1
    %v1641 = vld [vmem:[%s1640] sm:$0x1]
    %v1643 = vlaneseq
    %v1644 = vshrl.u32 %v1643, 7
    %v1645 = vsub.s32 0, %v1644
    %v1646 = vrot.slane %v1641, %v1645
    %v1652 = vunpack.c.l.b16 %v1636
    %v1653 = vunpack.c.l.b16 %v1637
    %v1654 = vunpack.c.l.b16 %v1638
    %v1655 = vunpack.c.l.b16 %v1639
    %v1656 = vpack.c.b16 %v1653, %v1652
    %v1657 = vpack.c.b16 %v1655, %v1654
    %v1661 = vsel %vm255, %v1634, 0
    %1663 = vmatprep.subr.bf16.mxu0 0
    %1664 = vmatpush1.bf16.msra.mxu0 %v1656
    %1665 = vmatprep.subr.bf16.mxu0 0
    %1666 = vmatpush1.bf16.msra.mxu0 %v1657
    %1667 = vmatprep.subr.bf16.mxu0 0
    %1668 = vmatpush1.bf16.msra.mxu0 0
    %1669 = vmatprep.subr.bf16.mxu0 0
    %1670 = vmatpush1.bf16.msra.mxu0 0
    %1671 = vmatprep.subr.bf16.mxu0 0
    %1672 = vmatpush1.bf16.msra.mxu0 0
    %1673 = vmatprep.subr.bf16.mxu0 0
    %1674 = vmatpush1.bf16.msra.mxu0 0
    %1675 = vmatprep.subr.bf16.mxu0 0
    %1676 = vmatpush1.bf16.msra.mxu0 0
    %1677 = vmatprep.subr.bf16.mxu0 0
    %1678 = vmatpush1.bf16.msra.mxu0 0
    %1679 = vmatprep.subr.bf16.mxu0 0
    %1680 = vmatpush1.bf16.msra.mxu0 0
    %1681 = vmatprep.subr.bf16.mxu0 0
    %1682 = vmatpush1.bf16.msra.mxu0 0
    %1683 = vmatprep.subr.bf16.mxu0 0
    %1684 = vmatpush1.bf16.msra.mxu0 0
    %1685 = vmatprep.subr.bf16.mxu0 0
    %1686 = vmatpush1.bf16.msra.mxu0 0
    %1687 = vmatprep.subr.bf16.mxu0 0
    %1688 = vmatpush1.bf16.msra.mxu0 0
    %1689 = vmatprep.subr.bf16.mxu0 0
    %1690 = vmatpush1.bf16.msra.mxu0 0
    %1691 = vmatprep.subr.bf16.mxu0 0
    %1692 = vmatpush1.bf16.msra.mxu0 0
    %1693 = vmatprep.subr.bf16.mxu0 0
    %1694 = vmatpush1.bf16.msra.mxu0 0
    %1695 = vmatprep.mubr.bf16.mxu0 0
    %1696 = vmatmul.mubr.bf16.gmra.mrb[0].mxu0 %v1661
    %v1697 = vpop.f32.mrb[0].mxu0
    %v1698 = vadd.f32 %v1646, %v1697
    %v1699 = vpop.f32.mrb[0].mxu0
    %v1700 = vpop.f32.mrb[0].mxu0
    %v1701 = vadd.f32 %v1646, %v1700
    %v1702 = vpop.f32.mrb[0].mxu0
    %1703 = vdwg.mxu0
    %v1704 = vpack.c.bf16 %v1698, %v1698
    %v1705 = vpack.c.bf16 %v1701, %v1701
    %1707 = vrot.lane.b32.xlu0 %v1704, 96
    %v1708 = vpop.permute.xlu0 %1707
    %v1710 = vsel %vm390, %v1704, 0
    %v1713 = vsel %vm390, %v1708, 0
    %1715 = vmatprep.subr.bf16.mxu0 0
    %1716 = vmatpush1.bf16.xpose.msra.mxu0 %v1713
    %1717 = vmatprep.subr.bf16.mxu0 0
    %1718 = vmatpush1.bf16.xpose.msra.mxu0 0
    %1719 = vmatprep.subr.bf16.mxu0 0
    %1720 = vmatpush1.bf16.xpose.msra.mxu0 0
    %1721 = vmatprep.subr.bf16.mxu0 0
    %1722 = vmatpush1.bf16.xpose.msra.mxu0 0
    %1723 = vmatprep.subr.bf16.mxu0 0
    %1724 = vmatpush1.bf16.xpose.msra.mxu0 0
    %1725 = vmatprep.subr.bf16.mxu0 0
    %1726 = vmatpush1.bf16.xpose.msra.mxu0 0
    %1727 = vmatprep.subr.bf16.mxu0 0
    %1728 = vmatpush1.bf16.xpose.msra.mxu0 0
    %1729 = vmatprep.subr.bf16.mxu0 0
    %1730 = vmatpush1.bf16.xpose.msra.mxu0 0
    %1731 = vmatprep.subr.bf16.mxu0 0
    %1732 = vmatpush1.bf16.xpose.msra.mxu0 0
    %1733 = vmatprep.subr.bf16.mxu0 0
    %1734 = vmatpush1.bf16.xpose.msra.mxu0 0
    %1735 = vmatprep.subr.bf16.mxu0 0
    %1736 = vmatpush1.bf16.xpose.msra.mxu0 0
    %1737 = vmatprep.subr.bf16.mxu0 0
    %1738 = vmatpush1.bf16.xpose.msra.mxu0 0
    %1739 = vmatprep.subr.bf16.mxu0 0
    %1740 = vmatpush1.bf16.xpose.msra.mxu0 0
    %1741 = vmatprep.subr.bf16.mxu0 0
    %1742 = vmatpush1.bf16.xpose.msra.mxu0 0
    %1743 = vmatprep.subr.bf16.mxu0 0
    %1744 = vmatpush1.bf16.xpose.msra.mxu0 0
    %1745 = vmatprep.subr.bf16.mxu0 0
    %1746 = vmatpush1.bf16.xpose.msra.mxu0 0
    %1747 = vmatprep.mubr.bf16.mxu0 0
    %1748 = vmatmul.mubr.bf16.gmra.mrb[0].mxu0 %v1710
    %v1749 = vpop.f32.mrb[0].mxu0
    %v1750 = vadd.f32 %v380, %v1749
    %v1751 = vpop.f32.mrb[0].mxu0
    %v1752 = vpop.f32.mrb[0].mxu0
    %v1753 = vpop.f32.mrb[0].mxu0
    %1754 = vdwg.mxu0
    %1756 = vrot.lane.b32.xlu0 %v1705, 96
    %v1757 = vpop.permute.xlu0 %1756
    %v1759 = vsel %vm390, %v1705, 0
    %v1762 = vsel %vm390, %v1757, 0
    %1764 = vmatprep.subr.bf16.mxu0 0
    %1765 = vmatpush1.bf16.xpose.msra.mxu0 %v1762
    %1766 = vmatprep.subr.bf16.mxu0 0
    %1767 = vmatpush1.bf16.xpose.msra.mxu0 0
    %1768 = vmatprep.subr.bf16.mxu0 0
    %1769 = vmatpush1.bf16.xpose.msra.mxu0 0
    %1770 = vmatprep.subr.bf16.mxu0 0
    %1771 = vmatpush1.bf16.xpose.msra.mxu0 0
    %1772 = vmatprep.subr.bf16.mxu0 0
    %1773 = vmatpush1.bf16.xpose.msra.mxu0 0
    %1774 = vmatprep.subr.bf16.mxu0 0
    %1775 = vmatpush1.bf16.xpose.msra.mxu0 0
    %1776 = vmatprep.subr.bf16.mxu0 0
    %1777 = vmatpush1.bf16.xpose.msra.mxu0 0
    %1778 = vmatprep.subr.bf16.mxu0 0
    %1779 = vmatpush1.bf16.xpose.msra.mxu0 0
    %1780 = vmatprep.subr.bf16.mxu0 0
    %1781 = vmatpush1.bf16.xpose.msra.mxu0 0
    %1782 = vmatprep.subr.bf16.mxu0 0
    %1783 = vmatpush1.bf16.xpose.msra.mxu0 0
    %1784 = vmatprep.subr.bf16.mxu0 0
    %1785 = vmatpush1.bf16.xpose.msra.mxu0 0
    %1786 = vmatprep.subr.bf16.mxu0 0
    %1787 = vmatpush1.bf16.xpose.msra.mxu0 0
    %1788 = vmatprep.subr.bf16.mxu0 0
    %1789 = vmatpush1.bf16.xpose.msra.mxu0 0
    %1790 = vmatprep.subr.bf16.mxu0 0
    %1791 = vmatpush1.bf16.xpose.msra.mxu0 0
    %1792 = vmatprep.subr.bf16.mxu0 0
    %1793 = vmatpush1.bf16.xpose.msra.mxu0 0
    %1794 = vmatprep.subr.bf16.mxu0 0
    %1795 = vmatpush1.bf16.xpose.msra.mxu0 0
    %1796 = vmatprep.mubr.bf16.mxu0 0
    %1797 = vmatmul.mubr.bf16.gmra.mrb[0].mxu0 %v1759
    %v1798 = vpop.f32.mrb[0].mxu0
    %v1799 = vadd.f32 %v384, %v1798
    %v1800 = vpop.f32.mrb[0].mxu0
    %v1801 = vpop.f32.mrb[0].mxu0
    %v1802 = vpop.f32.mrb[0].mxu0
    %1803 = vdwg.mxu0
    %v1804 = vsel %vm390, %v1750, -inf
    %1805 = vmax.xlane.f32.xlu0 %v1804
    %v1806 = vpop.xlane.xlu0 %1805
    %v1807 = vsel %vm390, %v1799, -inf
    %1808 = vmax.xlane.f32.xlu0 %v1807
    %v1809 = vpop.xlane.xlu0 %1808
    %v1810 = vsub.f32 %v1750, %v1806
    %v1811 = vsub.f32 %v1799, %v1809
    %v1812 = vmul.f32 %v1810, 1.442695
    %v1813 = vpow.pop %v1812
    %v1814 = vmul.f32 %v1811, 1.442695
    %v1815 = vpow.pop %v1814
    %v1816 = vsel %vm390, %v1813, 0.0
    %1817 = vadd.xlane.f32.xlu0 %v1816
    %v1818 = vpop.xlane.xlu0 %1817
    %v1819 = vsel %vm390, %v1815, 0.0
    %1820 = vadd.xlane.f32.xlu0 %v1819
    %v1821 = vpop.xlane.xlu0 %1820
    %v1822 = vrcp.pop %v1818
    %v1823 = vrcp.pop %v1821
    %v1824 = vmul.f32 %v1813, %v1822
    %v1825 = vmul.f32 %v1815, %v1823
    %v1826 = vpack.c.bf16 %v1824, %v1824
    %v1827 = vpack.c.bf16 %v1825, %v1825
    %1828 = vrot.lane.b32.xlu0 %v1704, 64
    %v1829 = vpop.permute.xlu0 %1828
    %v1831 = vsel %vm390, %v1826, 0
    %v1834 = vsel %vm515, %v1829, 0
    %1836 = vmatprep.subr.bf16.mxu0 0
    %1837 = vmatpush1.bf16.msra.mxu0 %v1834
    %1838 = vmatprep.subr.bf16.mxu0 0
    %1839 = vmatpush1.bf16.msra.mxu0 0
    %1840 = vmatprep.subr.bf16.mxu0 0
    %1841 = vmatpush1.bf16.msra.mxu0 0
    %1842 = vmatprep.subr.bf16.mxu0 0
    %1843 = vmatpush1.bf16.msra.mxu0 0
    %1844 = vmatprep.subr.bf16.mxu0 0
    %1845 = vmatpush1.bf16.msra.mxu0 0
    %1846 = vmatprep.subr.bf16.mxu0 0
    %1847 = vmatpush1.bf16.msra.mxu0 0
    %1848 = vmatprep.subr.bf16.mxu0 0
    %1849 = vmatpush1.bf16.msra.mxu0 0
    %1850 = vmatprep.subr.bf16.mxu0 0
    %1851 = vmatpush1.bf16.msra.mxu0 0
    %1852 = vmatprep.subr.bf16.mxu0 0
    %1853 = vmatpush1.bf16.msra.mxu0 0
    %1854 = vmatprep.subr.bf16.mxu0 0
    %1855 = vmatpush1.bf16.msra.mxu0 0
    %1856 = vmatprep.subr.bf16.mxu0 0
    %1857 = vmatpush1.bf16.msra.mxu0 0
    %1858 = vmatprep.subr.bf16.mxu0 0
    %1859 = vmatpush1.bf16.msra.mxu0 0
    %1860 = vmatprep.subr.bf16.mxu0 0
    %1861 = vmatpush1.bf16.msra.mxu0 0
    %1862 = vmatprep.subr.bf16.mxu0 0
    %1863 = vmatpush1.bf16.msra.mxu0 0
    %1864 = vmatprep.subr.bf16.mxu0 0
    %1865 = vmatpush1.bf16.msra.mxu0 0
    %1866 = vmatprep.subr.bf16.mxu0 0
    %1867 = vmatpush1.bf16.msra.mxu0 0
    %1868 = vmatprep.mubr.bf16.mxu0 0
    %1869 = vmatmul.mubr.bf16.gmra.mrb[0].mxu0 %v1831
    %v1870 = vpop.f32.mrb[0].mxu0
    %v1871 = vadd.f32 0.0, %v1870
    %v1872 = vpop.f32.mrb[0].mxu0
    %v1873 = vpop.f32.mrb[0].mxu0
    %v1874 = vpop.f32.mrb[0].mxu0
    %1875 = vdwg.mxu0
    %1876 = vrot.lane.b32.xlu0 %v1705, 64
    %v1877 = vpop.permute.xlu0 %1876
    %v1879 = vsel %vm390, %v1827, 0
    %v1882 = vsel %vm515, %v1877, 0
    %1884 = vmatprep.subr.bf16.mxu0 0
    %1885 = vmatpush1.bf16.msra.mxu0 %v1882
    %1886 = vmatprep.subr.bf16.mxu0 0
    %1887 = vmatpush1.bf16.msra.mxu0 0
    %1888 = vmatprep.subr.bf16.mxu0 0
    %1889 = vmatpush1.bf16.msra.mxu0 0
    %1890 = vmatprep.subr.bf16.mxu0 0
    %1891 = vmatpush1.bf16.msra.mxu0 0
    %1892 = vmatprep.subr.bf16.mxu0 0
    %1893 = vmatpush1.bf16.msra.mxu0 0
    %1894 = vmatprep.subr.bf16.mxu0 0
    %1895 = vmatpush1.bf16.msra.mxu0 0
    %1896 = vmatprep.subr.bf16.mxu0 0
    %1897 = vmatpush1.bf16.msra.mxu0 0
    %1898 = vmatprep.subr.bf16.mxu0 0
    %1899 = vmatpush1.bf16.msra.mxu0 0
    %1900 = vmatprep.subr.bf16.mxu0 0
    %1901 = vmatpush1.bf16.msra.mxu0 0
    %1902 = vmatprep.subr.bf16.mxu0 0
    %1903 = vmatpush1.bf16.msra.mxu0 0
    %1904 = vmatprep.subr.bf16.mxu0 0
    %1905 = vmatpush1.bf16.msra.mxu0 0
    %1906 = vmatprep.subr.bf16.mxu0 0
    %1907 = vmatpush1.bf16.msra.mxu0 0
    %1908 = vmatprep.subr.bf16.mxu0 0
    %1909 = vmatpush1.bf16.msra.mxu0 0
    %1910 = vmatprep.subr.bf16.mxu0 0
    %1911 = vmatpush1.bf16.msra.mxu0 0
    %1912 = vmatprep.subr.bf16.mxu0 0
    %1913 = vmatpush1.bf16.msra.mxu0 0
    %1914 = vmatprep.subr.bf16.mxu0 0
    %1915 = vmatpush1.bf16.msra.mxu0 0
    %1916 = vmatprep.mubr.bf16.mxu0 0
    %1917 = vmatmul.mubr.bf16.gmra.mrb[0].mxu0 %v1879
    %v1918 = vpop.f32.mrb[0].mxu0
    %v1919 = vadd.f32 0.0, %v1918
    %v1920 = vpop.f32.mrb[0].mxu0
    %v1921 = vpop.f32.mrb[0].mxu0
    %v1922 = vpop.f32.mrb[0].mxu0
    %1923 = vdwg.mxu0
    %1924 = vrot.lane.b32.xlu0 %v1704, 120
    %v1925 = vpop.permute.xlu0 %1924
    %1926 = vrot.lane.b32.xlu0 %v1704, 88
    %v1927 = vpop.permute.xlu0 %1926
    %v1929 = vsel %vm390, %v1925, 0
    %v1932 = vsel %vm390, %v1927, 0
    %1934 = vmatprep.subr.bf16.mxu0 0
    %1935 = vmatpush1.bf16.xpose.msra.mxu0 %v1932
    %1936 = vmatprep.subr.bf16.mxu0 0
    %1937 = vmatpush1.bf16.xpose.msra.mxu0 0
    %1938 = vmatprep.subr.bf16.mxu0 0
    %1939 = vmatpush1.bf16.xpose.msra.mxu0 0
    %1940 = vmatprep.subr.bf16.mxu0 0
    %1941 = vmatpush1.bf16.xpose.msra.mxu0 0
    %1942 = vmatprep.subr.bf16.mxu0 0
    %1943 = vmatpush1.bf16.xpose.msra.mxu0 0
    %1944 = vmatprep.subr.bf16.mxu0 0
    %1945 = vmatpush1.bf16.xpose.msra.mxu0 0
    %1946 = vmatprep.subr.bf16.mxu0 0
    %1947 = vmatpush1.bf16.xpose.msra.mxu0 0
    %1948 = vmatprep.subr.bf16.mxu0 0
    %1949 = vmatpush1.bf16.xpose.msra.mxu0 0
    %1950 = vmatprep.subr.bf16.mxu0 0
    %1951 = vmatpush1.bf16.xpose.msra.mxu0 0
    %1952 = vmatprep.subr.bf16.mxu0 0
    %1953 = vmatpush1.bf16.xpose.msra.mxu0 0
    %1954 = vmatprep.subr.bf16.mxu0 0
    %1955 = vmatpush1.bf16.xpose.msra.mxu0 0
    %1956 = vmatprep.subr.bf16.mxu0 0
    %1957 = vmatpush1.bf16.xpose.msra.mxu0 0
    %1958 = vmatprep.subr.bf16.mxu0 0
    %1959 = vmatpush1.bf16.xpose.msra.mxu0 0
    %1960 = vmatprep.subr.bf16.mxu0 0
    %1961 = vmatpush1.bf16.xpose.msra.mxu0 0
    %1962 = vmatprep.subr.bf16.mxu0 0
    %1963 = vmatpush1.bf16.xpose.msra.mxu0 0
    %1964 = vmatprep.subr.bf16.mxu0 0
    %1965 = vmatpush1.bf16.xpose.msra.mxu0 0
    %1966 = vmatprep.mubr.bf16.mxu0 0
    %1967 = vmatmul.mubr.bf16.gmra.mrb[0].mxu0 %v1929
    %v1968 = vpop.f32.mrb[0].mxu0
    %v1969 = vadd.f32 %v380, %v1968
    %v1970 = vpop.f32.mrb[0].mxu0
    %v1971 = vpop.f32.mrb[0].mxu0
    %v1972 = vpop.f32.mrb[0].mxu0
    %1973 = vdwg.mxu0
    %1974 = vrot.lane.b32.xlu0 %v1705, 120
    %v1975 = vpop.permute.xlu0 %1974
    %1976 = vrot.lane.b32.xlu0 %v1705, 88
    %v1977 = vpop.permute.xlu0 %1976
    %v1979 = vsel %vm390, %v1975, 0
    %v1982 = vsel %vm390, %v1977, 0
    %1984 = vmatprep.subr.bf16.mxu0 0
    %1985 = vmatpush1.bf16.xpose.msra.mxu0 %v1982
    %1986 = vmatprep.subr.bf16.mxu0 0
    %1987 = vmatpush1.bf16.xpose.msra.mxu0 0
    %1988 = vmatprep.subr.bf16.mxu0 0
    %1989 = vmatpush1.bf16.xpose.msra.mxu0 0
    %1990 = vmatprep.subr.bf16.mxu0 0
    %1991 = vmatpush1.bf16.xpose.msra.mxu0 0
    %1992 = vmatprep.subr.bf16.mxu0 0
    %1993 = vmatpush1.bf16.xpose.msra.mxu0 0
    %1994 = vmatprep.subr.bf16.mxu0 0
    %1995 = vmatpush1.bf16.xpose.msra.mxu0 0
    %1996 = vmatprep.subr.bf16.mxu0 0
    %1997 = vmatpush1.bf16.xpose.msra.mxu0 0
    %1998 = vmatprep.subr.bf16.mxu0 0
    %1999 = vmatpush1.bf16.xpose.msra.mxu0 0
    %2000 = vmatprep.subr.bf16.mxu0 0
    %2001 = vmatpush1.bf16.xpose.msra.mxu0 0
    %2002 = vmatprep.subr.bf16.mxu0 0
    %2003 = vmatpush1.bf16.xpose.msra.mxu0 0
    %2004 = vmatprep.subr.bf16.mxu0 0
    %2005 = vmatpush1.bf16.xpose.msra.mxu0 0
    %2006 = vmatprep.subr.bf16.mxu0 0
    %2007 = vmatpush1.bf16.xpose.msra.mxu0 0
    %2008 = vmatprep.subr.bf16.mxu0 0
    %2009 = vmatpush1.bf16.xpose.msra.mxu0 0
    %2010 = vmatprep.subr.bf16.mxu0 0
    %2011 = vmatpush1.bf16.xpose.msra.mxu0 0
    %2012 = vmatprep.subr.bf16.mxu0 0
    %2013 = vmatpush1.bf16.xpose.msra.mxu0 0
    %2014 = vmatprep.subr.bf16.mxu0 0
    %2015 = vmatpush1.bf16.xpose.msra.mxu0 0
    %2016 = vmatprep.mubr.bf16.mxu0 0
    %2017 = vmatmul.mubr.bf16.gmra.mrb[0].mxu0 %v1979
    %v2018 = vpop.f32.mrb[0].mxu0
    %v2019 = vadd.f32 %v384, %v2018
    %v2020 = vpop.f32.mrb[0].mxu0
    %v2021 = vpop.f32.mrb[0].mxu0
    %v2022 = vpop.f32.mrb[0].mxu0
    %2023 = vdwg.mxu0
    %v2024 = vsel %vm390, %v1969, -inf
    %2025 = vmax.xlane.f32.xlu0 %v2024
    %v2026 = vpop.xlane.xlu0 %2025
    %v2027 = vsel %vm390, %v2019, -inf
    %2028 = vmax.xlane.f32.xlu0 %v2027
    %v2029 = vpop.xlane.xlu0 %2028
    %v2030 = vsub.f32 %v1969, %v2026
    %v2031 = vsub.f32 %v2019, %v2029
    %v2032 = vmul.f32 %v2030, 1.442695
    %v2033 = vpow.pop %v2032
    %v2034 = vmul.f32 %v2031, 1.442695
    %v2035 = vpow.pop %v2034
    %v2036 = vsel %vm390, %v2033, 0.0
    %2037 = vadd.xlane.f32.xlu0 %v2036
    %v2038 = vpop.xlane.xlu0 %2037
    %v2039 = vsel %vm390, %v2035, 0.0
    %2040 = vadd.xlane.f32.xlu0 %v2039
    %v2041 = vpop.xlane.xlu0 %2040
    %v2042 = vrcp.pop %v2038
    %v2043 = vrcp.pop %v2041
    %v2044 = vmul.f32 %v2033, %v2042
    %v2045 = vmul.f32 %v2035, %v2043
    %v2046 = vpack.c.bf16 %v2044, %v2044
    %v2047 = vpack.c.bf16 %v2045, %v2045
    %2048 = vrot.lane.b32.xlu0 %v1704, 56
    %v2049 = vpop.permute.xlu0 %2048
    %v2051 = vsel %vm390, %v2046, 0
    %v2054 = vsel %vm515, %v2049, 0
    %2056 = vmatprep.subr.bf16.mxu0 0
    %2057 = vmatpush1.bf16.msra.mxu0 %v2054
    %2058 = vmatprep.subr.bf16.mxu0 0
    %2059 = vmatpush1.bf16.msra.mxu0 0
    %2060 = vmatprep.subr.bf16.mxu0 0
    %2061 = vmatpush1.bf16.msra.mxu0 0
    %2062 = vmatprep.subr.bf16.mxu0 0
    %2063 = vmatpush1.bf16.msra.mxu0 0
    %2064 = vmatprep.subr.bf16.mxu0 0
    %2065 = vmatpush1.bf16.msra.mxu0 0
    %2066 = vmatprep.subr.bf16.mxu0 0
    %2067 = vmatpush1.bf16.msra.mxu0 0
    %2068 = vmatprep.subr.bf16.mxu0 0
    %2069 = vmatpush1.bf16.msra.mxu0 0
    %2070 = vmatprep.subr.bf16.mxu0 0
    %2071 = vmatpush1.bf16.msra.mxu0 0
    %2072 = vmatprep.subr.bf16.mxu0 0
    %2073 = vmatpush1.bf16.msra.mxu0 0
    %2074 = vmatprep.subr.bf16.mxu0 0
    %2075 = vmatpush1.bf16.msra.mxu0 0
    %2076 = vmatprep.subr.bf16.mxu0 0
    %2077 = vmatpush1.bf16.msra.mxu0 0
    %2078 = vmatprep.subr.bf16.mxu0 0
    %2079 = vmatpush1.bf16.msra.mxu0 0
    %2080 = vmatprep.subr.bf16.mxu0 0
    %2081 = vmatpush1.bf16.msra.mxu0 0
    %2082 = vmatprep.subr.bf16.mxu0 0
    %2083 = vmatpush1.bf16.msra.mxu0 0
    %2084 = vmatprep.subr.bf16.mxu0 0
    %2085 = vmatpush1.bf16.msra.mxu0 0
    %2086 = vmatprep.subr.bf16.mxu0 0
    %2087 = vmatpush1.bf16.msra.mxu0 0
    %2088 = vmatprep.mubr.bf16.mxu0 0
    %2089 = vmatmul.mubr.bf16.gmra.mrb[0].mxu0 %v2051
    %v2090 = vpop.f32.mrb[0].mxu0
    %v2091 = vadd.f32 0.0, %v2090
    %v2092 = vpop.f32.mrb[0].mxu0
    %v2093 = vpop.f32.mrb[0].mxu0
    %v2094 = vpop.f32.mrb[0].mxu0
    %2095 = vdwg.mxu0
    %2096 = vrot.lane.b32.xlu0 %v1705, 56
    %v2097 = vpop.permute.xlu0 %2096
    %v2099 = vsel %vm390, %v2047, 0
    %v2102 = vsel %vm515, %v2097, 0
    %2104 = vmatprep.subr.bf16.mxu0 0
    %2105 = vmatpush1.bf16.msra.mxu0 %v2102
    %2106 = vmatprep.subr.bf16.mxu0 0
    %2107 = vmatpush1.bf16.msra.mxu0 0
    %2108 = vmatprep.subr.bf16.mxu0 0
    %2109 = vmatpush1.bf16.msra.mxu0 0
    %2110 = vmatprep.subr.bf16.mxu0 0
    %2111 = vmatpush1.bf16.msra.mxu0 0
    %2112 = vmatprep.subr.bf16.mxu0 0
    %2113 = vmatpush1.bf16.msra.mxu0 0
    %2114 = vmatprep.subr.bf16.mxu0 0
    %2115 = vmatpush1.bf16.msra.mxu0 0
    %2116 = vmatprep.subr.bf16.mxu0 0
    %2117 = vmatpush1.bf16.msra.mxu0 0
    %2118 = vmatprep.subr.bf16.mxu0 0
    %2119 = vmatpush1.bf16.msra.mxu0 0
    %2120 = vmatprep.subr.bf16.mxu0 0
    %2121 = vmatpush1.bf16.msra.mxu0 0
    %2122 = vmatprep.subr.bf16.mxu0 0
    %2123 = vmatpush1.bf16.msra.mxu0 0
    %2124 = vmatprep.subr.bf16.mxu0 0
    %2125 = vmatpush1.bf16.msra.mxu0 0
    %2126 = vmatprep.subr.bf16.mxu0 0
    %2127 = vmatpush1.bf16.msra.mxu0 0
    %2128 = vmatprep.subr.bf16.mxu0 0
    %2129 = vmatpush1.bf16.msra.mxu0 0
    %2130 = vmatprep.subr.bf16.mxu0 0
    %2131 = vmatpush1.bf16.msra.mxu0 0
    %2132 = vmatprep.subr.bf16.mxu0 0
    %2133 = vmatpush1.bf16.msra.mxu0 0
    %2134 = vmatprep.subr.bf16.mxu0 0
    %2135 = vmatpush1.bf16.msra.mxu0 0
    %2136 = vmatprep.mubr.bf16.mxu0 0
    %2137 = vmatmul.mubr.bf16.gmra.mrb[0].mxu0 %v2099
    %v2138 = vpop.f32.mrb[0].mxu0
    %v2139 = vadd.f32 0.0, %v2138
    %v2140 = vpop.f32.mrb[0].mxu0
    %v2141 = vpop.f32.mrb[0].mxu0
    %v2142 = vpop.f32.mrb[0].mxu0
    %2143 = vdwg.mxu0
    %2144 = vrot.lane.b32.xlu0 %v1704, 112
    %v2145 = vpop.permute.xlu0 %2144
    %2146 = vrot.lane.b32.xlu0 %v1704, 80
    %v2147 = vpop.permute.xlu0 %2146
    %v2149 = vsel %vm390, %v2145, 0
    %v2152 = vsel %vm390, %v2147, 0
    %2154 = vmatprep.subr.bf16.mxu0 0
    %2155 = vmatpush1.bf16.xpose.msra.mxu0 %v2152
    %2156 = vmatprep.subr.bf16.mxu0 0
    %2157 = vmatpush1.bf16.xpose.msra.mxu0 0
    %2158 = vmatprep.subr.bf16.mxu0 0
    %2159 = vmatpush1.bf16.xpose.msra.mxu0 0
    %2160 = vmatprep.subr.bf16.mxu0 0
    %2161 = vmatpush1.bf16.xpose.msra.mxu0 0
    %2162 = vmatprep.subr.bf16.mxu0 0
    %2163 = vmatpush1.bf16.xpose.msra.mxu0 0
    %2164 = vmatprep.subr.bf16.mxu0 0
    %2165 = vmatpush1.bf16.xpose.msra.mxu0 0
    %2166 = vmatprep.subr.bf16.mxu0 0
    %2167 = vmatpush1.bf16.xpose.msra.mxu0 0
    %2168 = vmatprep.subr.bf16.mxu0 0
    %2169 = vmatpush1.bf16.xpose.msra.mxu0 0
    %2170 = vmatprep.subr.bf16.mxu0 0
    %2171 = vmatpush1.bf16.xpose.msra.mxu0 0
    %2172 = vmatprep.subr.bf16.mxu0 0
    %2173 = vmatpush1.bf16.xpose.msra.mxu0 0
    %2174 = vmatprep.subr.bf16.mxu0 0
    %2175 = vmatpush1.bf16.xpose.msra.mxu0 0
    %2176 = vmatprep.subr.bf16.mxu0 0
    %2177 = vmatpush1.bf16.xpose.msra.mxu0 0
    %2178 = vmatprep.subr.bf16.mxu0 0
    %2179 = vmatpush1.bf16.xpose.msra.mxu0 0
    %2180 = vmatprep.subr.bf16.mxu0 0
    %2181 = vmatpush1.bf16.xpose.msra.mxu0 0
    %2182 = vmatprep.subr.bf16.mxu0 0
    %2183 = vmatpush1.bf16.xpose.msra.mxu0 0
    %2184 = vmatprep.subr.bf16.mxu0 0
    %2185 = vmatpush1.bf16.xpose.msra.mxu0 0
    %2186 = vmatprep.mubr.bf16.mxu0 0
    %2187 = vmatmul.mubr.bf16.gmra.mrb[0].mxu0 %v2149
    %v2188 = vpop.f32.mrb[0].mxu0
    %v2189 = vadd.f32 %v380, %v2188
    %v2190 = vpop.f32.mrb[0].mxu0
    %v2191 = vpop.f32.mrb[0].mxu0
    %v2192 = vpop.f32.mrb[0].mxu0
    %2193 = vdwg.mxu0
    %2194 = vrot.lane.b32.xlu0 %v1705, 112
    %v2195 = vpop.permute.xlu0 %2194
    %2196 = vrot.lane.b32.xlu0 %v1705, 80
    %v2197 = vpop.permute.xlu0 %2196
    %v2199 = vsel %vm390, %v2195, 0
    %v2202 = vsel %vm390, %v2197, 0
    %2204 = vmatprep.subr.bf16.mxu0 0
    %2205 = vmatpush1.bf16.xpose.msra.mxu0 %v2202
    %2206 = vmatprep.subr.bf16.mxu0 0
    %2207 = vmatpush1.bf16.xpose.msra.mxu0 0
    %2208 = vmatprep.subr.bf16.mxu0 0
    %2209 = vmatpush1.bf16.xpose.msra.mxu0 0
    %2210 = vmatprep.subr.bf16.mxu0 0
    %2211 = vmatpush1.bf16.xpose.msra.mxu0 0
    %2212 = vmatprep.subr.bf16.mxu0 0
    %2213 = vmatpush1.bf16.xpose.msra.mxu0 0
    %2214 = vmatprep.subr.bf16.mxu0 0
    %2215 = vmatpush1.bf16.xpose.msra.mxu0 0
    %2216 = vmatprep.subr.bf16.mxu0 0
    %2217 = vmatpush1.bf16.xpose.msra.mxu0 0
    %2218 = vmatprep.subr.bf16.mxu0 0
    %2219 = vmatpush1.bf16.xpose.msra.mxu0 0
    %2220 = vmatprep.subr.bf16.mxu0 0
    %2221 = vmatpush1.bf16.xpose.msra.mxu0 0
    %2222 = vmatprep.subr.bf16.mxu0 0
    %2223 = vmatpush1.bf16.xpose.msra.mxu0 0
    %2224 = vmatprep.subr.bf16.mxu0 0
    %2225 = vmatpush1.bf16.xpose.msra.mxu0 0
    %2226 = vmatprep.subr.bf16.mxu0 0
    %2227 = vmatpush1.bf16.xpose.msra.mxu0 0
    %2228 = vmatprep.subr.bf16.mxu0 0
    %2229 = vmatpush1.bf16.xpose.msra.mxu0 0
    %2230 = vmatprep.subr.bf16.mxu0 0
    %2231 = vmatpush1.bf16.xpose.msra.mxu0 0
    %2232 = vmatprep.subr.bf16.mxu0 0
    %2233 = vmatpush1.bf16.xpose.msra.mxu0 0
    %2234 = vmatprep.subr.bf16.mxu0 0
    %2235 = vmatpush1.bf16.xpose.msra.mxu0 0
    %2236 = vmatprep.mubr.bf16.mxu0 0
    %2237 = vmatmul.mubr.bf16.gmra.mrb[0].mxu0 %v2199
    %v2238 = vpop.f32.mrb[0].mxu0
    %v2239 = vadd.f32 %v384, %v2238
    %v2240 = vpop.f32.mrb[0].mxu0
    %v2241 = vpop.f32.mrb[0].mxu0
    %v2242 = vpop.f32.mrb[0].mxu0
    %2243 = vdwg.mxu0
    %v2244 = vsel %vm390, %v2189, -inf
    %2245 = vmax.xlane.f32.xlu0 %v2244
    %v2246 = vpop.xlane.xlu0 %2245
    %v2247 = vsel %vm390, %v2239, -inf
    %2248 = vmax.xlane.f32.xlu0 %v2247
    %v2249 = vpop.xlane.xlu0 %2248
    %v2250 = vsub.f32 %v2189, %v2246
    %v2251 = vsub.f32 %v2239, %v2249
    %v2252 = vmul.f32 %v2250, 1.442695
    %v2253 = vpow.pop %v2252
    %v2254 = vmul.f32 %v2251, 1.442695
    %v2255 = vpow.pop %v2254
    %v2256 = vsel %vm390, %v2253, 0.0
    %2257 = vadd.xlane.f32.xlu0 %v2256
    %v2258 = vpop.xlane.xlu0 %2257
    %v2259 = vsel %vm390, %v2255, 0.0
    %2260 = vadd.xlane.f32.xlu0 %v2259
    %v2261 = vpop.xlane.xlu0 %2260
    %v2262 = vrcp.pop %v2258
    %v2263 = vrcp.pop %v2261
    %v2264 = vmul.f32 %v2253, %v2262
    %v2265 = vmul.f32 %v2255, %v2263
    %v2266 = vpack.c.bf16 %v2264, %v2264
    %v2267 = vpack.c.bf16 %v2265, %v2265
    %2268 = vrot.lane.b32.xlu0 %v1704, 48
    %v2269 = vpop.permute.xlu0 %2268
    %v2271 = vsel %vm390, %v2266, 0
    %v2274 = vsel %vm515, %v2269, 0
    %2276 = vmatprep.subr.bf16.mxu0 0
    %2277 = vmatpush1.bf16.msra.mxu0 %v2274
    %2278 = vmatprep.subr.bf16.mxu0 0
    %2279 = vmatpush1.bf16.msra.mxu0 0
    %2280 = vmatprep.subr.bf16.mxu0 0
    %2281 = vmatpush1.bf16.msra.mxu0 0
    %2282 = vmatprep.subr.bf16.mxu0 0
    %2283 = vmatpush1.bf16.msra.mxu0 0
    %2284 = vmatprep.subr.bf16.mxu0 0
    %2285 = vmatpush1.bf16.msra.mxu0 0
    %2286 = vmatprep.subr.bf16.mxu0 0
    %2287 = vmatpush1.bf16.msra.mxu0 0
    %2288 = vmatprep.subr.bf16.mxu0 0
    %2289 = vmatpush1.bf16.msra.mxu0 0
    %2290 = vmatprep.subr.bf16.mxu0 0
    %2291 = vmatpush1.bf16.msra.mxu0 0
    %2292 = vmatprep.subr.bf16.mxu0 0
    %2293 = vmatpush1.bf16.msra.mxu0 0
    %2294 = vmatprep.subr.bf16.mxu0 0
    %2295 = vmatpush1.bf16.msra.mxu0 0
    %2296 = vmatprep.subr.bf16.mxu0 0
    %2297 = vmatpush1.bf16.msra.mxu0 0
    %2298 = vmatprep.subr.bf16.mxu0 0
    %2299 = vmatpush1.bf16.msra.mxu0 0
    %2300 = vmatprep.subr.bf16.mxu0 0
    %2301 = vmatpush1.bf16.msra.mxu0 0
    %2302 = vmatprep.subr.bf16.mxu0 0
    %2303 = vmatpush1.bf16.msra.mxu0 0
    %2304 = vmatprep.subr.bf16.mxu0 0
    %2305 = vmatpush1.bf16.msra.mxu0 0
    %2306 = vmatprep.subr.bf16.mxu0 0
    %2307 = vmatpush1.bf16.msra.mxu0 0
    %2308 = vmatprep.mubr.bf16.mxu0 0
    %2309 = vmatmul.mubr.bf16.gmra.mrb[0].mxu0 %v2271
    %v2310 = vpop.f32.mrb[0].mxu0
    %v2311 = vadd.f32 0.0, %v2310
    %v2312 = vpop.f32.mrb[0].mxu0
    %v2313 = vpop.f32.mrb[0].mxu0
    %v2314 = vpop.f32.mrb[0].mxu0
    %2315 = vdwg.mxu0
    %2316 = vrot.lane.b32.xlu0 %v1705, 48
    %v2317 = vpop.permute.xlu0 %2316
    %v2319 = vsel %vm390, %v2267, 0
    %v2322 = vsel %vm515, %v2317, 0
    %2324 = vmatprep.subr.bf16.mxu0 0
    %2325 = vmatpush1.bf16.msra.mxu0 %v2322
    %2326 = vmatprep.subr.bf16.mxu0 0
    %2327 = vmatpush1.bf16.msra.mxu0 0
    %2328 = vmatprep.subr.bf16.mxu0 0
    %2329 = vmatpush1.bf16.msra.mxu0 0
    %2330 = vmatprep.subr.bf16.mxu0 0
    %2331 = vmatpush1.bf16.msra.mxu0 0
    %2332 = vmatprep.subr.bf16.mxu0 0
    %2333 = vmatpush1.bf16.msra.mxu0 0
    %2334 = vmatprep.subr.bf16.mxu0 0
    %2335 = vmatpush1.bf16.msra.mxu0 0
    %2336 = vmatprep.subr.bf16.mxu0 0
    %2337 = vmatpush1.bf16.msra.mxu0 0
    %2338 = vmatprep.subr.bf16.mxu0 0
    %2339 = vmatpush1.bf16.msra.mxu0 0
    %2340 = vmatprep.subr.bf16.mxu0 0
    %2341 = vmatpush1.bf16.msra.mxu0 0
    %2342 = vmatprep.subr.bf16.mxu0 0
    %2343 = vmatpush1.bf16.msra.mxu0 0
    %2344 = vmatprep.subr.bf16.mxu0 0
    %2345 = vmatpush1.bf16.msra.mxu0 0
    %2346 = vmatprep.subr.bf16.mxu0 0
    %2347 = vmatpush1.bf16.msra.mxu0 0
    %2348 = vmatprep.subr.bf16.mxu0 0
    %2349 = vmatpush1.bf16.msra.mxu0 0
    %2350 = vmatprep.subr.bf16.mxu0 0
    %2351 = vmatpush1.bf16.msra.mxu0 0
    %2352 = vmatprep.subr.bf16.mxu0 0
    %2353 = vmatpush1.bf16.msra.mxu0 0
    %2354 = vmatprep.subr.bf16.mxu0 0
    %2355 = vmatpush1.bf16.msra.mxu0 0
    %2356 = vmatprep.mubr.bf16.mxu0 0
    %2357 = vmatmul.mubr.bf16.gmra.mrb[0].mxu0 %v2319
    %v2358 = vpop.f32.mrb[0].mxu0
    %v2359 = vadd.f32 0.0, %v2358
    %v2360 = vpop.f32.mrb[0].mxu0
    %v2361 = vpop.f32.mrb[0].mxu0
    %v2362 = vpop.f32.mrb[0].mxu0
    %2363 = vdwg.mxu0
    %2364 = vrot.lane.b32.xlu0 %v1704, 104
    %v2365 = vpop.permute.xlu0 %2364
    %2366 = vrot.lane.b32.xlu0 %v1704, 72
    %v2367 = vpop.permute.xlu0 %2366
    %v2369 = vsel %vm390, %v2365, 0
    %v2372 = vsel %vm390, %v2367, 0
    %2374 = vmatprep.subr.bf16.mxu0 0
    %2375 = vmatpush1.bf16.xpose.msra.mxu0 %v2372
    %2376 = vmatprep.subr.bf16.mxu0 0
    %2377 = vmatpush1.bf16.xpose.msra.mxu0 0
    %2378 = vmatprep.subr.bf16.mxu0 0
    %2379 = vmatpush1.bf16.xpose.msra.mxu0 0
    %2380 = vmatprep.subr.bf16.mxu0 0
    %2381 = vmatpush1.bf16.xpose.msra.mxu0 0
    %2382 = vmatprep.subr.bf16.mxu0 0
    %2383 = vmatpush1.bf16.xpose.msra.mxu0 0
    %2384 = vmatprep.subr.bf16.mxu0 0
    %2385 = vmatpush1.bf16.xpose.msra.mxu0 0
    %2386 = vmatprep.subr.bf16.mxu0 0
    %2387 = vmatpush1.bf16.xpose.msra.mxu0 0
    %2388 = vmatprep.subr.bf16.mxu0 0
    %2389 = vmatpush1.bf16.xpose.msra.mxu0 0
    %2390 = vmatprep.subr.bf16.mxu0 0
    %2391 = vmatpush1.bf16.xpose.msra.mxu0 0
    %2392 = vmatprep.subr.bf16.mxu0 0
    %2393 = vmatpush1.bf16.xpose.msra.mxu0 0
    %2394 = vmatprep.subr.bf16.mxu0 0
    %2395 = vmatpush1.bf16.xpose.msra.mxu0 0
    %2396 = vmatprep.subr.bf16.mxu0 0
    %2397 = vmatpush1.bf16.xpose.msra.mxu0 0
    %2398 = vmatprep.subr.bf16.mxu0 0
    %2399 = vmatpush1.bf16.xpose.msra.mxu0 0
    %2400 = vmatprep.subr.bf16.mxu0 0
    %2401 = vmatpush1.bf16.xpose.msra.mxu0 0
    %2402 = vmatprep.subr.bf16.mxu0 0
    %2403 = vmatpush1.bf16.xpose.msra.mxu0 0
    %2404 = vmatprep.subr.bf16.mxu0 0
    %2405 = vmatpush1.bf16.xpose.msra.mxu0 0
    %2406 = vmatprep.mubr.bf16.mxu0 0
    %2407 = vmatmul.mubr.bf16.gmra.mrb[0].mxu0 %v2369
    %v2408 = vpop.f32.mrb[0].mxu0
    %v2409 = vadd.f32 %v380, %v2408
    %v2410 = vpop.f32.mrb[0].mxu0
    %v2411 = vpop.f32.mrb[0].mxu0
    %v2412 = vpop.f32.mrb[0].mxu0
    %2413 = vdwg.mxu0
    %2414 = vrot.lane.b32.xlu0 %v1705, 104
    %v2415 = vpop.permute.xlu0 %2414
    %2416 = vrot.lane.b32.xlu0 %v1705, 72
    %v2417 = vpop.permute.xlu0 %2416
    %v2419 = vsel %vm390, %v2415, 0
    %v2422 = vsel %vm390, %v2417, 0
    %2424 = vmatprep.subr.bf16.mxu0 0
    %2425 = vmatpush1.bf16.xpose.msra.mxu0 %v2422
    %2426 = vmatprep.subr.bf16.mxu0 0
    %2427 = vmatpush1.bf16.xpose.msra.mxu0 0
    %2428 = vmatprep.subr.bf16.mxu0 0
    %2429 = vmatpush1.bf16.xpose.msra.mxu0 0
    %2430 = vmatprep.subr.bf16.mxu0 0
    %2431 = vmatpush1.bf16.xpose.msra.mxu0 0
    %2432 = vmatprep.subr.bf16.mxu0 0
    %2433 = vmatpush1.bf16.xpose.msra.mxu0 0
    %2434 = vmatprep.subr.bf16.mxu0 0
    %2435 = vmatpush1.bf16.xpose.msra.mxu0 0
    %2436 = vmatprep.subr.bf16.mxu0 0
    %2437 = vmatpush1.bf16.xpose.msra.mxu0 0
    %2438 = vmatprep.subr.bf16.mxu0 0
    %2439 = vmatpush1.bf16.xpose.msra.mxu0 0
    %2440 = vmatprep.subr.bf16.mxu0 0
    %2441 = vmatpush1.bf16.xpose.msra.mxu0 0
    %2442 = vmatprep.subr.bf16.mxu0 0
    %2443 = vmatpush1.bf16.xpose.msra.mxu0 0
    %2444 = vmatprep.subr.bf16.mxu0 0
    %2445 = vmatpush1.bf16.xpose.msra.mxu0 0
    %2446 = vmatprep.subr.bf16.mxu0 0
    %2447 = vmatpush1.bf16.xpose.msra.mxu0 0
    %2448 = vmatprep.subr.bf16.mxu0 0
    %2449 = vmatpush1.bf16.xpose.msra.mxu0 0
    %2450 = vmatprep.subr.bf16.mxu0 0
    %2451 = vmatpush1.bf16.xpose.msra.mxu0 0
    %2452 = vmatprep.subr.bf16.mxu0 0
    %2453 = vmatpush1.bf16.xpose.msra.mxu0 0
    %2454 = vmatprep.subr.bf16.mxu0 0
    %2455 = vmatpush1.bf16.xpose.msra.mxu0 0
    %2456 = vmatprep.mubr.bf16.mxu0 0
    %2457 = vmatmul.mubr.bf16.gmra.mrb[0].mxu0 %v2419
    %v2458 = vpop.f32.mrb[0].mxu0
    %v2459 = vadd.f32 %v384, %v2458
    %v2460 = vpop.f32.mrb[0].mxu0
    %v2461 = vpop.f32.mrb[0].mxu0
    %v2462 = vpop.f32.mrb[0].mxu0
    %2463 = vdwg.mxu0
    %v2464 = vsel %vm390, %v2409, -inf
    %2465 = vmax.xlane.f32.xlu0 %v2464
    %v2466 = vpop.xlane.xlu0 %2465
    %v2467 = vsel %vm390, %v2459, -inf
    %2468 = vmax.xlane.f32.xlu0 %v2467
    %v2469 = vpop.xlane.xlu0 %2468
    %v2470 = vsub.f32 %v2409, %v2466
    %v2471 = vsub.f32 %v2459, %v2469
    %v2472 = vmul.f32 %v2470, 1.442695
    %v2473 = vpow.pop %v2472
    %v2474 = vmul.f32 %v2471, 1.442695
    %v2475 = vpow.pop %v2474
    %v2476 = vsel %vm390, %v2473, 0.0
    %2477 = vadd.xlane.f32.xlu0 %v2476
    %v2478 = vpop.xlane.xlu0 %2477
    %v2479 = vsel %vm390, %v2475, 0.0
    %2480 = vadd.xlane.f32.xlu0 %v2479
    %v2481 = vpop.xlane.xlu0 %2480
    %v2482 = vrcp.pop %v2478
    %v2483 = vrcp.pop %v2481
    %v2484 = vmul.f32 %v2473, %v2482
    %v2485 = vmul.f32 %v2475, %v2483
    %v2486 = vpack.c.bf16 %v2484, %v2484
    %v2487 = vpack.c.bf16 %v2485, %v2485
    %2488 = vrot.lane.b32.xlu0 %v1704, 40
    %v2489 = vpop.permute.xlu0 %2488
    %v2491 = vsel %vm390, %v2486, 0
    %v2494 = vsel %vm515, %v2489, 0
    %2496 = vmatprep.subr.bf16.mxu0 0
    %2497 = vmatpush1.bf16.msra.mxu0 %v2494
    %2498 = vmatprep.subr.bf16.mxu0 0
    %2499 = vmatpush1.bf16.msra.mxu0 0
    %2500 = vmatprep.subr.bf16.mxu0 0
    %2501 = vmatpush1.bf16.msra.mxu0 0
    %2502 = vmatprep.subr.bf16.mxu0 0
    %2503 = vmatpush1.bf16.msra.mxu0 0
    %2504 = vmatprep.subr.bf16.mxu0 0
    %2505 = vmatpush1.bf16.msra.mxu0 0
    %2506 = vmatprep.subr.bf16.mxu0 0
    %2507 = vmatpush1.bf16.msra.mxu0 0
    %2508 = vmatprep.subr.bf16.mxu0 0
    %2509 = vmatpush1.bf16.msra.mxu0 0
    %2510 = vmatprep.subr.bf16.mxu0 0
    %2511 = vmatpush1.bf16.msra.mxu0 0
    %2512 = vmatprep.subr.bf16.mxu0 0
    %2513 = vmatpush1.bf16.msra.mxu0 0
    %2514 = vmatprep.subr.bf16.mxu0 0
    %2515 = vmatpush1.bf16.msra.mxu0 0
    %2516 = vmatprep.subr.bf16.mxu0 0
    %2517 = vmatpush1.bf16.msra.mxu0 0
    %2518 = vmatprep.subr.bf16.mxu0 0
    %2519 = vmatpush1.bf16.msra.mxu0 0
    %2520 = vmatprep.subr.bf16.mxu0 0
    %2521 = vmatpush1.bf16.msra.mxu0 0
    %2522 = vmatprep.subr.bf16.mxu0 0
    %2523 = vmatpush1.bf16.msra.mxu0 0
    %2524 = vmatprep.subr.bf16.mxu0 0
    %2525 = vmatpush1.bf16.msra.mxu0 0
    %2526 = vmatprep.subr.bf16.mxu0 0
    %2527 = vmatpush1.bf16.msra.mxu0 0
    %2528 = vmatprep.mubr.bf16.mxu0 0
    %2529 = vmatmul.mubr.bf16.gmra.mrb[0].mxu0 %v2491
    %v2530 = vpop.f32.mrb[0].mxu0
    %v2531 = vadd.f32 0.0, %v2530
    %v2532 = vpop.f32.mrb[0].mxu0
    %v2533 = vpop.f32.mrb[0].mxu0
    %v2534 = vpop.f32.mrb[0].mxu0
    %2535 = vdwg.mxu0
    %2536 = vrot.lane.b32.xlu0 %v1705, 40
    %v2537 = vpop.permute.xlu0 %2536
    %v2539 = vsel %vm390, %v2487, 0
    %v2542 = vsel %vm515, %v2537, 0
    %2544 = vmatprep.subr.bf16.mxu0 0
    %2545 = vmatpush1.bf16.msra.mxu0 %v2542
    %2546 = vmatprep.subr.bf16.mxu0 0
    %2547 = vmatpush1.bf16.msra.mxu0 0
    %2548 = vmatprep.subr.bf16.mxu0 0
    %2549 = vmatpush1.bf16.msra.mxu0 0
    %2550 = vmatprep.subr.bf16.mxu0 0
    %2551 = vmatpush1.bf16.msra.mxu0 0
    %2552 = vmatprep.subr.bf16.mxu0 0
    %2553 = vmatpush1.bf16.msra.mxu0 0
    %2554 = vmatprep.subr.bf16.mxu0 0
    %2555 = vmatpush1.bf16.msra.mxu0 0
    %2556 = vmatprep.subr.bf16.mxu0 0
    %2557 = vmatpush1.bf16.msra.mxu0 0
    %2558 = vmatprep.subr.bf16.mxu0 0
    %2559 = vmatpush1.bf16.msra.mxu0 0
    %2560 = vmatprep.subr.bf16.mxu0 0
    %2561 = vmatpush1.bf16.msra.mxu0 0
    %2562 = vmatprep.subr.bf16.mxu0 0
    %2563 = vmatpush1.bf16.msra.mxu0 0
    %2564 = vmatprep.subr.bf16.mxu0 0
    %2565 = vmatpush1.bf16.msra.mxu0 0
    %2566 = vmatprep.subr.bf16.mxu0 0
    %2567 = vmatpush1.bf16.msra.mxu0 0
    %2568 = vmatprep.subr.bf16.mxu0 0
    %2569 = vmatpush1.bf16.msra.mxu0 0
    %2570 = vmatprep.subr.bf16.mxu0 0
    %2571 = vmatpush1.bf16.msra.mxu0 0
    %2572 = vmatprep.subr.bf16.mxu0 0
    %2573 = vmatpush1.bf16.msra.mxu0 0
    %2574 = vmatprep.subr.bf16.mxu0 0
    %2575 = vmatpush1.bf16.msra.mxu0 0
    %2576 = vmatprep.mubr.bf16.mxu0 0
    %2577 = vmatmul.mubr.bf16.gmra.mrb[0].mxu0 %v2539
    %v2578 = vpop.f32.mrb[0].mxu0
    %v2579 = vadd.f32 0.0, %v2578
    %v2580 = vpop.f32.mrb[0].mxu0
    %v2581 = vpop.f32.mrb[0].mxu0
    %v2582 = vpop.f32.mrb[0].mxu0
    %2583 = vdwg.mxu0
    %2586 = vrot.lane.b32.xlu0 %v2091, 8
    %v2587 = vpop.permute.xlu0 %2586
    %2588 = vrot.lane.b32.xlu0 %v2139, 8
    %v2589 = vpop.permute.xlu0 %2588
    %2594 = vrot.lane.b32.xlu0 %v2311, 16
    %v2595 = vpop.permute.xlu0 %2594
    %2596 = vrot.lane.b32.xlu0 %v2359, 16
    %v2597 = vpop.permute.xlu0 %2596
    %2602 = vrot.lane.b32.xlu0 %v2531, 24
    %v2603 = vpop.permute.xlu0 %2602
    %2604 = vrot.lane.b32.xlu0 %v2579, 24
    %v2605 = vpop.permute.xlu0 %2604
    %v2608 = vsel %vm390, %v1871, %v2587
    %v2609 = vsel %vm390, %v1919, %v2589
    %v2610 = vsel %vm1293, %v2608, %v2595
    %v2611 = vsel %vm1293, %v2609, %v2597
    %v2612 = vsel %vm1296, %v2610, %v2603
    %v2613 = vsel %vm1296, %v2611, %v2605
    %v2614 = vpack.c.bf16 %v2613, %v2612
    %s2615 = scalar_lea.vmem %s6, 16
    %v2616 = vld [vmem:[%s2615] sm:$0xf]
    %v2617 = vld [vmem:[%s2615 + $0x4] sm:$0xf]
    %v2618 = vld [vmem:[%s2615 + $0x8] sm:$0xf]
    %v2619 = vld [vmem:[%s2615 + $0xc] sm:$0xf]
    %s2620 = scalar_lea.vmem [#allocation12], 1
    %v2621 = vld [vmem:[%s2620] sm:$0x1]
    %v2623 = vlaneseq
    %v2624 = vshrl.u32 %v2623, 7
    %v2625 = vsub.s32 0, %v2624
    %v2626 = vrot.slane %v2621, %v2625
    %v2632 = vunpack.c.l.b16 %v2616
    %v2633 = vunpack.c.l.b16 %v2617
    %v2634 = vunpack.c.l.b16 %v2618
    %v2635 = vunpack.c.l.b16 %v2619
    %v2636 = vpack.c.b16 %v2633, %v2632
    %v2637 = vpack.c.b16 %v2635, %v2634
    %v2641 = vsel %vm255, %v2614, 0
    %2643 = vmatprep.subr.bf16.mxu0 0
    %2644 = vmatpush1.bf16.msra.mxu0 %v2636
    %2645 = vmatprep.subr.bf16.mxu0 0
    %2646 = vmatpush1.bf16.msra.mxu0 %v2637
    %2647 = vmatprep.subr.bf16.mxu0 0
    %2648 = vmatpush1.bf16.msra.mxu0 0
    %2649 = vmatprep.subr.bf16.mxu0 0
    %2650 = vmatpush1.bf16.msra.mxu0 0
    %2651 = vmatprep.subr.bf16.mxu0 0
    %2652 = vmatpush1.bf16.msra.mxu0 0
    %2653 = vmatprep.subr.bf16.mxu0 0
    %2654 = vmatpush1.bf16.msra.mxu0 0
    %2655 = vmatprep.subr.bf16.mxu0 0
    %2656 = vmatpush1.bf16.msra.mxu0 0
    %2657 = vmatprep.subr.bf16.mxu0 0
    %2658 = vmatpush1.bf16.msra.mxu0 0
    %2659 = vmatprep.subr.bf16.mxu0 0
    %2660 = vmatpush1.bf16.msra.mxu0 0
    %2661 = vmatprep.subr.bf16.mxu0 0
    %2662 = vmatpush1.bf16.msra.mxu0 0
    %2663 = vmatprep.subr.bf16.mxu0 0
    %2664 = vmatpush1.bf16.msra.mxu0 0
    %2665 = vmatprep.subr.bf16.mxu0 0
    %2666 = vmatpush1.bf16.msra.mxu0 0
    %2667 = vmatprep.subr.bf16.mxu0 0
    %2668 = vmatpush1.bf16.msra.mxu0 0
    %2669 = vmatprep.subr.bf16.mxu0 0
    %2670 = vmatpush1.bf16.msra.mxu0 0
    %2671 = vmatprep.subr.bf16.mxu0 0
    %2672 = vmatpush1.bf16.msra.mxu0 0
    %2673 = vmatprep.subr.bf16.mxu0 0
    %2674 = vmatpush1.bf16.msra.mxu0 0
    %2675 = vmatprep.mubr.bf16.mxu0 0
    %2676 = vmatmul.mubr.bf16.gmra.mrb[0].mxu0 %v2641
    %v2677 = vpop.f32.mrb[0].mxu0
    %v2678 = vadd.f32 %v2626, %v2677
    %v2679 = vpop.f32.mrb[0].mxu0
    %v2680 = vpop.f32.mrb[0].mxu0
    %v2681 = vadd.f32 %v2626, %v2680
    %v2682 = vpop.f32.mrb[0].mxu0
    %2683 = vdwg.mxu0
    %v2684 = vadd.f32 %v1632, %v2678
    %v2685 = vadd.f32 %v1633, %v2681
    %s2686 = scalar_lea.vmem [#allocation14], 1
    %v2687 = vld [vmem:[%s2686] sm:$0x1]
    %s2688 = scalar_lea.vmem [#allocation15], 1
    %v2689 = vld [vmem:[%s2688] sm:$0x1]
    %v2690 = vsel %vm255, %v2684, 0.0
    %2691 = vadd.xlane.f32.xlu0 %v2690
    %v2692 = vpop.xlane.xlu0 %2691
    %v2693 = vsel %vm255, %v2685, 0.0
    %2694 = vadd.xlane.f32.xlu0 %v2693
    %v2695 = vpop.xlane.xlu0 %2694
    %v2696 = vmul.f32 %v2692, %v262
    %v2697 = vmul.f32 %v2695, %v262
    %v2698 = vsub.f32 %v2684, %v2696
    %v2699 = vsub.f32 %v2685, %v2697
    %v2700 = vmul.f32 %v2698, %v2698
    %v2701 = vmul.f32 %v2699, %v2699
    %v2702 = vsel %vm255, %v2700, 0.0
    %2703 = vadd.xlane.f32.xlu0 %v2702
    %v2704 = vpop.xlane.xlu0 %2703
    %v2705 = vsel %vm255, %v2701, 0.0
    %2706 = vadd.xlane.f32.xlu0 %v2705
    %v2707 = vpop.xlane.xlu0 %2706
    %v2708 = vmul.f32 %v2704, %v262
    %v2709 = vmul.f32 %v2707, %v262
    %v2710 = vadd.f32 %v2708, 1e-12
    %v2711 = vadd.f32 %v2709, 1e-12
    %v2712 = vrsqrt.pop %v2710
    %v2713 = vrsqrt.pop %v2711
    %v2714 = vmul.f32 %v2698, %v2712
    %v2715 = vmul.f32 %v2699, %v2713
    %v2717 = vlaneseq
    %v2718 = vshrl.u32 %v2717, 7
    %v2719 = vsub.s32 0, %v2718
    %v2720 = vrot.slane %v2687, %v2719
    %v2722 = vmul.f32 %v2714, %v2720
    %v2723 = vmul.f32 %v2715, %v2720
    %v2725 = vlaneseq
    %v2726 = vshrl.u32 %v2725, 7
    %v2727 = vsub.s32 0, %v2726
    %v2728 = vrot.slane %v2689, %v2727
    %v2730 = vadd.f32 %v2722, %v2728
    %v2731 = vadd.f32 %v2723, %v2728
    %v2732 = vpack.c.bf16 %v2731, %v2730
    %s2733 = scalar_lea.vmem %s10, 16
    %v2734 = vld [vmem:[%s2733] sm:$0xf]
    %v2735 = vld [vmem:[%s2733 + $0x4] sm:$0xf]
    %v2736 = vld [vmem:[%s2733 + $0x8] sm:$0xf]
    %v2737 = vld [vmem:[%s2733 + $0xc] sm:$0xf]
    %s2738 = scalar_lea.vmem [#allocation17], 1
    %v2739 = vld [vmem:[%s2738] sm:$0x1]
    %v2741 = vlaneseq
    %v2742 = vshrl.u32 %v2741, 7
    %v2743 = vsub.s32 0, %v2742
    %v2744 = vrot.slane %v2739, %v2743
    %v2750 = vunpack.c.l.b16 %v2734
    %v2751 = vunpack.c.l.b16 %v2735
    %v2752 = vunpack.c.l.b16 %v2736
    %v2753 = vunpack.c.l.b16 %v2737
    %v2754 = vpack.c.b16 %v2751, %v2750
    %v2755 = vpack.c.b16 %v2753, %v2752
    %v2759 = vsel %vm255, %v2732, 0
    %2761 = vmatprep.subr.bf16.mxu0 0
    %2762 = vmatpush1.bf16.msra.mxu0 %v2754
    %2763 = vmatprep.subr.bf16.mxu0 0
    %2764 = vmatpush1.bf16.msra.mxu0 %v2755
    %2765 = vmatprep.subr.bf16.mxu0 0
    %2766 = vmatpush1.bf16.msra.mxu0 0
    %2767 = vmatprep.subr.bf16.mxu0 0
    %2768 = vmatpush1.bf16.msra.mxu0 0
    %2769 = vmatprep.subr.bf16.mxu0 0
    %2770 = vmatpush1.bf16.msra.mxu0 0
    %2771 = vmatprep.subr.bf16.mxu0 0
    %2772 = vmatpush1.bf16.msra.mxu0 0
    %2773 = vmatprep.subr.bf16.mxu0 0
    %2774 = vmatpush1.bf16.msra.mxu0 0
    %2775 = vmatprep.subr.bf16.mxu0 0
    %2776 = vmatpush1.bf16.msra.mxu0 0
    %2777 = vmatprep.subr.bf16.mxu0 0
    %2778 = vmatpush1.bf16.msra.mxu0 0
    %2779 = vmatprep.subr.bf16.mxu0 0
    %2780 = vmatpush1.bf16.msra.mxu0 0
    %2781 = vmatprep.subr.bf16.mxu0 0
    %2782 = vmatpush1.bf16.msra.mxu0 0
    %2783 = vmatprep.subr.bf16.mxu0 0
    %2784 = vmatpush1.bf16.msra.mxu0 0
    %2785 = vmatprep.subr.bf16.mxu0 0
    %2786 = vmatpush1.bf16.msra.mxu0 0
    %2787 = vmatprep.subr.bf16.mxu0 0
    %2788 = vmatpush1.bf16.msra.mxu0 0
    %2789 = vmatprep.subr.bf16.mxu0 0
    %2790 = vmatpush1.bf16.msra.mxu0 0
    %2791 = vmatprep.subr.bf16.mxu0 0
    %2792 = vmatpush1.bf16.msra.mxu0 0
    %2793 = vmatprep.mubr.bf16.mxu0 0
    %2794 = vmatmul.mubr.bf16.gmra.mrb[0].mxu0 %v2759
    %v2795 = vpop.f32.mrb[0].mxu0
    %v2796 = vadd.f32 %v2744, %v2795
    %v2797 = vpop.f32.mrb[0].mxu0
    %v2798 = vpop.f32.mrb[0].mxu0
    %v2799 = vadd.f32 %v2744, %v2798
    %v2800 = vpop.f32.mrb[0].mxu0
    %2801 = vdwg.mxu0
    %v2802 = vmul.f32 %v2796, %v2796
    %v2803 = vmul.f32 %v2799, %v2799
    %v2804 = vmul.f32 %v2796, %v2802
    %v2805 = vmul.f32 %v2799, %v2803
    %v2806 = vmul.f32 %v2804, 0.044715
    %v2807 = vmul.f32 %v2805, 0.044715
    %v2808 = vadd.f32 %v2796, %v2806
    %v2809 = vadd.f32 %v2799, %v2807
    %v2810 = vmul.f32 %v2808, 0.7978846
    %v2811 = vmul.f32 %v2809, 0.7978846
    %v2812 = vtanh.pop %v2810
    %v2813 = vtanh.pop %v2811
    %v2814 = vadd.f32 %v2812, 1.0
    %v2815 = vadd.f32 %v2813, 1.0
    %v2816 = vmul.f32 %v2814, 0.5
    %v2817 = vmul.f32 %v2815, 0.5
    %v2818 = vmul.f32 %v2796, %v2816
    %v2819 = vmul.f32 %v2799, %v2817
    %v2820 = vpack.c.bf16 %v2819, %v2818
    %s2821 = scalar_lea.vmem %s12, 32
    %v2822 = vld [vmem:[%s2821] sm:$0xf]
    %v2823 = vld [vmem:[%s2821 + $0x4] sm:$0xf]
    %v2824 = vld [vmem:[%s2821 + $0x8] sm:$0xf]
    %v2825 = vld [vmem:[%s2821 + $0xc] sm:$0xf]
    %v2826 = vld [vmem:[%s2821 + $0x10] sm:$0xf]
    %v2827 = vld [vmem:[%s2821 + $0x14] sm:$0xf]
    %v2828 = vld [vmem:[%s2821 + $0x18] sm:$0xf]
    %v2829 = vld [vmem:[%s2821 + $0x1c] sm:$0xf]
    %s2830 = scalar_lea.vmem [#allocation18], 1
    %v2831 = vld [vmem:[%s2830] sm:$0x1]
    %v2833 = vlaneseq
    %v2834 = vshrl.u32 %v2833, 7
    %v2835 = vsub.s32 0, %v2834
    %v2836 = vrot.slane %v2831, %v2835
    %v2846 = vunpack.c.l.b16 %v2822
    %v2847 = vunpack.c.l.b16 %v2823
    %v2848 = vunpack.c.l.b16 %v2824
    %v2849 = vunpack.c.l.b16 %v2825
    %v2850 = vunpack.c.l.b16 %v2826
    %v2851 = vunpack.c.l.b16 %v2827
    %v2852 = vunpack.c.l.b16 %v2828
    %v2853 = vunpack.c.l.b16 %v2829
    %v2854 = vpack.c.b16 %v2847, %v2846
    %v2855 = vpack.c.b16 %v2849, %v2848
    %v2856 = vpack.c.b16 %v2851, %v2850
    %v2857 = vpack.c.b16 %v2853, %v2852
    %v2863 = vsel %vm1539, %v2820, 0
    %2865 = vmatprep.subr.bf16.mxu0 0
    %2866 = vmatpush1.bf16.msra.mxu0 %v2854
    %2867 = vmatprep.subr.bf16.mxu0 0
    %2868 = vmatpush1.bf16.msra.mxu0 %v2855
    %2869 = vmatprep.subr.bf16.mxu0 0
    %2870 = vmatpush1.bf16.msra.mxu0 %v2856
    %2871 = vmatprep.subr.bf16.mxu0 0
    %2872 = vmatpush1.bf16.msra.mxu0 %v2857
    %2873 = vmatprep.subr.bf16.mxu0 0
    %2874 = vmatpush1.bf16.msra.mxu0 0
    %2875 = vmatprep.subr.bf16.mxu0 0
    %2876 = vmatpush1.bf16.msra.mxu0 0
    %2877 = vmatprep.subr.bf16.mxu0 0
    %2878 = vmatpush1.bf16.msra.mxu0 0
    %2879 = vmatprep.subr.bf16.mxu0 0
    %2880 = vmatpush1.bf16.msra.mxu0 0
    %2881 = vmatprep.subr.bf16.mxu0 0
    %2882 = vmatpush1.bf16.msra.mxu0 0
    %2883 = vmatprep.subr.bf16.mxu0 0
    %2884 = vmatpush1.bf16.msra.mxu0 0
    %2885 = vmatprep.subr.bf16.mxu0 0
    %2886 = vmatpush1.bf16.msra.mxu0 0
    %2887 = vmatprep.subr.bf16.mxu0 0
    %2888 = vmatpush1.bf16.msra.mxu0 0
    %2889 = vmatprep.subr.bf16.mxu0 0
    %2890 = vmatpush1.bf16.msra.mxu0 0
    %2891 = vmatprep.subr.bf16.mxu0 0
    %2892 = vmatpush1.bf16.msra.mxu0 0
    %2893 = vmatprep.subr.bf16.mxu0 0
    %2894 = vmatpush1.bf16.msra.mxu0 0
    %2895 = vmatprep.subr.bf16.mxu0 0
    %2896 = vmatpush1.bf16.msra.mxu0 0
    %2897 = vmatprep.mubr.bf16.mxu0 0
    %2898 = vmatmul.mubr.bf16.gmra.mrb[0].mxu0 %v2863
    %v2899 = vpop.f32.mrb[0].mxu0
    %v2900 = vadd.f32 %v2836, %v2899
    %v2901 = vpop.f32.mrb[0].mxu0
    %v2902 = vpop.f32.mrb[0].mxu0
    %v2903 = vadd.f32 %v2836, %v2902
    %v2904 = vpop.f32.mrb[0].mxu0
    %2905 = vdwg.mxu0
    %v2906 = vadd.f32 %v2730, %v2900
    %v2907 = vadd.f32 %v2731, %v2903
    %s2908 = scalar_lea.vmem [#allocation20], 1
    %v2909 = vld [vmem:[%s2908] sm:$0x1]
    %s2910 = scalar_lea.vmem [#allocation21], 1
    %v2911 = vld [vmem:[%s2910] sm:$0x1]
    %v2912 = vsel %vm255, %v2906, 0.0
    %2913 = vadd.xlane.f32.xlu0 %v2912
    %v2914 = vpop.xlane.xlu0 %2913
    %v2915 = vsel %vm255, %v2907, 0.0
    %2916 = vadd.xlane.f32.xlu0 %v2915
    %v2917 = vpop.xlane.xlu0 %2916
    %v2918 = vmul.f32 %v2914, %v262
    %v2919 = vmul.f32 %v2917, %v262
    %v2920 = vsub.f32 %v2906, %v2918
    %v2921 = vsub.f32 %v2907, %v2919
    %v2922 = vmul.f32 %v2920, %v2920
    %v2923 = vmul.f32 %v2921, %v2921
    %v2924 = vsel %vm255, %v2922, 0.0
    %2925 = vadd.xlane.f32.xlu0 %v2924
    %v2926 = vpop.xlane.xlu0 %2925
    %v2927 = vsel %vm255, %v2923, 0.0
    %2928 = vadd.xlane.f32.xlu0 %v2927
    %v2929 = vpop.xlane.xlu0 %2928
    %v2930 = vmul.f32 %v2926, %v262
    %v2931 = vmul.f32 %v2929, %v262
    %v2932 = vadd.f32 %v2930, 1e-12
    %v2933 = vadd.f32 %v2931, 1e-12
    %v2934 = vrsqrt.pop %v2932
    %v2935 = vrsqrt.pop %v2933
    %v2936 = vmul.f32 %v2920, %v2934
    %v2937 = vmul.f32 %v2921, %v2935
    %v2939 = vlaneseq
    %v2940 = vshrl.u32 %v2939, 7
    %v2941 = vsub.s32 0, %v2940
    %v2942 = vrot.slane %v2909, %v2941
    %v2944 = vmul.f32 %v2936, %v2942
    %v2945 = vmul.f32 %v2937, %v2942
    %v2947 = vlaneseq
    %v2948 = vshrl.u32 %v2947, 7
    %v2949 = vsub.s32 0, %v2948
    %v2950 = vrot.slane %v2911, %v2949
    %v2952 = vadd.f32 %v2944, %v2950
    %v2953 = vadd.f32 %v2945, %v2950
    %2954 = vst.msk [vmem:[#allocation2] sm:$0xff] %vm255, %v2952
    %2955 = vst.msk [vmem:[#allocation2 + $0x8] sm:$0xff] %vm255, %v2953
    %v2956 = vld [vmem:[#allocation2] ss:$8 sm:$0x3]
    %v2957 = vld [vmem:[#allocation23] sm:$0xff]
    %v2958 = vld [vmem:[#allocation23 + $0x8] sm:$0xff]
    %v2959 = vld [vmem:[#allocation23 + $0x10] sm:$0xff]
    %v2960 = vld [vmem:[#allocation23 + $0x18] sm:$0xff]
    %v2961 = vld [vmem:[#allocation24] sm:$0x1]
    %v2963 = vlaneseq
    %v2964 = vshrl.u32 %v2963, 7
    %v2965 = vsub.s32 0, %v2964
    %v2966 = vrot.slane %v2961, %v2965
    %v2969 = vsel %vm255, %v2956, 0
    %2971 = vmatprep.subr.mxu0 0.0
    %2972 = vmatpush1.msra.mxu0 %v2957
    %2973 = vmatprep.subr.mxu0 0.0
    %2974 = vmatpush1.msra.mxu0 %v2958
    %2975 = vmatprep.subr.mxu0 0.0
    %2976 = vmatpush1.msra.mxu0 %v2959
    %2977 = vmatprep.subr.mxu0 0.0
    %2978 = vmatpush1.msra.mxu0 %v2960
    %2979 = vmatprep.subr.mxu0 0.0
    %2980 = vmatpush1.msra.mxu0 0.0
    %2981 = vmatprep.subr.mxu0 0.0
    %2982 = vmatpush1.msra.mxu0 0.0
    %2983 = vmatprep.subr.mxu0 0.0
    %2984 = vmatpush1.msra.mxu0 0.0
    %2985 = vmatprep.subr.mxu0 0.0
    %2986 = vmatpush1.msra.mxu0 0.0
    %2987 = vmatprep.subr.mxu0 0.0
    %2988 = vmatpush1.msra.mxu0 0.0
    %2989 = vmatprep.subr.mxu0 0.0
    %2990 = vmatpush1.msra.mxu0 0.0
    %2991 = vmatprep.subr.mxu0 0.0
    %2992 = vmatpush1.msra.mxu0 0.0
    %2993 = vmatprep.subr.mxu0 0.0
    %2994 = vmatpush1.msra.mxu0 0.0
    %2995 = vmatprep.subr.mxu0 0.0
    %2996 = vmatpush1.msra.mxu0 0.0
    %2997 = vmatprep.subr.mxu0 0.0
    %2998 = vmatpush1.msra.mxu0 0.0
    %2999 = vmatprep.subr.mxu0 0.0
    %3000 = vmatpush1.msra.mxu0 0.0
    %3001 = vmatprep.subr.mxu0 0.0
    %3002 = vmatpush1.msra.mxu0 0.0
    %3003 = vmatprep.subr.mxu0 0.0
    %3004 = vmatpush1.msra.mxu0 0.0
    %3005 = vmatprep.subr.mxu0 0.0
    %3006 = vmatpush1.msra.mxu0 0.0
    %3007 = vmatprep.subr.mxu0 0.0
    %3008 = vmatpush1.msra.mxu0 0.0
    %3009 = vmatprep.subr.mxu0 0.0
    %3010 = vmatpush1.msra.mxu0 0.0
    %3011 = vmatprep.subr.mxu0 0.0
    %3012 = vmatpush1.msra.mxu0 0.0
    %3013 = vmatprep.subr.mxu0 0.0
    %3014 = vmatpush1.msra.mxu0 0.0
    %3015 = vmatprep.subr.mxu0 0.0
    %3016 = vmatpush1.msra.mxu0 0.0
    %3017 = vmatprep.subr.mxu0 0.0
    %3018 = vmatpush1.msra.mxu0 0.0
    %3019 = vmatprep.subr.mxu0 0.0
    %3020 = vmatpush1.msra.mxu0 0.0
    %3021 = vmatprep.subr.mxu0 0.0
    %3022 = vmatpush1.msra.mxu0 0.0
    %3023 = vmatprep.subr.mxu0 0.0
    %3024 = vmatpush1.msra.mxu0 0.0
    %3025 = vmatprep.subr.mxu0 0.0
    %3026 = vmatpush1.msra.mxu0 0.0
    %3027 = vmatprep.subr.mxu0 0.0
    %3028 = vmatpush1.msra.mxu0 0.0
    %3029 = vmatprep.subr.mxu0 0.0
    %3030 = vmatpush1.msra.mxu0 0.0
    %3031 = vmatprep.subr.mxu0 0.0
    %3032 = vmatpush1.msra.mxu0 0.0
    %3033 = vmatprep.subr.mxu0 0.0
    %3034 = vmatpush1.msra.mxu0 0.0
    %3035 = vmatprep.mubr.f32.mxu0 0.0
    %3036 = vmatmul.mubr.f32.gmra.mrb[0].mxu0 %v2969
    %v3037 = vpop.f32.mrb[0].mxu0
    %v3038 = vadd.f32 %v2966, %v3037
    %v3039 = vpop.f32.mrb[0].mxu0
    %3040 = vdwg.mxu0
    %v3041 = vtanh.pop %v3038
    %v3042 = vld [vmem:[%s18] sm:$0xff]
    %v3043 = vld [vmem:[%s18 + $0x8] sm:$0xff]
    %v3044 = vld [vmem:[%s18 + $0x10] sm:$0xff]
    %v3045 = vld [vmem:[%s18 + $0x18] sm:$0xff]
    %v3046 = vld [vmem:[%s19] sm:$0x1]
    %v3048 = vlaneseq
    %v3049 = vshrl.u32 %v3048, 7
    %v3050 = vsub.s32 0, %v3049
    %v3051 = vrot.slane %v3046, %v3050
    %v3054 = vsel %vm255, %v3041, 0
    %3056 = vmatprep.subr.mxu0 0.0
    %3057 = vmatpush1.msra.mxu0 %v3042
    %3058 = vmatprep.subr.mxu0 0.0
    %3059 = vmatpush1.msra.mxu0 %v3043
    %3060 = vmatprep.subr.mxu0 0.0
    %3061 = vmatpush1.msra.mxu0 %v3044
    %3062 = vmatprep.subr.mxu0 0.0
    %3063 = vmatpush1.msra.mxu0 %v3045
    %3064 = vmatprep.subr.mxu0 0.0
    %3065 = vmatpush1.msra.mxu0 0.0
    %3066 = vmatprep.subr.mxu0 0.0
    %3067 = vmatpush1.msra.mxu0 0.0
    %3068 = vmatprep.subr.mxu0 0.0
    %3069 = vmatpush1.msra.mxu0 0.0
    %3070 = vmatprep.subr.mxu0 0.0
    %3071 = vmatpush1.msra.mxu0 0.0
    %3072 = vmatprep.subr.mxu0 0.0
    %3073 = vmatpush1.msra.mxu0 0.0
    %3074 = vmatprep.subr.mxu0 0.0
    %3075 = vmatpush1.msra.mxu0 0.0
    %3076 = vmatprep.subr.mxu0 0.0
    %3077 = vmatpush1.msra.mxu0 0.0
    %3078 = vmatprep.subr.mxu0 0.0
    %3079 = vmatpush1.msra.mxu0 0.0
    %3080 = vmatprep.subr.mxu0 0.0
    %3081 = vmatpush1.msra.mxu0 0.0
    %3082 = vmatprep.subr.mxu0 0.0
    %3083 = vmatpush1.msra.mxu0 0.0
    %3084 = vmatprep.subr.mxu0 0.0
    %3085 = vmatpush1.msra.mxu0 0.0
    %3086 = vmatprep.subr.mxu0 0.0
    %3087 = vmatpush1.msra.mxu0 0.0
    %3088 = vmatprep.subr.mxu0 0.0
    %3089 = vmatpush1.msra.mxu0 0.0
    %3090 = vmatprep.subr.mxu0 0.0
    %3091 = vmatpush1.msra.mxu0 0.0
    %3092 = vmatprep.subr.mxu0 0.0
    %3093 = vmatpush1.msra.mxu0 0.0
    %3094 = vmatprep.subr.mxu0 0.0
    %3095 = vmatpush1.msra.mxu0 0.0
    %3096 = vmatprep.subr.mxu0 0.0
    %3097 = vmatpush1.msra.mxu0 0.0
    %3098 = vmatprep.subr.mxu0 0.0
    %3099 = vmatpush1.msra.mxu0 0.0
    %3100 = vmatprep.subr.mxu0 0.0
    %3101 = vmatpush1.msra.mxu0 0.0
    %3102 = vmatprep.subr.mxu0 0.0
    %3103 = vmatpush1.msra.mxu0 0.0
    %3104 = vmatprep.subr.mxu0 0.0
    %3105 = vmatpush1.msra.mxu0 0.0
    %3106 = vmatprep.subr.mxu0 0.0
    %3107 = vmatpush1.msra.mxu0 0.0
    %3108 = vmatprep.subr.mxu0 0.0
    %3109 = vmatpush1.msra.mxu0 0.0
    %3110 = vmatprep.subr.mxu0 0.0
    %3111 = vmatpush1.msra.mxu0 0.0
    %3112 = vmatprep.subr.mxu0 0.0
    %3113 = vmatpush1.msra.mxu0 0.0
    %3114 = vmatprep.subr.mxu0 0.0
    %3115 = vmatpush1.msra.mxu0 0.0
    %3116 = vmatprep.subr.mxu0 0.0
    %3117 = vmatpush1.msra.mxu0 0.0
    %3118 = vmatprep.subr.mxu0 0.0
    %3119 = vmatpush1.msra.mxu0 0.0
    %3120 = vmatprep.mubr.f32.mxu0 0.0
    %3121 = vmatmul.mubr.f32.gmra.mrb[0].mxu0 %v3054
    %v3122 = vpop.f32.mrb[0].mxu0
    %v3123 = vadd.f32 %v3051, %v3122
    %v3124 = vpop.f32.mrb[0].mxu0
    %3125 = vdwg.mxu0
    %v3126 = vmax.f32 %v3123, 0.0
    %v3127 = vmin.f32 %v3126, 10.0
    %3128 = vst [vmem:[#allocation26] sm:$0x3] %v3127
    // Predicated region
    $region138: #{tpu_custom_call.1} parent=1 // pred_check
      _
    $region139: #{tpu_custom_call.1} parent=1 // pred_check_branch
      %3130 = sbr.rel (0) target = $region141
    $region140: #{tpu_custom_call.1} parent=1 // pred_region
      %s3132 = ssub.s32 32, 32
      %3133 = vsyncadd [#allocation5], %s3132
      %s3135 = sshll.u32 [#allocation26], 4
      %s3136 = int_to_ptr.vmem [resolvable:$true] %s3135
      %3138 = dma.vmem_to_hbm [thread:$0]  %s3136, 32, %s20, [#allocation5]
    $region141: #{tpu_custom_call.1} parent=1 // pred_fallthru
      _
    // Predicated region
    $region142: #{tpu_custom_call.1} parent=1 // pred_check
      _
    $region143: #{tpu_custom_call.1} parent=1 // pred_check_branch
      %3140 = sbr.rel (0) target = $region145
    $region144: #{tpu_custom_call.1} parent=1 // pred_region
      %3141 = dma.done [#allocation5], 32
    $region145: #{tpu_custom_call.1} parent=1 // pred_fallthru
      _
    %3142 = vsyncpa [#allocation4], 1
    %3143 = vsyncpa [#allocation7], 1
    %3144 = vsyncpa [#allocation10], 1
    %3145 = vsyncpa [#allocation13], 1
    %3146 = vsyncpa [#allocation16], 1
    %3147 = vsyncpa [#allocation19], 1
    %3148 = vsyncpa [#allocation22], 1
    %3149 = vsyncpa [#allocation25], 1
    %3150 = vsyncpa [#allocation5], 1

</llo_original>
